<compile_context>
chip_gen: v6e
topology: v6e:2x2x1
jax: 0.10.0
libtpu: 0.0.40
codegen_flags: <defaults>
</compile_context>

<pallas_src>
import functools

import jax
import jax.numpy as jnp
from jax.experimental import pallas as pl
from jax.experimental.pallas import tpu as pltpu


def _round_up(n, m):
    return ((n + m - 1) // m) * m


def _pick_vmem_limit_bytes():
    """Generation-aware scoped-VMEM limit (v7x has only 64 MiB per TC)."""
    cap = None
    try:
        cap = getattr(pltpu.get_tpu_info(), "vmem_capacity_bytes", None)
    except Exception:
        pass
    if cap is None:
        return 48 * 1024 * 1024          # conservative: fits every generation
    if cap <= 64 * 1024 * 1024:          # v7x: 64 MiB per TensorCore
        return 40 * 1024 * 1024          # leave headroom for compiler scratch
    return 64 * 1024 * 1024              # v5e / v6e: 128 MiB physical


def _resident_spec(shape, single_buffer):
    """Full-array block whose index_map never changes (stays VMEM-resident)."""
    if single_buffer:
        # Constant block -> no need for the default 2-deep buffering.
        return pl.BlockSpec(shape, lambda i: (0, 0), pipeline_mode=pl.Buffered(1))
    return pl.BlockSpec(shape, lambda i: (0, 0))


# ----------------------------- Pallas kernel --------------------------------
def cvae_kernel(
    # batch-tiled streams
    x_ref, y_ref, eps_ref,
    # VMEM-resident padded params
    ew1_ref, eb1_ref, ew2_ref, eb2_ref,
    hw_ref, hb_ref,                       # fused [mu | logvar] head
    dw1_ref, db1_ref, dw2_ref, db2_ref, dw3_ref, db3_ref,
    ytab_ref,                             # resident class table [ew1y | dw1y]
    # outputs
    xrecon_ref, ml_ref,
    *, compute_dtype,
):
    f32 = jnp.float32
    tb = x_ref.shape[0]
    hid_pad = eb1_ref.shape[1]
    lat_pad = eps_ref.shape[1]
    nc_pad = ytab_ref.shape[0]

    x = x_ref[...].astype(compute_dtype)

    # In-kernel one-hot of the streamed labels (padded classes are exactly 0);
    # replaces streaming two (TB, hid_pad) gathered rows from HBM per tile.
    y = y_ref[...]                                              # (TB, 1) int32
    cls = jax.lax.broadcasted_iota(jnp.int32, (tb, nc_pad), 1)
    onehot = (y == cls).astype(compute_dtype)                   # (TB, nc_pad)
    ey = jnp.dot(onehot, ytab_ref[:, :hid_pad], preferred_element_type=f32)

    # ---- encoder: Linear + ReLU, Linear + ReLU ------------------------------
    h = jnp.dot(x, ew1_ref[...], preferred_element_type=f32) + ey + eb1_ref[...]
    h = jnp.maximum(h, 0.0).astype(compute_dtype)   # keep intermediates narrow
    h = jnp.dot(h, ew2_ref[...], preferred_element_type=f32) + eb2_ref[...]
    h = jnp.maximum(h, 0.0).astype(compute_dtype)

    # ---- fused latent heads: one matmul produces [mu | logvar] --------------
    ml = jnp.dot(h, hw_ref[...], preferred_element_type=f32) + hb_ref[...]
    mu = ml[:, :lat_pad]
    logvar = ml[:, lat_pad:]

    # ---- reparameterize (training mode) -------------------------------------
    std = jnp.exp(0.5 * logvar)
    z = mu + eps_ref[...].astype(f32) * std          # padded lanes: 0 + 0*1 = 0

    # ---- decoder: Linear + ReLU, Linear + ReLU, Linear + Sigmoid ------------
    dy = jnp.dot(onehot, ytab_ref[:, hid_pad:], preferred_element_type=f32)
    d = (jnp.dot(z.astype(compute_dtype), dw1_ref[...], preferred_element_type=f32)
         + dy + db1_ref[...])
    d = jnp.maximum(d, 0.0).astype(compute_dtype)
    d = jnp.dot(d, dw2_ref[...], preferred_element_type=f32) + db2_ref[...]
    d = jnp.maximum(d, 0.0).astype(compute_dtype)
    logits = jnp.dot(d, dw3_ref[...], preferred_element_type=f32) + db3_ref[...]

    # Sigmoid via EUP approx reciprocal; clip guards exp(-logits) overflow.
    logits = jnp.clip(logits, -30.0, 30.0)
    sig = pl.reciprocal(1.0 + jnp.exp(-logits), approx=True)
    # NOTE: padded lanes of x_recon hold sigmoid(0)=0.5; wrapper slices them off.
    xrecon_ref[...] = sig.astype(xrecon_ref.dtype)
    ml_ref[...] = ml


# --------------------------- one-time weight prep ----------------------------
def prepare_params(params, *, use_bf16=True):
    """Zero-pad weights to lane/MXU-friendly shapes, fuse the [mu|logvar] head,
    build the resident class table, and cast to bf16.  Hoisted out of the
    per-call wrapper so no pad/convert XLA ops run every forward step."""
    input_size = params["ew1x"].shape[0]
    hidden = params["eb1"].shape[1]
    latent = params["mub"].shape[1]
    num_classes = params["ew1y"].shape[0]

    in_pad = _round_up(input_size, 128)
    hid_pad = _round_up(hidden, 128)
    lat_pad = _round_up(latent, 128)
    nc_pad = _round_up(num_classes, 128)

    w_dtype = jnp.bfloat16 if use_bf16 else jnp.float32

    def padw(w, r, c):  # zero-pad weight to (r, c); padded rows/cols contribute 0
        return jnp.pad(w, ((0, r - w.shape[0]), (0, c - w.shape[1]))).astype(w_dtype)

    def padb(b, c):     # biases stay f32 (added to the f32 accumulator)
        return jnp.pad(b, ((0, 0), (0, c - b.shape[1]))).astype(jnp.float32)

    hw = jnp.concatenate([padw(params["muw"], hid_pad, lat_pad),
                          padw(params["lvw"], hid_pad, lat_pad)], axis=1)
    hb = jnp.concatenate([padb(params["mub"], lat_pad),
                          padb(params["lvb"], lat_pad)], axis=1)
    ytab = jnp.concatenate([padw(params["ew1y"], nc_pad, hid_pad),
                            padw(params["dw1y"], nc_pad, hid_pad)], axis=1)

    weights = (
        padw(params["ew1x"], in_pad, hid_pad), padb(params["eb1"], hid_pad),
        padw(params["ew2"], hid_pad, hid_pad), padb(params["eb2"], hid_pad),
        hw, hb,
        padw(params["dw1z"], lat_pad, hid_pad), padb(params["db1"], hid_pad),
        padw(params["dw2"], hid_pad, hid_pad), padb(params["db2"], hid_pad),
        padw(params["dw3"], hid_pad, in_pad), padb(params["db3"], in_pad),
        ytab,
    )
    weights = jax.block_until_ready(weights)   # materialize once

    dt = jnp.bfloat16 if use_bf16 else jnp.float32
    return dict(weights=weights,
                sizes=(input_size, hidden, latent, num_classes),
                pads=(in_pad, hid_pad, lat_pad, nc_pad),
                compute_dtype=dt, io_dtype=dt)


# ------------------------------- forward wrapper -----------------------------
def cvae_forward(x, y, eps, prepared, *, tb=None):
    """CVAE forward (training mode) in one batch-tiled Pallas call.

    x: (B, input_size) f32, y: (B,) int labels, eps: (B, latent) f32.
    Returns (x_recon, mu, logvar); x_recon is in the streamed io dtype.
    """
    B, input_size = x.shape
    in_size, hidden, latent, num_classes = prepared["sizes"]
    in_pad, hid_pad, lat_pad, nc_pad = prepared["pads"]
    compute_dtype = prepared["compute_dtype"]
    io_dtype = prepared["io_dtype"]
    weights = prepared["weights"]
    assert input_size == in_size and eps.shape[1] == latent

    # Batch tile: multiple of 8 sublanes; >= 2 grid steps where possible so the
    # "parallel" axis actually spans both v7x TensorCores; capped at 512 rows.
    if tb is None:
        tb = max(8, min(512, _round_up(pl.cdiv(_round_up(B, 8), 2), 8)))
    tb = _round_up(tb, 8)
    Bp = _round_up(B, tb)

    def pad2(a, cols, dtype):
        return jnp.pad(a, ((0, Bp - a.shape[0]), (0, cols - a.shape[1]))).astype(dtype)

    x_p = pad2(x, in_pad, io_dtype)
    eps_p = pad2(eps, lat_pad, io_dtype)
    y_p = jnp.pad(y.astype(jnp.int32), (0, Bp - B)).reshape(Bp, 1)

    grid = (Bp // tb,)

    def batch_spec(cols):
        return pl.BlockSpec((tb, cols), lambda i: (i, 0))

    out_shapes = (
        jax.ShapeDtypeStruct((Bp, in_pad), io_dtype),          # x_recon (padded)
        jax.ShapeDtypeStruct((Bp, 2 * lat_pad), jnp.float32),  # [mu | logvar]
    )
    out_specs = (batch_spec(in_pad), batch_spec(2 * lat_pad))
    kernel = functools.partial(cvae_kernel, compute_dtype=compute_dtype)

    def build(single_buffer_weights):
        in_specs = [batch_spec(in_pad),
                    pl.BlockSpec((tb, 1), lambda i: (i, 0)),   # labels (int32)
                    batch_spec(lat_pad)]
        in_specs += [_resident_spec(w.shape, single_buffer_weights) for w in weights]
        return pl.pallas_call(
            kernel,
            grid=grid,
            in_specs=in_specs,
            out_specs=out_specs,
            out_shape=out_shapes,
            compiler_params=pltpu.CompilerParams(
                dimension_semantics=("parallel",),      # shard batch across TCs
                vmem_limit_bytes=_pick_vmem_limit_bytes(),
            ),
        )

    operands = (x_p, y_p, eps_p) + tuple(weights)
    try:
        xrecon_p, ml = build(True)(*operands)
    except Exception:
        # Fallback: this jax/libtpu rejects single-buffered pipeline_mode;
        # use the default double-buffered resident weights instead.
        xrecon_p, ml = build(False)(*operands)

    x_recon = xrecon_p[:B, :input_size]
    mu = ml[:B, :latent]
    logvar = ml[:B, lat_pad:lat_pad + latent]
    return x_recon, mu, logvar


# --------------------------- parameter construction --------------------------
def init_params(key, input_size, hidden_size, latent_size, num_classes):
    """Deterministic synthetic parameters. Weights are (in, out)."""
    def lin(k, fan_in, fan_out):
        kw, kb = jax.random.split(k)
        bound = 1.0 / jnp.sqrt(fan_in)
        w = jax.random.uniform(kw, (fan_in, fan_out), jnp.float32, -bound, bound)
        b = jax.random.uniform(kb, (1, fan_out), jnp.float32, -bound, bound)
        return w, b

    ks = jax.random.split(key, 7)
    ew1, eb1 = lin(ks[0], input_size + num_classes, hidden_size)
    ew1x, ew1y = ew1[:input_size], ew1[input_size:]
    ew2, eb2 = lin(ks[1], hidden_size, hidden_size)
    muw, mub = lin(ks[2], hidden_size, latent_size)
    lvw, lvb = lin(ks[3], hidden_size, latent_size)
    dw1, db1 = lin(ks[4], latent_size + num_classes, hidden_size)
    dw1z, dw1y = dw1[:latent_size], dw1[latent_size:]
    dw2, db2 = lin(ks[5], hidden_size, hidden_size)
    dw3, db3 = lin(ks[6], hidden_size, input_size)

    return dict(ew1x=ew1x, ew1y=ew1y, eb1=eb1, ew2=ew2, eb2=eb2,
                muw=muw, mub=mub, lvw=lvw, lvb=lvb,
                dw1z=dw1z, dw1y=dw1y, db1=db1, dw2=dw2, db2=db2,
                dw3=dw3, db3=db3)


def cvae_reference(x, y_onehot, eps, p):
    """Plain-JAX f32 reference of the same forward pass (for verification)."""
    h = jnp.maximum(x @ p["ew1x"] + y_onehot @ p["ew1y"] + p["eb1"], 0.0)
    h = jnp.maximum(h @ p["ew2"] + p["eb2"], 0.0)
    mu = h @ p["muw"] + p["mub"]
    logvar = h @ p["lvw"] + p["lvb"]
    z = mu + eps * jnp.exp(0.5 * logvar)
    d = jnp.maximum(z @ p["dw1z"] + y_onehot @ p["dw1y"] + p["db1"], 0.0)
    d = jnp.maximum(d @ p["dw2"] + p["db2"], 0.0)
    xr = jax.nn.sigmoid(d @ p["dw3"] + p["db3"])
    return xr, mu, logvar


# ---------------------------------- main -------------------------------------
if __name__ == "__main__":
    # Small shapes consistent with the module (scaled-down MNIST-style CVAE).
    batch = 16
    input_size = 64       # (full module uses 784 -> padded to 896 in-kernel)
    hidden_size = 32      # (full module uses 400 -> padded to 512 in-kernel)
    latent_size = 8       # (full module uses 20  -> padded to 128 in-kernel)
    num_classes = 10

    key = jax.random.PRNGKey(0)
    kx, ky, keps, kparams = jax.random.split(key, 4)

    x = jax.random.uniform(kx, (batch, input_size), jnp.float32)
    y = jax.random.randint(ky, (batch,), 0, num_classes, jnp.int32)
    eps = jax.random.normal(keps, (batch, latent_size), jnp.float32)
    y_onehot = jax.nn.one_hot(y, num_classes, dtype=jnp.float32)

    params = init_params(kparams, input_size, hidden_size, latent_size, num_classes)
    xr_ref, mu_ref, lv_ref = cvae_reference(x, y_onehot, eps, params)

    # ---- exact-precision path (f32 weights / IO): tight check vs reference ---
    prep_f32 = prepare_params(params, use_bf16=False)
    xr32, mu32, lv32 = cvae_forward(x, y, eps, prep_f32)      # grid=(2,) at B=16
    jax.block_until_ready((xr32, mu32, lv32))
    assert jnp.allclose(mu32, mu_ref, atol=1e-5, rtol=1e-5)
    assert jnp.allclose(lv32, lv_ref, atol=1e-5, rtol=1e-5)
    # x_recon uses the EUP approx reciprocal -> slightly looser tolerance.
    assert jnp.allclose(xr32, xr_ref, atol=5e-3, rtol=1e-3)

    # ---- default path (bf16 weights, bf16 matmul compute, bf16 streamed IO) --
    prep_bf16 = prepare_params(params)                        # use_bf16=True
    xr_bf, mu_bf, lv_bf = cvae_forward(x, y, eps, prep_bf16)
    jax.block_until_ready((xr_bf, mu_bf, lv_bf))
    assert jnp.allclose(mu_bf, mu_ref, atol=3e-2, rtol=3e-2)
    assert jnp.allclose(lv_bf, lv_ref, atol=3e-2, rtol=3e-2)
    assert jnp.allclose(xr_bf.astype(jnp.float32), xr_ref, atol=3e-2, rtol=3e-2)

    print("KERNEL_OK")
</pallas_src>

<mosaic_0001>
module attributes {stable_mosaic.version = 11 : i64} {
  func.func @cvae_kernel(%arg0: i32, %arg1: memref<8x128xf32, #tpu.memory_space<vmem>>, %arg2: memref<8x1xi32, #tpu.memory_space<vmem>>, %arg3: memref<8x128xf32, #tpu.memory_space<vmem>>, %arg4: memref<128x128xf32, #tpu.memory_space<vmem>>, %arg5: memref<1x128xf32, #tpu.memory_space<vmem>>, %arg6: memref<128x128xf32, #tpu.memory_space<vmem>>, %arg7: memref<1x128xf32, #tpu.memory_space<vmem>>, %arg8: memref<128x256xf32, #tpu.memory_space<vmem>>, %arg9: memref<1x256xf32, #tpu.memory_space<vmem>>, %arg10: memref<128x128xf32, #tpu.memory_space<vmem>>, %arg11: memref<1x128xf32, #tpu.memory_space<vmem>>, %arg12: memref<128x128xf32, #tpu.memory_space<vmem>>, %arg13: memref<1x128xf32, #tpu.memory_space<vmem>>, %arg14: memref<128x128xf32, #tpu.memory_space<vmem>>, %arg15: memref<1x128xf32, #tpu.memory_space<vmem>>, %arg16: memref<128x256xf32, #tpu.memory_space<vmem>>, %arg17: memref<8x128xf32, #tpu.memory_space<vmem>>, %arg18: memref<8x256xf32, #tpu.memory_space<vmem>>) attributes {dimension_semantics = [#tpu.dimension_semantics<parallel>], iteration_bounds = array<i64: 2>, scalar_prefetch = 0 : i64, scratch_operands = 0 : i64, tpu.core_type = #tpu.core_type<tc>, window_params = [{transform_indices = @transform_0, window_bounds = array<i64: 8, 128>}, {transform_indices = @transform_1, window_bounds = array<i64: 8, 1>}, {transform_indices = @transform_2, window_bounds = array<i64: 8, 128>}, {pipeline_mode = #tpu.pipeline_mode<synchronous>, transform_indices = @transform_3, window_bounds = array<i64: 128, 128>}, {pipeline_mode = #tpu.pipeline_mode<synchronous>, transform_indices = @transform_4, window_bounds = array<i64: 1, 128>}, {pipeline_mode = #tpu.pipeline_mode<synchronous>, transform_indices = @transform_5, window_bounds = array<i64: 128, 128>}, {pipeline_mode = #tpu.pipeline_mode<synchronous>, transform_indices = @transform_6, window_bounds = array<i64: 1, 128>}, {pipeline_mode = #tpu.pipeline_mode<synchronous>, transform_indices = @transform_7, window_bounds = array<i64: 128, 256>}, {pipeline_mode = #tpu.pipeline_mode<synchronous>, transform_indices = @transform_8, window_bounds = array<i64: 1, 256>}, {pipeline_mode = #tpu.pipeline_mode<synchronous>, transform_indices = @transform_9, window_bounds = array<i64: 128, 128>}, {pipeline_mode = #tpu.pipeline_mode<synchronous>, transform_indices = @transform_10, window_bounds = array<i64: 1, 128>}, {pipeline_mode = #tpu.pipeline_mode<synchronous>, transform_indices = @transform_11, window_bounds = array<i64: 128, 128>}, {pipeline_mode = #tpu.pipeline_mode<synchronous>, transform_indices = @transform_12, window_bounds = array<i64: 1, 128>}, {pipeline_mode = #tpu.pipeline_mode<synchronous>, transform_indices = @transform_13, window_bounds = array<i64: 128, 128>}, {pipeline_mode = #tpu.pipeline_mode<synchronous>, transform_indices = @transform_14, window_bounds = array<i64: 1, 128>}, {pipeline_mode = #tpu.pipeline_mode<synchronous>, transform_indices = @transform_15, window_bounds = array<i64: 128, 256>}, {transform_indices = @transform_16, window_bounds = array<i64: 8, 128>}, {transform_indices = @transform_17, window_bounds = array<i64: 8, 256>}]} {
    %c0 = arith.constant 0 : index
    %c0_0 = arith.constant 0 : index
    %0 = vector.load %arg1[%c0, %c0_0] : memref<8x128xf32, #tpu.memory_space<vmem>>, vector<8x128xf32>
    %c0_1 = arith.constant 0 : index
    %c0_2 = arith.constant 0 : index
    %1 = vector.load %arg2[%c0_1, %c0_2] : memref<8x1xi32, #tpu.memory_space<vmem>>, vector<8x1xi32>
    %2 = tpu.iota {dimensions = array<i32: 1>} : vector<8x128xi32>
    %3 = vector.broadcast %1 : vector<8x1xi32> to vector<8x128xi32>
    %4 = arith.cmpi eq, %3, %2 : vector<8x128xi32>
    %5 = arith.extui %4 : vector<8x128xi1> to vector<8x128xi32>
    %6 = arith.sitofp %5 : vector<8x128xi32> to vector<8x128xf32>
    %c0_3 = arith.constant 0 : index
    %c0_4 = arith.constant 0 : index
    %7 = vector.load %arg16[%c0_3, %c0_4] : memref<128x256xf32, #tpu.memory_space<vmem>>, vector<128x128xf32>
    %cst = arith.constant dense<0.000000e+00> : vector<8x128xf32>
    %8 = tpu.matmul %6, %7, %cst {dimension_numbers = #tpu.dot_dimension_numbers<[1], [0], [0], [1], [0, 0, 1, 1], [], []>} : vector<8x128xf32>, vector<128x128xf32>, vector<8x128xf32> -> vector<8x128xf32>
    %c0_5 = arith.constant 0 : index
    %c0_6 = arith.constant 0 : index
    %9 = vector.load %arg4[%c0_5, %c0_6] : memref<128x128xf32, #tpu.memory_space<vmem>>, vector<128x128xf32>
    %cst_7 = arith.constant dense<0.000000e+00> : vector<8x128xf32>
    %10 = tpu.matmul %0, %9, %cst_7 {dimension_numbers = #tpu.dot_dimension_numbers<[1], [0], [0], [1], [0, 0, 1, 1], [], []>} : vector<8x128xf32>, vector<128x128xf32>, vector<8x128xf32> -> vector<8x128xf32>
    %11 = arith.addf %10, %8 : vector<8x128xf32>
    %c0_8 = arith.constant 0 : index
    %c0_9 = arith.constant 0 : index
    %12 = vector.load %arg5[%c0_8, %c0_9] : memref<1x128xf32, #tpu.memory_space<vmem>>, vector<1x128xf32>
    %13 = vector.broadcast %12 : vector<1x128xf32> to vector<8x128xf32>
    %14 = arith.addf %11, %13 : vector<8x128xf32>
    %cst_10 = arith.constant 0.000000e+00 : f32
    %15 = vector.broadcast %cst_10 : f32 to vector<8x128xf32>
    %16 = arith.maximumf %14, %15 : vector<8x128xf32>
    %c0_11 = arith.constant 0 : index
    %c0_12 = arith.constant 0 : index
    %17 = vector.load %arg6[%c0_11, %c0_12] : memref<128x128xf32, #tpu.memory_space<vmem>>, vector<128x128xf32>
    %cst_13 = arith.constant dense<0.000000e+00> : vector<8x128xf32>
    %18 = tpu.matmul %16, %17, %cst_13 {dimension_numbers = #tpu.dot_dimension_numbers<[1], [0], [0], [1], [0, 0, 1, 1], [], []>} : vector<8x128xf32>, vector<128x128xf32>, vector<8x128xf32> -> vector<8x128xf32>
    %c0_14 = arith.constant 0 : index
    %c0_15 = arith.constant 0 : index
    %19 = vector.load %arg7[%c0_14, %c0_15] : memref<1x128xf32, #tpu.memory_space<vmem>>, vector<1x128xf32>
    %20 = vector.broadcast %19 : vector<1x128xf32> to vector<8x128xf32>
    %21 = arith.addf %18, %20 : vector<8x128xf32>
    %cst_16 = arith.constant 0.000000e+00 : f32
    %22 = vector.broadcast %cst_16 : f32 to vector<8x128xf32>
    %23 = arith.maximumf %21, %22 : vector<8x128xf32>
    %c0_17 = arith.constant 0 : index
    %c0_18 = arith.constant 0 : index
    %24 = vector.load %arg8[%c0_17, %c0_18] : memref<128x256xf32, #tpu.memory_space<vmem>>, vector<128x256xf32>
    %cst_19 = arith.constant dense<0.000000e+00> : vector<8x256xf32>
    %25 = tpu.matmul %23, %24, %cst_19 {dimension_numbers = #tpu.dot_dimension_numbers<[1], [0], [0], [1], [0, 0, 1, 1], [], []>} : vector<8x128xf32>, vector<128x256xf32>, vector<8x256xf32> -> vector<8x256xf32>
    %c0_20 = arith.constant 0 : index
    %c0_21 = arith.constant 0 : index
    %26 = vector.load %arg9[%c0_20, %c0_21] : memref<1x256xf32, #tpu.memory_space<vmem>>, vector<1x256xf32>
    %27 = vector.broadcast %26 : vector<1x256xf32> to vector<8x256xf32>
    %28 = arith.addf %25, %27 : vector<8x256xf32>
    %29 = vector.extract_strided_slice %28 {offsets = [0, 0], sizes = [8, 128], strides = [1, 1]} : vector<8x256xf32> to vector<8x128xf32>
    %30 = vector.extract_strided_slice %28 {offsets = [0, 128], sizes = [8, 128], strides = [1, 1]} : vector<8x256xf32> to vector<8x128xf32>
    %cst_22 = arith.constant 5.000000e-01 : f32
    %31 = vector.broadcast %cst_22 : f32 to vector<8x128xf32>
    %32 = arith.mulf %31, %30 : vector<8x128xf32>
    %33 = math.exp %32 : vector<8x128xf32>
    %c0_23 = arith.constant 0 : index
    %c0_24 = arith.constant 0 : index
    %34 = vector.load %arg3[%c0_23, %c0_24] : memref<8x128xf32, #tpu.memory_space<vmem>>, vector<8x128xf32>
    %35 = arith.mulf %34, %33 : vector<8x128xf32>
    %36 = arith.addf %29, %35 : vector<8x128xf32>
    %c0_25 = arith.constant 0 : index
    %c128 = arith.constant 128 : index
    %37 = vector.load %arg16[%c0_25, %c128] : memref<128x256xf32, #tpu.memory_space<vmem>>, vector<128x128xf32>
    %cst_26 = arith.constant dense<0.000000e+00> : vector<8x128xf32>
    %38 = tpu.matmul %6, %37, %cst_26 {dimension_numbers = #tpu.dot_dimension_numbers<[1], [0], [0], [1], [0, 0, 1, 1], [], []>} : vector<8x128xf32>, vector<128x128xf32>, vector<8x128xf32> -> vector<8x128xf32>
    %c0_27 = arith.constant 0 : index
    %c0_28 = arith.constant 0 : index
    %39 = vector.load %arg10[%c0_27, %c0_28] : memref<128x128xf32, #tpu.memory_space<vmem>>, vector<128x128xf32>
    %cst_29 = arith.constant dense<0.000000e+00> : vector<8x128xf32>
    %40 = tpu.matmul %36, %39, %cst_29 {dimension_numbers = #tpu.dot_dimension_numbers<[1], [0], [0], [1], [0, 0, 1, 1], [], []>} : vector<8x128xf32>, vector<128x128xf32>, vector<8x128xf32> -> vector<8x128xf32>
    %41 = arith.addf %40, %38 : vector<8x128xf32>
    %c0_30 = arith.constant 0 : index
    %c0_31 = arith.constant 0 : index
    %42 = vector.load %arg11[%c0_30, %c0_31] : memref<1x128xf32, #tpu.memory_space<vmem>>, vector<1x128xf32>
    %43 = vector.broadcast %42 : vector<1x128xf32> to vector<8x128xf32>
    %44 = arith.addf %41, %43 : vector<8x128xf32>
    %cst_32 = arith.constant 0.000000e+00 : f32
    %45 = vector.broadcast %cst_32 : f32 to vector<8x128xf32>
    %46 = arith.maximumf %44, %45 : vector<8x128xf32>
    %c0_33 = arith.constant 0 : index
    %c0_34 = arith.constant 0 : index
    %47 = vector.load %arg12[%c0_33, %c0_34] : memref<128x128xf32, #tpu.memory_space<vmem>>, vector<128x128xf32>
    %cst_35 = arith.constant dense<0.000000e+00> : vector<8x128xf32>
    %48 = tpu.matmul %46, %47, %cst_35 {dimension_numbers = #tpu.dot_dimension_numbers<[1], [0], [0], [1], [0, 0, 1, 1], [], []>} : vector<8x128xf32>, vector<128x128xf32>, vector<8x128xf32> -> vector<8x128xf32>
    %c0_36 = arith.constant 0 : index
    %c0_37 = arith.constant 0 : index
    %49 = vector.load %arg13[%c0_36, %c0_37] : memref<1x128xf32, #tpu.memory_space<vmem>>, vector<1x128xf32>
    %50 = vector.broadcast %49 : vector<1x128xf32> to vector<8x128xf32>
    %51 = arith.addf %48, %50 : vector<8x128xf32>
    %cst_38 = arith.constant 0.000000e+00 : f32
    %52 = vector.broadcast %cst_38 : f32 to vector<8x128xf32>
    %53 = arith.maximumf %51, %52 : vector<8x128xf32>
    %c0_39 = arith.constant 0 : index
    %c0_40 = arith.constant 0 : index
    %54 = vector.load %arg14[%c0_39, %c0_40] : memref<128x128xf32, #tpu.memory_space<vmem>>, vector<128x128xf32>
    %cst_41 = arith.constant dense<0.000000e+00> : vector<8x128xf32>
    %55 = tpu.matmul %53, %54, %cst_41 {dimension_numbers = #tpu.dot_dimension_numbers<[1], [0], [0], [1], [0, 0, 1, 1], [], []>} : vector<8x128xf32>, vector<128x128xf32>, vector<8x128xf32> -> vector<8x128xf32>
    %c0_42 = arith.constant 0 : index
    %c0_43 = arith.constant 0 : index
    %56 = vector.load %arg15[%c0_42, %c0_43] : memref<1x128xf32, #tpu.memory_space<vmem>>, vector<1x128xf32>
    %57 = vector.broadcast %56 : vector<1x128xf32> to vector<8x128xf32>
    %58 = arith.addf %55, %57 : vector<8x128xf32>
    %cst_44 = arith.constant -3.000000e+01 : f32
    %cst_45 = arith.constant 3.000000e+01 : f32
    %59 = vector.broadcast %cst_44 : f32 to vector<8x128xf32>
    %60 = arith.maximumf %59, %58 : vector<8x128xf32>
    %61 = vector.broadcast %cst_45 : f32 to vector<8x128xf32>
    %62 = arith.minimumf %61, %60 : vector<8x128xf32>
    %cst_46 = arith.constant 0.000000e+00 : f32
    %63 = vector.broadcast %cst_46 : f32 to vector<8x128xf32>
    %64 = arith.subf %63, %62 : vector<8x128xf32>
    %65 = math.exp %64 : vector<8x128xf32>
    %cst_47 = arith.constant 1.000000e+00 : f32
    %66 = vector.broadcast %cst_47 : f32 to vector<8x128xf32>
    %67 = arith.addf %66, %65 : vector<8x128xf32>
    %68 = tpu.reciprocal %67 {approx = true} : vector<8x128xf32> -> vector<8x128xf32>
    %c0_48 = arith.constant 0 : index
    %c0_49 = arith.constant 0 : index
    %69 = vector.load %arg17[%c0_48, %c0_49] : memref<8x128xf32, #tpu.memory_space<vmem>>, vector<8x128xf32>
    tpu.vector_store %arg17[%c0_48, %c0_49], %68 {strides = array<i32>} : memref<8x128xf32, #tpu.memory_space<vmem>>, vector<8x128xf32>,
    %c0_50 = arith.constant 0 : index
    %c0_51 = arith.constant 0 : index
    %70 = vector.load %arg18[%c0_50, %c0_51] : memref<8x256xf32, #tpu.memory_space<vmem>>, vector<8x256xf32>
    tpu.vector_store %arg18[%c0_50, %c0_51], %28 {strides = array<i32>} : memref<8x256xf32, #tpu.memory_space<vmem>>, vector<8x256xf32>,
    return
  }
  func.func @transform_0(%arg0: i32) -> (i32, i32) {
    %c0_i32 = arith.constant 0 : i32
    %c0_i32_0 = arith.constant 0 : i32
    return %arg0, %c0_i32 : i32, i32
  }
  func.func @transform_1(%arg0: i32) -> (i32, i32) {
    %c0_i32 = arith.constant 0 : i32
    %c0_i32_0 = arith.constant 0 : i32
    return %arg0, %c0_i32 : i32, i32
  }
  func.func @transform_2(%arg0: i32) -> (i32, i32) {
    %c0_i32 = arith.constant 0 : i32
    %c0_i32_0 = arith.constant 0 : i32
    return %arg0, %c0_i32 : i32, i32
  }
  func.func @transform_3(%arg0: i32) -> (i32, i32) {
    %c0_i32 = arith.constant 0 : i32
    %c0_i32_0 = arith.constant 0 : i32
    %c0_i32_1 = arith.constant 0 : i32
    return %c0_i32, %c0_i32_0 : i32, i32
  }
  func.func @transform_4(%arg0: i32) -> (i32, i32) {
    %c0_i32 = arith.constant 0 : i32
    %c0_i32_0 = arith.constant 0 : i32
    %c0_i32_1 = arith.constant 0 : i32
    return %c0_i32, %c0_i32_0 : i32, i32
  }
  func.func @transform_5(%arg0: i32) -> (i32, i32) {
    %c0_i32 = arith.constant 0 : i32
    %c0_i32_0 = arith.constant 0 : i32
    %c0_i32_1 = arith.constant 0 : i32
    return %c0_i32, %c0_i32_0 : i32, i32
  }
  func.func @transform_6(%arg0: i32) -> (i32, i32) {
    %c0_i32 = arith.constant 0 : i32
    %c0_i32_0 = arith.constant 0 : i32
    %c0_i32_1 = arith.constant 0 : i32
    return %c0_i32, %c0_i32_0 : i32, i32
  }
  func.func @transform_7(%arg0: i32) -> (i32, i32) {
    %c0_i32 = arith.constant 0 : i32
    %c0_i32_0 = arith.constant 0 : i32
    %c0_i32_1 = arith.constant 0 : i32
    return %c0_i32, %c0_i32_0 : i32, i32
  }
  func.func @transform_8(%arg0: i32) -> (i32, i32) {
    %c0_i32 = arith.constant 0 : i32
    %c0_i32_0 = arith.constant 0 : i32
    %c0_i32_1 = arith.constant 0 : i32
    return %c0_i32, %c0_i32_0 : i32, i32
  }
  func.func @transform_9(%arg0: i32) -> (i32, i32) {
    %c0_i32 = arith.constant 0 : i32
    %c0_i32_0 = arith.constant 0 : i32
    %c0_i32_1 = arith.constant 0 : i32
    return %c0_i32, %c0_i32_0 : i32, i32
  }
  func.func @transform_10(%arg0: i32) -> (i32, i32) {
    %c0_i32 = arith.constant 0 : i32
    %c0_i32_0 = arith.constant 0 : i32
    %c0_i32_1 = arith.constant 0 : i32
    return %c0_i32, %c0_i32_0 : i32, i32
  }
  func.func @transform_11(%arg0: i32) -> (i32, i32) {
    %c0_i32 = arith.constant 0 : i32
    %c0_i32_0 = arith.constant 0 : i32
    %c0_i32_1 = arith.constant 0 : i32
    return %c0_i32, %c0_i32_0 : i32, i32
  }
  func.func @transform_12(%arg0: i32) -> (i32, i32) {
    %c0_i32 = arith.constant 0 : i32
    %c0_i32_0 = arith.constant 0 : i32
    %c0_i32_1 = arith.constant 0 : i32
    return %c0_i32, %c0_i32_0 : i32, i32
  }
  func.func @transform_13(%arg0: i32) -> (i32, i32) {
    %c0_i32 = arith.constant 0 : i32
    %c0_i32_0 = arith.constant 0 : i32
    %c0_i32_1 = arith.constant 0 : i32
    return %c0_i32, %c0_i32_0 : i32, i32
  }
  func.func @transform_14(%arg0: i32) -> (i32, i32) {
    %c0_i32 = arith.constant 0 : i32
    %c0_i32_0 = arith.constant 0 : i32
    %c0_i32_1 = arith.constant 0 : i32
    return %c0_i32, %c0_i32_0 : i32, i32
  }
  func.func @transform_15(%arg0: i32) -> (i32, i32) {
    %c0_i32 = arith.constant 0 : i32
    %c0_i32_0 = arith.constant 0 : i32
    %c0_i32_1 = arith.constant 0 : i32
    return %c0_i32, %c0_i32_0 : i32, i32
  }
  func.func @transform_16(%arg0: i32) -> (i32, i32) {
    %c0_i32 = arith.constant 0 : i32
    %c0_i32_0 = arith.constant 0 : i32
    return %arg0, %c0_i32 : i32, i32
  }
  func.func @transform_17(%arg0: i32) -> (i32, i32) {
    %c0_i32 = arith.constant 0 : i32
    %c0_i32_0 = arith.constant 0 : i32
    return %arg0, %c0_i32 : i32, i32
  }
}

module attributes {stable_mosaic.version = 11 : i64} {
  func.func @cvae_kernel(%arg0: i32, %arg1: memref<8x128xf32, #tpu.memory_space<vmem>>, %arg2: memref<8x1xi32, #tpu.memory_space<vmem>>, %arg3: memref<8x128xf32, #tpu.memory_space<vmem>>, %arg4: memref<128x128xf32, #tpu.memory_space<vmem>>, %arg5: memref<1x128xf32, #tpu.memory_space<vmem>>, %arg6: memref<128x128xf32, #tpu.memory_space<vmem>>, %arg7: memref<1x128xf32, #tpu.memory_space<vmem>>, %arg8: memref<128x256xf32, #tpu.memory_space<vmem>>, %arg9: memref<1x256xf32, #tpu.memory_space<vmem>>, %arg10: memref<128x128xf32, #tpu.memory_space<vmem>>, %arg11: memref<1x128xf32, #tpu.memory_space<vmem>>, %arg12: memref<128x128xf32, #tpu.memory_space<vmem>>, %arg13: memref<1x128xf32, #tpu.memory_space<vmem>>, %arg14: memref<128x128xf32, #tpu.memory_space<vmem>>, %arg15: memref<1x128xf32, #tpu.memory_space<vmem>>, %arg16: memref<128x256xf32, #tpu.memory_space<vmem>>, %arg17: memref<8x128xf32, #tpu.memory_space<vmem>>, %arg18: memref<8x256xf32, #tpu.memory_space<vmem>>) attributes {dimension_semantics = [#tpu.dimension_semantics<parallel>], iteration_bounds = array<i64: 2>, scalar_prefetch = 0 : i64, scratch_operands = 0 : i64, tpu.core_type = #tpu.core_type<tc>, window_params = [{transform_indices = @transform_0, window_bounds = array<i64: 8, 128>}, {transform_indices = @transform_1, window_bounds = array<i64: 8, 1>}, {transform_indices = @transform_2, window_bounds = array<i64: 8, 128>}, {pipeline_mode = #tpu.pipeline_mode<synchronous>, transform_indices = @transform_3, window_bounds = array<i64: 128, 128>}, {pipeline_mode = #tpu.pipeline_mode<synchronous>, transform_indices = @transform_4, window_bounds = array<i64: 1, 128>}, {pipeline_mode = #tpu.pipeline_mode<synchronous>, transform_indices = @transform_5, window_bounds = array<i64: 128, 128>}, {pipeline_mode = #tpu.pipeline_mode<synchronous>, transform_indices = @transform_6, window_bounds = array<i64: 1, 128>}, {pipeline_mode = #tpu.pipeline_mode<synchronous>, transform_indices = @transform_7, window_bounds = array<i64: 128, 256>}, {pipeline_mode = #tpu.pipeline_mode<synchronous>, transform_indices = @transform_8, window_bounds = array<i64: 1, 256>}, {pipeline_mode = #tpu.pipeline_mode<synchronous>, transform_indices = @transform_9, window_bounds = array<i64: 128, 128>}, {pipeline_mode = #tpu.pipeline_mode<synchronous>, transform_indices = @transform_10, window_bounds = array<i64: 1, 128>}, {pipeline_mode = #tpu.pipeline_mode<synchronous>, transform_indices = @transform_11, window_bounds = array<i64: 128, 128>}, {pipeline_mode = #tpu.pipeline_mode<synchronous>, transform_indices = @transform_12, window_bounds = array<i64: 1, 128>}, {pipeline_mode = #tpu.pipeline_mode<synchronous>, transform_indices = @transform_13, window_bounds = array<i64: 128, 128>}, {pipeline_mode = #tpu.pipeline_mode<synchronous>, transform_indices = @transform_14, window_bounds = array<i64: 1, 128>}, {pipeline_mode = #tpu.pipeline_mode<synchronous>, transform_indices = @transform_15, window_bounds = array<i64: 128, 256>}, {transform_indices = @transform_16, window_bounds = array<i64: 8, 128>}, {transform_indices = @transform_17, window_bounds = array<i64: 8, 256>}]} {
    %c0 = arith.constant 0 : index
    %c0_0 = arith.constant 0 : index
    %0 = vector.load %arg1[%c0, %c0_0] : memref<8x128xf32, #tpu.memory_space<vmem>>, vector<8x128xf32>
    %c0_1 = arith.constant 0 : index
    %c0_2 = arith.constant 0 : index
    %1 = vector.load %arg2[%c0_1, %c0_2] : memref<8x1xi32, #tpu.memory_space<vmem>>, vector<8x1xi32>
    %2 = tpu.iota {dimensions = array<i32: 1>} : vector<8x128xi32>
    %3 = vector.broadcast %1 : vector<8x1xi32> to vector<8x128xi32>
    %4 = arith.cmpi eq, %3, %2 : vector<8x128xi32>
    %5 = arith.extui %4 : vector<8x128xi1> to vector<8x128xi32>
    %6 = arith.sitofp %5 : vector<8x128xi32> to vector<8x128xf32>
    %c0_3 = arith.constant 0 : index
    %c0_4 = arith.constant 0 : index
    %7 = vector.load %arg16[%c0_3, %c0_4] : memref<128x256xf32, #tpu.memory_space<vmem>>, vector<128x128xf32>
    %cst = arith.constant dense<0.000000e+00> : vector<8x128xf32>
    %8 = tpu.matmul %6, %7, %cst {dimension_numbers = #tpu.dot_dimension_numbers<[1], [0], [0], [1], [0, 0, 1, 1], [], []>} : vector<8x128xf32>, vector<128x128xf32>, vector<8x128xf32> -> vector<8x128xf32>
    %c0_5 = arith.constant 0 : index
    %c0_6 = arith.constant 0 : index
    %9 = vector.load %arg4[%c0_5, %c0_6] : memref<128x128xf32, #tpu.memory_space<vmem>>, vector<128x128xf32>
    %cst_7 = arith.constant dense<0.000000e+00> : vector<8x128xf32>
    %10 = tpu.matmul %0, %9, %cst_7 {dimension_numbers = #tpu.dot_dimension_numbers<[1], [0], [0], [1], [0, 0, 1, 1], [], []>} : vector<8x128xf32>, vector<128x128xf32>, vector<8x128xf32> -> vector<8x128xf32>
    %11 = arith.addf %10, %8 : vector<8x128xf32>
    %c0_8 = arith.constant 0 : index
    %c0_9 = arith.constant 0 : index
    %12 = vector.load %arg5[%c0_8, %c0_9] : memref<1x128xf32, #tpu.memory_space<vmem>>, vector<1x128xf32>
    %13 = vector.broadcast %12 : vector<1x128xf32> to vector<8x128xf32>
    %14 = arith.addf %11, %13 : vector<8x128xf32>
    %cst_10 = arith.constant 0.000000e+00 : f32
    %15 = vector.broadcast %cst_10 : f32 to vector<8x128xf32>
    %16 = arith.maximumf %14, %15 : vector<8x128xf32>
    %c0_11 = arith.constant 0 : index
    %c0_12 = arith.constant 0 : index
    %17 = vector.load %arg6[%c0_11, %c0_12] : memref<128x128xf32, #tpu.memory_space<vmem>>, vector<128x128xf32>
    %cst_13 = arith.constant dense<0.000000e+00> : vector<8x128xf32>
    %18 = tpu.matmul %16, %17, %cst_13 {dimension_numbers = #tpu.dot_dimension_numbers<[1], [0], [0], [1], [0, 0, 1, 1], [], []>} : vector<8x128xf32>, vector<128x128xf32>, vector<8x128xf32> -> vector<8x128xf32>
    %c0_14 = arith.constant 0 : index
    %c0_15 = arith.constant 0 : index
    %19 = vector.load %arg7[%c0_14, %c0_15] : memref<1x128xf32, #tpu.memory_space<vmem>>, vector<1x128xf32>
    %20 = vector.broadcast %19 : vector<1x128xf32> to vector<8x128xf32>
    %21 = arith.addf %18, %20 : vector<8x128xf32>
    %cst_16 = arith.constant 0.000000e+00 : f32
    %22 = vector.broadcast %cst_16 : f32 to vector<8x128xf32>
    %23 = arith.maximumf %21, %22 : vector<8x128xf32>
    %c0_17 = arith.constant 0 : index
    %c0_18 = arith.constant 0 : index
    %24 = vector.load %arg8[%c0_17, %c0_18] : memref<128x256xf32, #tpu.memory_space<vmem>>, vector<128x256xf32>
    %cst_19 = arith.constant dense<0.000000e+00> : vector<8x256xf32>
    %25 = tpu.matmul %23, %24, %cst_19 {dimension_numbers = #tpu.dot_dimension_numbers<[1], [0], [0], [1], [0, 0, 1, 1], [], []>} : vector<8x128xf32>, vector<128x256xf32>, vector<8x256xf32> -> vector<8x256xf32>
    %c0_20 = arith.constant 0 : index
    %c0_21 = arith.constant 0 : index
    %26 = vector.load %arg9[%c0_20, %c0_21] : memref<1x256xf32, #tpu.memory_space<vmem>>, vector<1x256xf32>
    %27 = vector.broadcast %26 : vector<1x256xf32> to vector<8x256xf32>
    %28 = arith.addf %25, %27 : vector<8x256xf32>
    %29 = vector.extract_strided_slice %28 {offsets = [0, 0], sizes = [8, 128], strides = [1, 1]} : vector<8x256xf32> to vector<8x128xf32>
    %30 = vector.extract_strided_slice %28 {offsets = [0, 128], sizes = [8, 128], strides = [1, 1]} : vector<8x256xf32> to vector<8x128xf32>
    %cst_22 = arith.constant 5.000000e-01 : f32
    %31 = vector.broadcast %cst_22 : f32 to vector<8x128xf32>
    %32 = arith.mulf %31, %30 : vector<8x128xf32>
    %33 = math.exp %32 : vector<8x128xf32>
    %c0_23 = arith.constant 0 : index
    %c0_24 = arith.constant 0 : index
    %34 = vector.load %arg3[%c0_23, %c0_24] : memref<8x128xf32, #tpu.memory_space<vmem>>, vector<8x128xf32>
    %35 = arith.mulf %34, %33 : vector<8x128xf32>
    %36 = arith.addf %29, %35 : vector<8x128xf32>
    %c0_25 = arith.constant 0 : index
    %c128 = arith.constant 128 : index
    %37 = vector.load %arg16[%c0_25, %c128] : memref<128x256xf32, #tpu.memory_space<vmem>>, vector<128x128xf32>
    %cst_26 = arith.constant dense<0.000000e+00> : vector<8x128xf32>
    %38 = tpu.matmul %6, %37, %cst_26 {dimension_numbers = #tpu.dot_dimension_numbers<[1], [0], [0], [1], [0, 0, 1, 1], [], []>} : vector<8x128xf32>, vector<128x128xf32>, vector<8x128xf32> -> vector<8x128xf32>
    %c0_27 = arith.constant 0 : index
    %c0_28 = arith.constant 0 : index
    %39 = vector.load %arg10[%c0_27, %c0_28] : memref<128x128xf32, #tpu.memory_space<vmem>>, vector<128x128xf32>
    %cst_29 = arith.constant dense<0.000000e+00> : vector<8x128xf32>
    %40 = tpu.matmul %36, %39, %cst_29 {dimension_numbers = #tpu.dot_dimension_numbers<[1], [0], [0], [1], [0, 0, 1, 1], [], []>} : vector<8x128xf32>, vector<128x128xf32>, vector<8x128xf32> -> vector<8x128xf32>
    %41 = arith.addf %40, %38 : vector<8x128xf32>
    %c0_30 = arith.constant 0 : index
    %c0_31 = arith.constant 0 : index
    %42 = vector.load %arg11[%c0_30, %c0_31] : memref<1x128xf32, #tpu.memory_space<vmem>>, vector<1x128xf32>
    %43 = vector.broadcast %42 : vector<1x128xf32> to vector<8x128xf32>
    %44 = arith.addf %41, %43 : vector<8x128xf32>
    %cst_32 = arith.constant 0.000000e+00 : f32
    %45 = vector.broadcast %cst_32 : f32 to vector<8x128xf32>
    %46 = arith.maximumf %44, %45 : vector<8x128xf32>
    %c0_33 = arith.constant 0 : index
    %c0_34 = arith.constant 0 : index
    %47 = vector.load %arg12[%c0_33, %c0_34] : memref<128x128xf32, #tpu.memory_space<vmem>>, vector<128x128xf32>
    %cst_35 = arith.constant dense<0.000000e+00> : vector<8x128xf32>
    %48 = tpu.matmul %46, %47, %cst_35 {dimension_numbers = #tpu.dot_dimension_numbers<[1], [0], [0], [1], [0, 0, 1, 1], [], []>} : vector<8x128xf32>, vector<128x128xf32>, vector<8x128xf32> -> vector<8x128xf32>
    %c0_36 = arith.constant 0 : index
    %c0_37 = arith.constant 0 : index
    %49 = vector.load %arg13[%c0_36, %c0_37] : memref<1x128xf32, #tpu.memory_space<vmem>>, vector<1x128xf32>
    %50 = vector.broadcast %49 : vector<1x128xf32> to vector<8x128xf32>
    %51 = arith.addf %48, %50 : vector<8x128xf32>
    %cst_38 = arith.constant 0.000000e+00 : f32
    %52 = vector.broadcast %cst_38 : f32 to vector<8x128xf32>
    %53 = arith.maximumf %51, %52 : vector<8x128xf32>
    %c0_39 = arith.constant 0 : index
    %c0_40 = arith.constant 0 : index
    %54 = vector.load %arg14[%c0_39, %c0_40] : memref<128x128xf32, #tpu.memory_space<vmem>>, vector<128x128xf32>
    %cst_41 = arith.constant dense<0.000000e+00> : vector<8x128xf32>
    %55 = tpu.matmul %53, %54, %cst_41 {dimension_numbers = #tpu.dot_dimension_numbers<[1], [0], [0], [1], [0, 0, 1, 1], [], []>} : vector<8x128xf32>, vector<128x128xf32>, vector<8x128xf32> -> vector<8x128xf32>
    %c0_42 = arith.constant 0 : index
    %c0_43 = arith.constant 0 : index
    %56 = vector.load %arg15[%c0_42, %c0_43] : memref<1x128xf32, #tpu.memory_space<vmem>>, vector<1x128xf32>
    %57 = vector.broadcast %56 : vector<1x128xf32> to vector<8x128xf32>
    %58 = arith.addf %55, %57 : vector<8x128xf32>
    %cst_44 = arith.constant -3.000000e+01 : f32
    %cst_45 = arith.constant 3.000000e+01 : f32
    %59 = vector.broadcast %cst_44 : f32 to vector<8x128xf32>
    %60 = arith.maximumf %59, %58 : vector<8x128xf32>
    %61 = vector.broadcast %cst_45 : f32 to vector<8x128xf32>
    %62 = arith.minimumf %61, %60 : vector<8x128xf32>
    %cst_46 = arith.constant 0.000000e+00 : f32
    %63 = vector.broadcast %cst_46 : f32 to vector<8x128xf32>
    %64 = arith.subf %63, %62 : vector<8x128xf32>
    %65 = math.exp %64 : vector<8x128xf32>
    %cst_47 = arith.constant 1.000000e+00 : f32
    %66 = vector.broadcast %cst_47 : f32 to vector<8x128xf32>
    %67 = arith.addf %66, %65 : vector<8x128xf32>
    %68 = tpu.reciprocal %67 {approx = true} : vector<8x128xf32> -> vector<8x128xf32>
    %c0_48 = arith.constant 0 : index
    %c0_49 = arith.constant 0 : index
    %69 = vector.load %arg17[%c0_48, %c0_49] : memref<8x128xf32, #tpu.memory_space<vmem>>, vector<8x128xf32>
    tpu.vector_store %arg17[%c0_48, %c0_49], %68 {strides = array<i32>} : memref<8x128xf32, #tpu.memory_space<vmem>>, vector<8x128xf32>,
    %c0_50 = arith.constant 0 : index
    %c0_51 = arith.constant 0 : index
    %70 = vector.load %arg18[%c0_50, %c0_51] : memref<8x256xf32, #tpu.memory_space<vmem>>, vector<8x256xf32>
    tpu.vector_store %arg18[%c0_50, %c0_51], %28 {strides = array<i32>} : memref<8x256xf32, #tpu.memory_space<vmem>>, vector<8x256xf32>,
    return
  }
  func.func @transform_0(%arg0: i32) -> (i32, i32) {
    %c0_i32 = arith.constant 0 : i32
    %c0_i32_0 = arith.constant 0 : i32
    return %arg0, %c0_i32 : i32, i32
  }
  func.func @transform_1(%arg0: i32) -> (i32, i32) {
    %c0_i32 = arith.constant 0 : i32
    %c0_i32_0 = arith.constant 0 : i32
    return %arg0, %c0_i32 : i32, i32
  }
  func.func @transform_2(%arg0: i32) -> (i32, i32) {
    %c0_i32 = arith.constant 0 : i32
    %c0_i32_0 = arith.constant 0 : i32
    return %arg0, %c0_i32 : i32, i32
  }
  func.func @transform_3(%arg0: i32) -> (i32, i32) {
    %c0_i32 = arith.constant 0 : i32
    %c0_i32_0 = arith.constant 0 : i32
    %c0_i32_1 = arith.constant 0 : i32
    return %c0_i32, %c0_i32_0 : i32, i32
  }
  func.func @transform_4(%arg0: i32) -> (i32, i32) {
    %c0_i32 = arith.constant 0 : i32
    %c0_i32_0 = arith.constant 0 : i32
    %c0_i32_1 = arith.constant 0 : i32
    return %c0_i32, %c0_i32_0 : i32, i32
  }
  func.func @transform_5(%arg0: i32) -> (i32, i32) {
    %c0_i32 = arith.constant 0 : i32
    %c0_i32_0 = arith.constant 0 : i32
    %c0_i32_1 = arith.constant 0 : i32
    return %c0_i32, %c0_i32_0 : i32, i32
  }
  func.func @transform_6(%arg0: i32) -> (i32, i32) {
    %c0_i32 = arith.constant 0 : i32
    %c0_i32_0 = arith.constant 0 : i32
    %c0_i32_1 = arith.constant 0 : i32
    return %c0_i32, %c0_i32_0 : i32, i32
  }
  func.func @transform_7(%arg0: i32) -> (i32, i32) {
    %c0_i32 = arith.constant 0 : i32
    %c0_i32_0 = arith.constant 0 : i32
    %c0_i32_1 = arith.constant 0 : i32
    return %c0_i32, %c0_i32_0 : i32, i32
  }
  func.func @transform_8(%arg0: i32) -> (i32, i32) {
    %c0_i32 = arith.constant 0 : i32
    %c0_i32_0 = arith.constant 0 : i32
    %c0_i32_1 = arith.constant 0 : i32
    return %c0_i32, %c0_i32_0 : i32, i32
  }
  func.func @transform_9(%arg0: i32) -> (i32, i32) {
    %c0_i32 = arith.constant 0 : i32
    %c0_i32_0 = arith.constant 0 : i32
    %c0_i32_1 = arith.constant 0 : i32
    return %c0_i32, %c0_i32_0 : i32, i32
  }
  func.func @transform_10(%arg0: i32) -> (i32, i32) {
    %c0_i32 = arith.constant 0 : i32
    %c0_i32_0 = arith.constant 0 : i32
    %c0_i32_1 = arith.constant 0 : i32
    return %c0_i32, %c0_i32_0 : i32, i32
  }
  func.func @transform_11(%arg0: i32) -> (i32, i32) {
    %c0_i32 = arith.constant 0 : i32
    %c0_i32_0 = arith.constant 0 : i32
    %c0_i32_1 = arith.constant 0 : i32
    return %c0_i32, %c0_i32_0 : i32, i32
  }
  func.func @transform_12(%arg0: i32) -> (i32, i32) {
    %c0_i32 = arith.constant 0 : i32
    %c0_i32_0 = arith.constant 0 : i32
    %c0_i32_1 = arith.constant 0 : i32
    return %c0_i32, %c0_i32_0 : i32, i32
  }
  func.func @transform_13(%arg0: i32) -> (i32, i32) {
    %c0_i32 = arith.constant 0 : i32
    %c0_i32_0 = arith.constant 0 : i32
    %c0_i32_1 = arith.constant 0 : i32
    return %c0_i32, %c0_i32_0 : i32, i32
  }
  func.func @transform_14(%arg0: i32) -> (i32, i32) {
    %c0_i32 = arith.constant 0 : i32
    %c0_i32_0 = arith.constant 0 : i32
    %c0_i32_1 = arith.constant 0 : i32
    return %c0_i32, %c0_i32_0 : i32, i32
  }
  func.func @transform_15(%arg0: i32) -> (i32, i32) {
    %c0_i32 = arith.constant 0 : i32
    %c0_i32_0 = arith.constant 0 : i32
    %c0_i32_1 = arith.constant 0 : i32
    return %c0_i32, %c0_i32_0 : i32, i32
  }
  func.func @transform_16(%arg0: i32) -> (i32, i32) {
    %c0_i32 = arith.constant 0 : i32
    %c0_i32_0 = arith.constant 0 : i32
    return %arg0, %c0_i32 : i32, i32
  }
  func.func @transform_17(%arg0: i32) -> (i32, i32) {
    %c0_i32 = arith.constant 0 : i32
    %c0_i32_0 = arith.constant 0 : i32
    return %arg0, %c0_i32 : i32, i32
  }
}

</mosaic_0001>

<llo_original>
// kernel: tpu_custom_call.1
$region0: #{tpu_custom_call.1}
  #allocation0 [shape = 'u32[]', space=smem, size = 0x4, offset = 0x4, fixed_abs, tag = 'smem constant byte address 0x4 - core index']
  #allocation1 [shape = 'u32[144,128]{1,0:T(1,128)}', space=vmem, size = 0x12000, scoped, tag = 'internal scratch']
  %s0 = inlined_call_operand.vmem [shape: f32[16,128], index: 0, kind: input, shape index: {}]
  %s1 = inlined_call_operand.vmem [shape: s32[16,1], index: 1, kind: input, shape index: {}]
  %s2 = inlined_call_operand.hbm [shape: f32[16,128], index: 2, kind: input, shape index: {}]
  %s3 = inlined_call_operand.hbm [shape: f32[128,128], index: 3, kind: input, shape index: {}]
  %s4 = inlined_call_operand.vmem [shape: f32[1,128], index: 4, kind: input, shape index: {}]
  %s5 = inlined_call_operand.hbm [shape: f32[128,128], index: 5, kind: input, shape index: {}]
  %s6 = inlined_call_operand.vmem [shape: f32[1,128], index: 6, kind: input, shape index: {}]
  %s7 = inlined_call_operand.hbm [shape: f32[128,256], index: 7, kind: input, shape index: {}]
  %s8 = inlined_call_operand.vmem [shape: f32[1,256], index: 8, kind: input, shape index: {}]
  %s9 = inlined_call_operand.hbm [shape: f32[128,128], index: 9, kind: input, shape index: {}]
  %s10 = inlined_call_operand.vmem [shape: f32[1,128], index: 10, kind: input, shape index: {}]
  %s11 = inlined_call_operand.hbm [shape: f32[128,128], index: 11, kind: input, shape index: {}]
  %s12 = inlined_call_operand.vmem [shape: f32[1,128], index: 12, kind: input, shape index: {}]
  %s13 = inlined_call_operand.hbm [shape: f32[128,128], index: 13, kind: input, shape index: {}]
  %s14 = inlined_call_operand.vmem [shape: f32[1,128], index: 14, kind: input, shape index: {}]
  %s15 = inlined_call_operand.hbm [shape: f32[128,256], index: 15, kind: input, shape index: {}]
  %s16 = inlined_call_operand.hbm [shape: f32[16,128], index: 16, kind: output, shape index: {0}]
  %s17 = inlined_call_operand.hbm [shape: f32[16,256], index: 17, kind: output, shape index: {1}]
  %18 = xla_tuple %s16, %s17
  %s19 = sld [smem:[#allocation0]]
  $region137: #{tpu_custom_call.1} parent=0
    _
  %s21 = ssub.s32 1, %s19
  %s22 = scalar_select 0, %s21, %s19
  $region1: #{tpu_custom_call.1} parent=0
    #allocation2 [shape = 'u8[8192]{0}', space=vmem, size = 0x2000, scoped, tag = 'input window, operand 2']
    #allocation3 [shape = 's32[2]{0}', space=sflag, size = 0x8, scoped, tag = 'scoped memory for tpu_custom_call.1']
    #allocation4 [shape = 's32[2]{0}', space=sflag, size = 0x8, scoped, tag = 'scoped memory for tpu_custom_call.1']
    #allocation5 [shape = 'u8[65536]{0}', space=vmem, size = 0x10000, scoped, tag = 'input window, operand 3, single buffered']
    #allocation6 [shape = 's32[1]{0}', space=sflag, size = 0x4, scoped, tag = 'scoped memory for tpu_custom_call.1']
    #allocation7 [shape = 'u8[65536]{0}', space=vmem, size = 0x10000, scoped, tag = 'input window, operand 5, single buffered']
    #allocation8 [shape = 'u8[131072]{0}', space=vmem, size = 0x20000, scoped, tag = 'input window, operand 7, single buffered']
    #allocation9 [shape = 's32[1]{0}', space=sflag, size = 0x4, scoped, tag = 'scoped memory for tpu_custom_call.1']
    #allocation10 [shape = 'u8[65536]{0}', space=vmem, size = 0x10000, scoped, tag = 'input window, operand 9, single buffered']
    #allocation11 [shape = 'u8[65536]{0}', space=vmem, size = 0x10000, scoped, tag = 'input window, operand 11, single buffered']
    #allocation12 [shape = 's32[1]{0}', space=sflag, size = 0x4, scoped, tag = 'scoped memory for tpu_custom_call.1']
    #allocation13 [shape = 'u8[65536]{0}', space=vmem, size = 0x10000, scoped, tag = 'input window, operand 13, single buffered']
    #allocation14 [shape = 'u8[131072]{0}', space=vmem, size = 0x20000, scoped, tag = 'input window, operand 15, single buffered']
    #allocation15 [shape = 's32[1]{0}', space=sflag, size = 0x4, scoped, tag = 'scoped memory for tpu_custom_call.1']
    #allocation16 [shape = 'u8[8192]{0}', space=vmem, size = 0x2000, scoped, tag = 'output window, operand 0']
    #allocation17 [shape = 'u8[16384]{0}', space=vmem, size = 0x4000, scoped, tag = 'output window, operand 1']
    #allocation18 [shape = 's32[2]{0}', space=sflag, size = 0x8, scoped, tag = 'scoped memory for tpu_custom_call.1']
    %23 = vsyncpa [#allocation3], 0
    %s24 = scalar_lea.sflag [#allocation3], 1
    %25 = vsyncpa %s24, 0
    %26 = vsyncpa [#allocation6], 0
    %27 = vsyncpa [#allocation9], 0
    %28 = vsyncpa [#allocation12], 0
    %29 = vsyncpa [#allocation15], 0
    %30 = vsyncpa [#allocation4], 0
    %s31 = scalar_lea.sflag [#allocation4], 1
    %32 = vsyncpa %s31, 0
    %33 = vsyncpa [#allocation18], 0
    %s34 = scalar_lea.sflag [#allocation18], 1
    %35 = vsyncpa %s34, 0
    loop: start=0, step=1, limit=4
    $region2: #{tpu_custom_call.1} parent=1 // loop_pre_header
      _
    $region3: #{tpu_custom_call.1} parent=1 // loop_header
      %s37 = sphi 0, %s41
      %p38 = scmp.ge.s32.totalorder %s37, 4
      %s47 = sphi 0, %s49
      %s50 = sphi 0, %s47
      %s51 = sphi 0, %s50
      %s67 = sphi 0, %s51
      %s73 = sphi 0, %s75
      %s76 = sphi 0, %s73
      %s77 = sphi 0, %s76
      %s93 = sphi 0, %s77
      %s99 = sphi 0, %s101
      %s102 = sphi 0, %s99
      %s103 = sphi 0, %s102
      %s119 = sphi 0, %s103
      %s123 = sphi 0, %s123
      %s125 = sphi 0, %s123
      %s126 = sphi 0, %s125
      %s140 = sphi 0, %s126
      %s144 = sphi 0, %s144
      %s146 = sphi 0, %s144
      %s147 = sphi 0, %s146
      %s161 = sphi 0, %s147
      %s165 = sphi 0, %s165
      %s167 = sphi 0, %s165
      %s168 = sphi 0, %s167
      %s182 = sphi 0, %s168
      %s186 = sphi 0, %s186
      %s188 = sphi 0, %s186
      %s189 = sphi 0, %s188
      %s203 = sphi 0, %s189
      %s207 = sphi 0, %s207
      %s209 = sphi 0, %s207
      %s210 = sphi 0, %s209
      %s224 = sphi 0, %s210
      %s228 = sphi 0, %s228
      %s230 = sphi 0, %s228
      %s231 = sphi 0, %s230
      %s245 = sphi 0, %s231
      %s249 = sphi 0, %s249
      %s251 = sphi 0, %s249
      %s252 = sphi 0, %s251
      %s266 = sphi 0, %s252
      %s270 = sphi 0, %s270
      %s272 = sphi 0, %s270
      %s273 = sphi 0, %s272
      %s287 = sphi 0, %s273
      %s291 = sphi 0, %s291
      %s293 = sphi 0, %s291
      %s294 = sphi 0, %s293
      %s308 = sphi 0, %s294
      %s312 = sphi 0, %s312
      %s314 = sphi 0, %s312
      %s315 = sphi 0, %s314
      %s329 = sphi 0, %s315
      %s333 = sphi 0, %s333
      %s335 = sphi 0, %s333
      %s336 = sphi 0, %s335
      %s350 = sphi 0, %s336
      %s354 = sphi 0, %s354
      %s356 = sphi 0, %s354
      %s357 = sphi 0, %s356
      %s371 = sphi 0, %s357
      %s375 = sphi 0, %s375
      %s377 = sphi 0, %s375
      %s378 = sphi 0, %s377
      %s392 = sphi 0, %s378
      %s398 = sphi 0, %s400
      %s401 = sphi 0, %s398
      %s402 = sphi 0, %s401
      %s418 = sphi 0, %s402
      %s424 = sphi 0, %s426
      %s427 = sphi 0, %s424
      %s428 = sphi 0, %s427
      %s444 = sphi 0, %s428
    $region4: #{tpu_custom_call.1} parent=1 // loop_header_branch
      %40 = sbr.rel (%p38) target = $region8
    $region5: #{tpu_custom_call.1} parent=1 // loop_body
      %s42 = ssub.s32 %s37, 1
      %s43 = ssub.s32 %s37, 2
      %s44 = sadd.s32 %s37, 1
      %s45 = ssub.s32 %s37, %s44
      %p46 = scmp.eq.s32.totalorder %s45, 0
      %s48 = sadd.s32 %s47, 1
      %s49 = scalar_select %p46, %s47, %s48
      %p52 = pneg %p46
      %p53 = scmp.eq.s32.totalorder %s37, 1
      %p54 = por %p52, %p53
      %p55 = scmp.ne.s32.totalorder %s47, %s50
      %p56 = scmp.eq.s32.totalorder %s37, 0
      %p57 = por %p55, %p56
      %p58 = scmp.ne.s32.totalorder %s47, %s50
      %p59 = scmp.eq.s32.totalorder %s42, 1
      %p60 = por %p58, %p59
      %p61 = scmp.ne.s32.totalorder %s50, %s51
      %p62 = scmp.eq.s32.totalorder %s42, 0
      %p63 = por %p61, %p62
      %p64 = scmp.ne.s32.totalorder %s50, %s51
      %p65 = scmp.eq.s32.totalorder %s43, 1
      %p66 = por %p64, %p65
      %p68 = scmp.ne.s32.totalorder %s51, %s67
      %p69 = scmp.eq.s32.totalorder %s43, 0
      %p70 = por %p68, %p69
      %s71 = ssub.s32 %s37, %s44
      %p72 = scmp.eq.s32.totalorder %s71, 0
      %s74 = sadd.s32 %s73, 1
      %s75 = scalar_select %p72, %s73, %s74
      %p78 = pneg %p72
      %p79 = scmp.eq.s32.totalorder %s37, 1
      %p80 = por %p78, %p79
      %p81 = scmp.ne.s32.totalorder %s73, %s76
      %p82 = scmp.eq.s32.totalorder %s37, 0
      %p83 = por %p81, %p82
      %p84 = scmp.ne.s32.totalorder %s73, %s76
      %p85 = scmp.eq.s32.totalorder %s42, 1
      %p86 = por %p84, %p85
      %p87 = scmp.ne.s32.totalorder %s76, %s77
      %p88 = scmp.eq.s32.totalorder %s42, 0
      %p89 = por %p87, %p88
      %p90 = scmp.ne.s32.totalorder %s76, %s77
      %p91 = scmp.eq.s32.totalorder %s43, 1
      %p92 = por %p90, %p91
      %p94 = scmp.ne.s32.totalorder %s77, %s93
      %p95 = scmp.eq.s32.totalorder %s43, 0
      %p96 = por %p94, %p95
      %s97 = ssub.s32 %s37, %s44
      %p98 = scmp.eq.s32.totalorder %s97, 0
      %s100 = sadd.s32 %s99, 1
      %s101 = scalar_select %p98, %s99, %s100
      %p104 = pneg %p98
      %p105 = scmp.eq.s32.totalorder %s37, 1
      %p106 = por %p104, %p105
      %p107 = scmp.ne.s32.totalorder %s99, %s102
      %p108 = scmp.eq.s32.totalorder %s37, 0
      %p109 = por %p107, %p108
      %p110 = scmp.ne.s32.totalorder %s99, %s102
      %p111 = scmp.eq.s32.totalorder %s42, 1
      %p112 = por %p110, %p111
      %p113 = scmp.ne.s32.totalorder %s102, %s103
      %p114 = scmp.eq.s32.totalorder %s42, 0
      %p115 = por %p113, %p114
      %p116 = scmp.ne.s32.totalorder %s102, %s103
      %p117 = scmp.eq.s32.totalorder %s43, 1
      %p118 = por %p116, %p117
      %p120 = scmp.ne.s32.totalorder %s103, %s119
      %p121 = scmp.eq.s32.totalorder %s43, 0
      %p122 = por %p120, %p121
      %s124 = sadd.s32 %s123, 1
      %p127 = scmp.eq.s32.totalorder %s37, 1
      %p128 = scmp.ne.s32.totalorder %s123, %s125
      %p129 = scmp.eq.s32.totalorder %s37, 0
      %p130 = por %p128, %p129
      %p131 = scmp.ne.s32.totalorder %s123, %s125
      %p132 = scmp.eq.s32.totalorder %s42, 1
      %p133 = por %p131, %p132
      %p134 = scmp.ne.s32.totalorder %s125, %s126
      %p135 = scmp.eq.s32.totalorder %s42, 0
      %p136 = por %p134, %p135
      %p137 = scmp.ne.s32.totalorder %s125, %s126
      %p138 = scmp.eq.s32.totalorder %s43, 1
      %p139 = por %p137, %p138
      %p141 = scmp.ne.s32.totalorder %s126, %s140
      %p142 = scmp.eq.s32.totalorder %s43, 0
      %p143 = por %p141, %p142
      %s145 = sadd.s32 %s144, 1
      %p148 = scmp.eq.s32.totalorder %s37, 1
      %p149 = scmp.ne.s32.totalorder %s144, %s146
      %p150 = scmp.eq.s32.totalorder %s37, 0
      %p151 = por %p149, %p150
      %p152 = scmp.ne.s32.totalorder %s144, %s146
      %p153 = scmp.eq.s32.totalorder %s42, 1
      %p154 = por %p152, %p153
      %p155 = scmp.ne.s32.totalorder %s146, %s147
      %p156 = scmp.eq.s32.totalorder %s42, 0
      %p157 = por %p155, %p156
      %p158 = scmp.ne.s32.totalorder %s146, %s147
      %p159 = scmp.eq.s32.totalorder %s43, 1
      %p160 = por %p158, %p159
      %p162 = scmp.ne.s32.totalorder %s147, %s161
      %p163 = scmp.eq.s32.totalorder %s43, 0
      %p164 = por %p162, %p163
      %s166 = sadd.s32 %s165, 1
      %p169 = scmp.eq.s32.totalorder %s37, 1
      %p170 = scmp.ne.s32.totalorder %s165, %s167
      %p171 = scmp.eq.s32.totalorder %s37, 0
      %p172 = por %p170, %p171
      %p173 = scmp.ne.s32.totalorder %s165, %s167
      %p174 = scmp.eq.s32.totalorder %s42, 1
      %p175 = por %p173, %p174
      %p176 = scmp.ne.s32.totalorder %s167, %s168
      %p177 = scmp.eq.s32.totalorder %s42, 0
      %p178 = por %p176, %p177
      %p179 = scmp.ne.s32.totalorder %s167, %s168
      %p180 = scmp.eq.s32.totalorder %s43, 1
      %p181 = por %p179, %p180
      %p183 = scmp.ne.s32.totalorder %s168, %s182
      %p184 = scmp.eq.s32.totalorder %s43, 0
      %p185 = por %p183, %p184
      %s187 = sadd.s32 %s186, 1
      %p190 = scmp.eq.s32.totalorder %s37, 1
      %p191 = scmp.ne.s32.totalorder %s186, %s188
      %p192 = scmp.eq.s32.totalorder %s37, 0
      %p193 = por %p191, %p192
      %p194 = scmp.ne.s32.totalorder %s186, %s188
      %p195 = scmp.eq.s32.totalorder %s42, 1
      %p196 = por %p194, %p195
      %p197 = scmp.ne.s32.totalorder %s188, %s189
      %p198 = scmp.eq.s32.totalorder %s42, 0
      %p199 = por %p197, %p198
      %p200 = scmp.ne.s32.totalorder %s188, %s189
      %p201 = scmp.eq.s32.totalorder %s43, 1
      %p202 = por %p200, %p201
      %p204 = scmp.ne.s32.totalorder %s189, %s203
      %p205 = scmp.eq.s32.totalorder %s43, 0
      %p206 = por %p204, %p205
      %s208 = sadd.s32 %s207, 1
      %p211 = scmp.eq.s32.totalorder %s37, 1
      %p212 = scmp.ne.s32.totalorder %s207, %s209
      %p213 = scmp.eq.s32.totalorder %s37, 0
      %p214 = por %p212, %p213
      %p215 = scmp.ne.s32.totalorder %s207, %s209
      %p216 = scmp.eq.s32.totalorder %s42, 1
      %p217 = por %p215, %p216
      %p218 = scmp.ne.s32.totalorder %s209, %s210
      %p219 = scmp.eq.s32.totalorder %s42, 0
      %p220 = por %p218, %p219
      %p221 = scmp.ne.s32.totalorder %s209, %s210
      %p222 = scmp.eq.s32.totalorder %s43, 1
      %p223 = por %p221, %p222
      %p225 = scmp.ne.s32.totalorder %s210, %s224
      %p226 = scmp.eq.s32.totalorder %s43, 0
      %p227 = por %p225, %p226
      %s229 = sadd.s32 %s228, 1
      %p232 = scmp.eq.s32.totalorder %s37, 1
      %p233 = scmp.ne.s32.totalorder %s228, %s230
      %p234 = scmp.eq.s32.totalorder %s37, 0
      %p235 = por %p233, %p234
      %p236 = scmp.ne.s32.totalorder %s228, %s230
      %p237 = scmp.eq.s32.totalorder %s42, 1
      %p238 = por %p236, %p237
      %p239 = scmp.ne.s32.totalorder %s230, %s231
      %p240 = scmp.eq.s32.totalorder %s42, 0
      %p241 = por %p239, %p240
      %p242 = scmp.ne.s32.totalorder %s230, %s231
      %p243 = scmp.eq.s32.totalorder %s43, 1
      %p244 = por %p242, %p243
      %p246 = scmp.ne.s32.totalorder %s231, %s245
      %p247 = scmp.eq.s32.totalorder %s43, 0
      %p248 = por %p246, %p247
      %s250 = sadd.s32 %s249, 1
      %p253 = scmp.eq.s32.totalorder %s37, 1
      %p254 = scmp.ne.s32.totalorder %s249, %s251
      %p255 = scmp.eq.s32.totalorder %s37, 0
      %p256 = por %p254, %p255
      %p257 = scmp.ne.s32.totalorder %s249, %s251
      %p258 = scmp.eq.s32.totalorder %s42, 1
      %p259 = por %p257, %p258
      %p260 = scmp.ne.s32.totalorder %s251, %s252
      %p261 = scmp.eq.s32.totalorder %s42, 0
      %p262 = por %p260, %p261
      %p263 = scmp.ne.s32.totalorder %s251, %s252
      %p264 = scmp.eq.s32.totalorder %s43, 1
      %p265 = por %p263, %p264
      %p267 = scmp.ne.s32.totalorder %s252, %s266
      %p268 = scmp.eq.s32.totalorder %s43, 0
      %p269 = por %p267, %p268
      %s271 = sadd.s32 %s270, 1
      %p274 = scmp.eq.s32.totalorder %s37, 1
      %p275 = scmp.ne.s32.totalorder %s270, %s272
      %p276 = scmp.eq.s32.totalorder %s37, 0
      %p277 = por %p275, %p276
      %p278 = scmp.ne.s32.totalorder %s270, %s272
      %p279 = scmp.eq.s32.totalorder %s42, 1
      %p280 = por %p278, %p279
      %p281 = scmp.ne.s32.totalorder %s272, %s273
      %p282 = scmp.eq.s32.totalorder %s42, 0
      %p283 = por %p281, %p282
      %p284 = scmp.ne.s32.totalorder %s272, %s273
      %p285 = scmp.eq.s32.totalorder %s43, 1
      %p286 = por %p284, %p285
      %p288 = scmp.ne.s32.totalorder %s273, %s287
      %p289 = scmp.eq.s32.totalorder %s43, 0
      %p290 = por %p288, %p289
      %s292 = sadd.s32 %s291, 1
      %p295 = scmp.eq.s32.totalorder %s37, 1
      %p296 = scmp.ne.s32.totalorder %s291, %s293
      %p297 = scmp.eq.s32.totalorder %s37, 0
      %p298 = por %p296, %p297
      %p299 = scmp.ne.s32.totalorder %s291, %s293
      %p300 = scmp.eq.s32.totalorder %s42, 1
      %p301 = por %p299, %p300
      %p302 = scmp.ne.s32.totalorder %s293, %s294
      %p303 = scmp.eq.s32.totalorder %s42, 0
      %p304 = por %p302, %p303
      %p305 = scmp.ne.s32.totalorder %s293, %s294
      %p306 = scmp.eq.s32.totalorder %s43, 1
      %p307 = por %p305, %p306
      %p309 = scmp.ne.s32.totalorder %s294, %s308
      %p310 = scmp.eq.s32.totalorder %s43, 0
      %p311 = por %p309, %p310
      %s313 = sadd.s32 %s312, 1
      %p316 = scmp.eq.s32.totalorder %s37, 1
      %p317 = scmp.ne.s32.totalorder %s312, %s314
      %p318 = scmp.eq.s32.totalorder %s37, 0
      %p319 = por %p317, %p318
      %p320 = scmp.ne.s32.totalorder %s312, %s314
      %p321 = scmp.eq.s32.totalorder %s42, 1
      %p322 = por %p320, %p321
      %p323 = scmp.ne.s32.totalorder %s314, %s315
      %p324 = scmp.eq.s32.totalorder %s42, 0
      %p325 = por %p323, %p324
      %p326 = scmp.ne.s32.totalorder %s314, %s315
      %p327 = scmp.eq.s32.totalorder %s43, 1
      %p328 = por %p326, %p327
      %p330 = scmp.ne.s32.totalorder %s315, %s329
      %p331 = scmp.eq.s32.totalorder %s43, 0
      %p332 = por %p330, %p331
      %s334 = sadd.s32 %s333, 1
      %p337 = scmp.eq.s32.totalorder %s37, 1
      %p338 = scmp.ne.s32.totalorder %s333, %s335
      %p339 = scmp.eq.s32.totalorder %s37, 0
      %p340 = por %p338, %p339
      %p341 = scmp.ne.s32.totalorder %s333, %s335
      %p342 = scmp.eq.s32.totalorder %s42, 1
      %p343 = por %p341, %p342
      %p344 = scmp.ne.s32.totalorder %s335, %s336
      %p345 = scmp.eq.s32.totalorder %s42, 0
      %p346 = por %p344, %p345
      %p347 = scmp.ne.s32.totalorder %s335, %s336
      %p348 = scmp.eq.s32.totalorder %s43, 1
      %p349 = por %p347, %p348
      %p351 = scmp.ne.s32.totalorder %s336, %s350
      %p352 = scmp.eq.s32.totalorder %s43, 0
      %p353 = por %p351, %p352
      %s355 = sadd.s32 %s354, 1
      %p358 = scmp.eq.s32.totalorder %s37, 1
      %p359 = scmp.ne.s32.totalorder %s354, %s356
      %p360 = scmp.eq.s32.totalorder %s37, 0
      %p361 = por %p359, %p360
      %p362 = scmp.ne.s32.totalorder %s354, %s356
      %p363 = scmp.eq.s32.totalorder %s42, 1
      %p364 = por %p362, %p363
      %p365 = scmp.ne.s32.totalorder %s356, %s357
      %p366 = scmp.eq.s32.totalorder %s42, 0
      %p367 = por %p365, %p366
      %p368 = scmp.ne.s32.totalorder %s356, %s357
      %p369 = scmp.eq.s32.totalorder %s43, 1
      %p370 = por %p368, %p369
      %p372 = scmp.ne.s32.totalorder %s357, %s371
      %p373 = scmp.eq.s32.totalorder %s43, 0
      %p374 = por %p372, %p373
      %s376 = sadd.s32 %s375, 1
      %p379 = scmp.eq.s32.totalorder %s37, 1
      %p380 = scmp.ne.s32.totalorder %s375, %s377
      %p381 = scmp.eq.s32.totalorder %s37, 0
      %p382 = por %p380, %p381
      %p383 = scmp.ne.s32.totalorder %s375, %s377
      %p384 = scmp.eq.s32.totalorder %s42, 1
      %p385 = por %p383, %p384
      %p386 = scmp.ne.s32.totalorder %s377, %s378
      %p387 = scmp.eq.s32.totalorder %s42, 0
      %p388 = por %p386, %p387
      %p389 = scmp.ne.s32.totalorder %s377, %s378
      %p390 = scmp.eq.s32.totalorder %s43, 1
      %p391 = por %p389, %p390
      %p393 = scmp.ne.s32.totalorder %s378, %s392
      %p394 = scmp.eq.s32.totalorder %s43, 0
      %p395 = por %p393, %p394
      %s396 = ssub.s32 %s37, %s44
      %p397 = scmp.eq.s32.totalorder %s396, 0
      %s399 = sadd.s32 %s398, 1
      %s400 = scalar_select %p397, %s398, %s399
      %p403 = pneg %p397
      %p404 = scmp.eq.s32.totalorder %s37, 1
      %p405 = por %p403, %p404
      %p406 = scmp.ne.s32.totalorder %s398, %s401
      %p407 = scmp.eq.s32.totalorder %s37, 0
      %p408 = por %p406, %p407
      %p409 = scmp.ne.s32.totalorder %s398, %s401
      %p410 = scmp.eq.s32.totalorder %s42, 1
      %p411 = por %p409, %p410
      %p412 = scmp.ne.s32.totalorder %s401, %s402
      %p413 = scmp.eq.s32.totalorder %s42, 0
      %p414 = por %p412, %p413
      %p415 = scmp.ne.s32.totalorder %s401, %s402
      %p416 = scmp.eq.s32.totalorder %s43, 1
      %p417 = por %p415, %p416
      %p419 = scmp.ne.s32.totalorder %s402, %s418
      %p420 = scmp.eq.s32.totalorder %s43, 0
      %p421 = por %p419, %p420
      %s422 = ssub.s32 %s37, %s44
      %p423 = scmp.eq.s32.totalorder %s422, 0
      %s425 = sadd.s32 %s424, 1
      %s426 = scalar_select %p423, %s424, %s425
      %p429 = pneg %p423
      %p430 = scmp.eq.s32.totalorder %s37, 1
      %p431 = por %p429, %p430
      %p432 = scmp.ne.s32.totalorder %s424, %s427
      %p433 = scmp.eq.s32.totalorder %s37, 0
      %p434 = por %p432, %p433
      %p435 = scmp.ne.s32.totalorder %s424, %s427
      %p436 = scmp.eq.s32.totalorder %s42, 1
      %p437 = por %p435, %p436
      %p438 = scmp.ne.s32.totalorder %s427, %s428
      %p439 = scmp.eq.s32.totalorder %s42, 0
      %p440 = por %p438, %p439
      %p441 = scmp.ne.s32.totalorder %s427, %s428
      %p442 = scmp.eq.s32.totalorder %s43, 1
      %p443 = por %p441, %p442
      %p445 = scmp.ne.s32.totalorder %s428, %s444
      %p446 = scmp.eq.s32.totalorder %s43, 0
      %p447 = por %p445, %p446
      %p448 = scmp.le.s32.totalorder 1, %s37
      %p449 = scmp.lt.s32.totalorder %s37, 3
      %p450 = pnand %p448, %p449
      %p451 = pneg %p450
      // Predicated region
      $region9: #{tpu_custom_call.1} parent=5 // pred_check
        _
      $region10: #{tpu_custom_call.1} parent=5 // pred_check_branch
        %453 = sbr.rel (%p450) target = $region12
      $region11: #{tpu_custom_call.1} parent=5 // pred_region
        %s454 = ssub.s32 %s37, 1
        // Predicated region
        $region13: #{tpu_custom_call.1} parent=11 // pred_check
          %p455 = pneg %p136
        $region14: #{tpu_custom_call.1} parent=11 // pred_check_branch
          %457 = sbr.rel (%p455) target = $region16
        $region15: #{tpu_custom_call.1} parent=11 // pred_region
          %s459 = ssub.s32 2048, 2048
          %460 = vsyncadd [#allocation6], %s459
          %s461 = sshll.u32 [#allocation5], 4
          %s462 = int_to_ptr.vmem [resolvable:$true] %s461
          %467 = dma.hbm_to_vmem [thread:$0]  %s3, 2048, %s462, [#allocation6], 128, 128, 8
        $region16: #{tpu_custom_call.1} parent=11 // pred_fallthru
          _
        // Predicated region
        $region17: #{tpu_custom_call.1} parent=11 // pred_check
          %p468 = pneg %p157
        $region18: #{tpu_custom_call.1} parent=11 // pred_check_branch
          %470 = sbr.rel (%p468) target = $region20
        $region19: #{tpu_custom_call.1} parent=11 // pred_region
          _
        $region20: #{tpu_custom_call.1} parent=11 // pred_fallthru
          _
        // Predicated region
        $region21: #{tpu_custom_call.1} parent=11 // pred_check
          %p471 = pneg %p178
        $region22: #{tpu_custom_call.1} parent=11 // pred_check_branch
          %473 = sbr.rel (%p471) target = $region24
        $region23: #{tpu_custom_call.1} parent=11 // pred_region
          %s475 = ssub.s32 2048, 2048
          %476 = vsyncadd [#allocation6], %s475
          %s477 = sshll.u32 [#allocation7], 4
          %s478 = int_to_ptr.vmem [resolvable:$true] %s477
          %483 = dma.hbm_to_vmem [thread:$0]  %s5, 2048, %s478, [#allocation6], 128, 128, 8
        $region24: #{tpu_custom_call.1} parent=11 // pred_fallthru
          _
        // Predicated region
        $region25: #{tpu_custom_call.1} parent=11 // pred_check
          %p484 = pneg %p199
        $region26: #{tpu_custom_call.1} parent=11 // pred_check_branch
          %486 = sbr.rel (%p484) target = $region28
        $region27: #{tpu_custom_call.1} parent=11 // pred_region
          _
        $region28: #{tpu_custom_call.1} parent=11 // pred_fallthru
          _
        // Predicated region
        $region29: #{tpu_custom_call.1} parent=11 // pred_check
          %p487 = pneg %p220
        $region30: #{tpu_custom_call.1} parent=11 // pred_check_branch
          %489 = sbr.rel (%p487) target = $region32
        $region31: #{tpu_custom_call.1} parent=11 // pred_region
          %s491 = ssub.s32 4096, 4096
          %492 = vsyncadd [#allocation9], %s491
          %s493 = sshll.u32 [#allocation8], 4
          %s494 = int_to_ptr.vmem [resolvable:$true] %s493
          %499 = dma.hbm_to_vmem [thread:$0]  %s7, 4096, %s494, [#allocation9], 256, 256, 16
        $region32: #{tpu_custom_call.1} parent=11 // pred_fallthru
          _
        // Predicated region
        $region33: #{tpu_custom_call.1} parent=11 // pred_check
          %p500 = pneg %p241
        $region34: #{tpu_custom_call.1} parent=11 // pred_check_branch
          %502 = sbr.rel (%p500) target = $region36
        $region35: #{tpu_custom_call.1} parent=11 // pred_region
          _
        $region36: #{tpu_custom_call.1} parent=11 // pred_fallthru
          _
        // Predicated region
        $region37: #{tpu_custom_call.1} parent=11 // pred_check
          %p503 = pneg %p262
        $region38: #{tpu_custom_call.1} parent=11 // pred_check_branch
          %505 = sbr.rel (%p503) target = $region40
        $region39: #{tpu_custom_call.1} parent=11 // pred_region
          %s507 = ssub.s32 2048, 2048
          %508 = vsyncadd [#allocation9], %s507
          %s509 = sshll.u32 [#allocation10], 4
          %s510 = int_to_ptr.vmem [resolvable:$true] %s509
          %515 = dma.hbm_to_vmem [thread:$0]  %s9, 2048, %s510, [#allocation9], 128, 128, 8
        $region40: #{tpu_custom_call.1} parent=11 // pred_fallthru
          _
        // Predicated region
        $region41: #{tpu_custom_call.1} parent=11 // pred_check
          %p516 = pneg %p283
        $region42: #{tpu_custom_call.1} parent=11 // pred_check_branch
          %518 = sbr.rel (%p516) target = $region44
        $region43: #{tpu_custom_call.1} parent=11 // pred_region
          _
        $region44: #{tpu_custom_call.1} parent=11 // pred_fallthru
          _
        // Predicated region
        $region45: #{tpu_custom_call.1} parent=11 // pred_check
          %p519 = pneg %p304
        $region46: #{tpu_custom_call.1} parent=11 // pred_check_branch
          %521 = sbr.rel (%p519) target = $region48
        $region47: #{tpu_custom_call.1} parent=11 // pred_region
          %s523 = ssub.s32 2048, 2048
          %524 = vsyncadd [#allocation12], %s523
          %s525 = sshll.u32 [#allocation11], 4
          %s526 = int_to_ptr.vmem [resolvable:$true] %s525
          %531 = dma.hbm_to_vmem [thread:$0]  %s11, 2048, %s526, [#allocation12], 128, 128, 8
        $region48: #{tpu_custom_call.1} parent=11 // pred_fallthru
          _
        // Predicated region
        $region49: #{tpu_custom_call.1} parent=11 // pred_check
          %p532 = pneg %p325
        $region50: #{tpu_custom_call.1} parent=11 // pred_check_branch
          %534 = sbr.rel (%p532) target = $region52
        $region51: #{tpu_custom_call.1} parent=11 // pred_region
          _
        $region52: #{tpu_custom_call.1} parent=11 // pred_fallthru
          _
        // Predicated region
        $region53: #{tpu_custom_call.1} parent=11 // pred_check
          %p535 = pneg %p346
        $region54: #{tpu_custom_call.1} parent=11 // pred_check_branch
          %537 = sbr.rel (%p535) target = $region56
        $region55: #{tpu_custom_call.1} parent=11 // pred_region
          %s539 = ssub.s32 2048, 2048
          %540 = vsyncadd [#allocation12], %s539
          %s541 = sshll.u32 [#allocation13], 4
          %s542 = int_to_ptr.vmem [resolvable:$true] %s541
          %547 = dma.hbm_to_vmem [thread:$0]  %s13, 2048, %s542, [#allocation12], 128, 128, 8
        $region56: #{tpu_custom_call.1} parent=11 // pred_fallthru
          _
        // Predicated region
        $region57: #{tpu_custom_call.1} parent=11 // pred_check
          %p548 = pneg %p367
        $region58: #{tpu_custom_call.1} parent=11 // pred_check_branch
          %550 = sbr.rel (%p548) target = $region60
        $region59: #{tpu_custom_call.1} parent=11 // pred_region
          _
        $region60: #{tpu_custom_call.1} parent=11 // pred_fallthru
          _
        // Predicated region
        $region61: #{tpu_custom_call.1} parent=11 // pred_check
          %p551 = pneg %p388
        $region62: #{tpu_custom_call.1} parent=11 // pred_check_branch
          %553 = sbr.rel (%p551) target = $region64
        $region63: #{tpu_custom_call.1} parent=11 // pred_region
          %s555 = ssub.s32 4096, 4096
          %556 = vsyncadd [#allocation15], %s555
          %s557 = sshll.u32 [#allocation14], 4
          %s558 = int_to_ptr.vmem [resolvable:$true] %s557
          %563 = dma.hbm_to_vmem [thread:$0]  %s15, 4096, %s558, [#allocation15], 256, 256, 16
        $region64: #{tpu_custom_call.1} parent=11 // pred_fallthru
          _
      $region12: #{tpu_custom_call.1} parent=5 // pred_fallthru
        _
      %p564 = scmp.lt.s32.totalorder %s37, 2
      // Predicated region
      $region65: #{tpu_custom_call.1} parent=5 // pred_check
        %p565 = pneg %p564
      $region66: #{tpu_custom_call.1} parent=5 // pred_check_branch
        %567 = sbr.rel (%p565) target = $region68
      $region67: #{tpu_custom_call.1} parent=5 // pred_region
        // Predicated region
        $region69: #{tpu_custom_call.1} parent=67 // pred_check
          %p568 = pneg %p57
        $region70: #{tpu_custom_call.1} parent=67 // pred_check_branch
          %570 = sbr.rel (%p568) target = $region72
        $region71: #{tpu_custom_call.1} parent=67 // pred_region
          %p571 = scmp.lt.s32.totalorder %s37, 1
          %s572 = scalar_select %p571, %s37, 1
          %s573 = smul.addr %s572, 8
          %s574 = scalar_lea.vmem %s0, %s573
        $region72: #{tpu_custom_call.1} parent=67 // pred_fallthru
          _
        // Predicated region
        $region73: #{tpu_custom_call.1} parent=67 // pred_check
          %p575 = pneg %p83
        $region74: #{tpu_custom_call.1} parent=67 // pred_check_branch
          %577 = sbr.rel (%p575) target = $region76
        $region75: #{tpu_custom_call.1} parent=67 // pred_region
          %p578 = scmp.lt.s32.totalorder %s37, 1
          %s579 = scalar_select %p578, %s37, 1
          %s580 = smul.addr %s579, 8
          %s581 = scalar_lea.vmem %s1, %s580
        $region76: #{tpu_custom_call.1} parent=67 // pred_fallthru
          _
        // Predicated region
        $region77: #{tpu_custom_call.1} parent=67 // pred_check
          %p582 = pneg %p109
        $region78: #{tpu_custom_call.1} parent=67 // pred_check_branch
          %584 = sbr.rel (%p582) target = $region80
        $region79: #{tpu_custom_call.1} parent=67 // pred_region
          %s585 = sand.u32 %s99, 1
          %s586 = scalar_lea.sflag [#allocation3], %s585
          %s587 = sand.u32 %s99, 1
          %s588 = smul.addr %s587, 8
          %s589 = scalar_lea.vmem [#allocation2], %s588
          %s591 = ssub.s32 128, 128
          %592 = vsyncadd %s586, %s591
          %s593 = smul.addr %s37, 128
          %s594 = scalar_lea.hbm %s2, %s593
          %s596 = sshll.u32 %s589, 4
          %s597 = int_to_ptr.vmem [resolvable:$true] %s596
          %599 = dma.hbm_to_vmem [thread:$0]  %s594, 128, %s597, %s586
        $region80: #{tpu_custom_call.1} parent=67 // pred_fallthru
          _
      $region68: #{tpu_custom_call.1} parent=5 // pred_fallthru
        _
      %p600 = scmp.le.s32.totalorder 1, %s37
      %p601 = scmp.lt.s32.totalorder %s37, 3
      %p602 = pnand %p600, %p601
      %p603 = pneg %p602
      // Predicated region
      $region81: #{tpu_custom_call.1} parent=5 // pred_check
        _
      $region82: #{tpu_custom_call.1} parent=5 // pred_check_branch
        %605 = sbr.rel (%p602) target = $region84
      $region83: #{tpu_custom_call.1} parent=5 // pred_region
        %s606 = ssub.s32 %s37, 1
        %s607 = sand.u32 %s102, 1
        %s608 = scalar_lea.sflag [#allocation3], %s607
        %s609 = sand.u32 %s102, 1
        %s610 = smul.addr %s609, 8
        %s611 = scalar_lea.vmem [#allocation2], %s610
        // Predicated region
        $region85: #{tpu_custom_call.1} parent=83 // pred_check
          %p612 = pneg %p115
        $region86: #{tpu_custom_call.1} parent=83 // pred_check_branch
          %614 = sbr.rel (%p612) target = $region88
        $region87: #{tpu_custom_call.1} parent=83 // pred_region
          %615 = dma.done %s608, 128
        $region88: #{tpu_custom_call.1} parent=83 // pred_fallthru
          _
        // Predicated region
        $region89: #{tpu_custom_call.1} parent=83 // pred_check
          %p616 = pneg %p136
        $region90: #{tpu_custom_call.1} parent=83 // pred_check_branch
          %618 = sbr.rel (%p616) target = $region92
        $region91: #{tpu_custom_call.1} parent=83 // pred_region
          %619 = dma.done [#allocation6], 2048
        $region92: #{tpu_custom_call.1} parent=83 // pred_fallthru
          _
        // Predicated region
        $region93: #{tpu_custom_call.1} parent=83 // pred_check
          %p620 = pneg %p178
        $region94: #{tpu_custom_call.1} parent=83 // pred_check_branch
          %622 = sbr.rel (%p620) target = $region96
        $region95: #{tpu_custom_call.1} parent=83 // pred_region
          %623 = dma.done [#allocation6], 2048
        $region96: #{tpu_custom_call.1} parent=83 // pred_fallthru
          _
        // Predicated region
        $region97: #{tpu_custom_call.1} parent=83 // pred_check
          %p624 = pneg %p220
        $region98: #{tpu_custom_call.1} parent=83 // pred_check_branch
          %626 = sbr.rel (%p624) target = $region100
        $region99: #{tpu_custom_call.1} parent=83 // pred_region
          %627 = dma.done [#allocation9], 4096
        $region100: #{tpu_custom_call.1} parent=83 // pred_fallthru
          _
        // Predicated region
        $region101: #{tpu_custom_call.1} parent=83 // pred_check
          %p628 = pneg %p262
        $region102: #{tpu_custom_call.1} parent=83 // pred_check_branch
          %630 = sbr.rel (%p628) target = $region104
        $region103: #{tpu_custom_call.1} parent=83 // pred_region
          %631 = dma.done [#allocation9], 2048
        $region104: #{tpu_custom_call.1} parent=83 // pred_fallthru
          _
        // Predicated region
        $region105: #{tpu_custom_call.1} parent=83 // pred_check
          %p632 = pneg %p304
        $region106: #{tpu_custom_call.1} parent=83 // pred_check_branch
          %634 = sbr.rel (%p632) target = $region108
        $region107: #{tpu_custom_call.1} parent=83 // pred_region
          %635 = dma.done [#allocation12], 2048
        $region108: #{tpu_custom_call.1} parent=83 // pred_fallthru
          _
        // Predicated region
        $region109: #{tpu_custom_call.1} parent=83 // pred_check
          %p636 = pneg %p346
        $region110: #{tpu_custom_call.1} parent=83 // pred_check_branch
          %638 = sbr.rel (%p636) target = $region112
        $region111: #{tpu_custom_call.1} parent=83 // pred_region
          %639 = dma.done [#allocation12], 2048
        $region112: #{tpu_custom_call.1} parent=83 // pred_fallthru
          _
        // Predicated region
        $region113: #{tpu_custom_call.1} parent=83 // pred_check
          %p640 = pneg %p388
        $region114: #{tpu_custom_call.1} parent=83 // pred_check_branch
          %642 = sbr.rel (%p640) target = $region116
        $region115: #{tpu_custom_call.1} parent=83 // pred_region
          %643 = dma.done [#allocation15], 4096
        $region116: #{tpu_custom_call.1} parent=83 // pred_fallthru
          _
        %p644 = scmp.lt.s32.totalorder %s42, 1
        %s645 = scalar_select %p644, %s42, 1
        %s646 = smul.addr %s645, 8
        %s647 = scalar_lea.vmem %s0, %s646
        %p648 = pneg %p63
        %p649 = pneg %p60
        %p650 = scmp.lt.s32.totalorder %s42, 1
        %s651 = scalar_select %p650, %s42, 1
        %s652 = smul.addr %s651, 8
        %s653 = scalar_lea.vmem %s1, %s652
        %p654 = pneg %p89
        %p655 = pneg %p86
        %s656 = sand.u32 %s102, 1
        %s657 = scalar_lea.sflag [#allocation3], %s656
        %s658 = sand.u32 %s102, 1
        %s659 = smul.addr %s658, 8
        %s660 = scalar_lea.vmem [#allocation2], %s659
        %p661 = pneg %p115
        %p662 = pneg %p112
        %p663 = pneg %p136
        %p664 = pneg %p133
        %p665 = pneg %p157
        %p666 = pneg %p154
        %p667 = pneg %p178
        %p668 = pneg %p175
        %p669 = pneg %p199
        %p670 = pneg %p196
        %p671 = pneg %p220
        %p672 = pneg %p217
        %p673 = pneg %p241
        %p674 = pneg %p238
        %p675 = pneg %p262
        %p676 = pneg %p259
        %p677 = pneg %p283
        %p678 = pneg %p280
        %p679 = pneg %p304
        %p680 = pneg %p301
        %p681 = pneg %p325
        %p682 = pneg %p322
        %p683 = pneg %p346
        %p684 = pneg %p343
        %p685 = pneg %p367
        %p686 = pneg %p364
        %p687 = pneg %p388
        %p688 = pneg %p385
        %p689 = pneg %p414
        %p690 = pneg %p411
        %s691 = sand.u32 %s401, 1
        %s692 = scalar_lea.sflag [#allocation4], %s691
        %s693 = sand.u32 %s401, 1
        %s694 = smul.addr %s693, 8
        %s695 = scalar_lea.vmem [#allocation16], %s694
        %p696 = pneg %p440
        %p697 = pneg %p437
        %s698 = sand.u32 %s427, 1
        %s699 = scalar_lea.sflag [#allocation18], %s698
        %s700 = sand.u32 %s427, 1
        %s701 = smul.addr %s700, 16
        %s702 = scalar_lea.vmem [#allocation17], %s701
        %p703 = scmp.lt.s32.totalorder %s42, 1
        %s704 = scalar_select %p703, %s42, 1
        %s705 = smul.addr %s704, 8
        %s706 = scalar_lea.vmem %s0, %s705
        %p707 = scmp.lt.s32.totalorder %s42, 1
        %s708 = scalar_select %p707, %s42, 1
        %s709 = smul.addr %s708, 8
        %s710 = scalar_lea.vmem %s1, %s709
        %v711 = vld [vmem:[%s706] sm:$0xff]
        %v712 = vld [vmem:[%s710] sm:$0xff]
        %v713 = vlaneseq
        %v714 = vand.u32 %v713, 127
        %715 = vset.pattern.permute.xlu0 0
        %716 = vperm.xlu0 %715, %v712
        %v717 = vpop.permute.xlu0 %716
        %vm718 = vcmp.eq.s32.totalorder %v717, %v714
        %v719 = vsel %vm718, 1, 0
        %v720 = vcvt.s32.f32 %v719
        %v721 = vld [vmem:[#allocation14] sm:$0xff]
        %v722 = vld [vmem:[#allocation14 + $0x10] sm:$0xff]
        %v723 = vld [vmem:[#allocation14 + $0x20] sm:$0xff]
        %v724 = vld [vmem:[#allocation14 + $0x30] sm:$0xff]
        %v725 = vld [vmem:[#allocation14 + $0x40] sm:$0xff]
        %v726 = vld [vmem:[#allocation14 + $0x50] sm:$0xff]
        %v727 = vld [vmem:[#allocation14 + $0x60] sm:$0xff]
        %v728 = vld [vmem:[#allocation14 + $0x70] sm:$0xff]
        %v729 = vld [vmem:[#allocation14 + $0x80] sm:$0xff]
        %v730 = vld [vmem:[#allocation14 + $0x90] sm:$0xff]
        %v731 = vld [vmem:[#allocation14 + $0xa0] sm:$0xff]
        %v732 = vld [vmem:[#allocation14 + $0xb0] sm:$0xff]
        %v733 = vld [vmem:[#allocation14 + $0xc0] sm:$0xff]
        %v734 = vld [vmem:[#allocation14 + $0xd0] sm:$0xff]
        %v735 = vld [vmem:[#allocation14 + $0xe0] sm:$0xff]
        %v736 = vld [vmem:[#allocation14 + $0xf0] sm:$0xff]
        %737 = vmatprep.subr.mxu0 0.0
        %738 = vmatpush1.msra.mxu0 %v736
        %739 = vmatprep.subr.mxu0 0.0
        %740 = vmatpush1.msra.mxu0 %v735
        %741 = vmatprep.subr.mxu0 0.0
        %742 = vmatpush1.msra.mxu0 %v734
        %743 = vmatprep.subr.mxu0 0.0
        %744 = vmatpush1.msra.mxu0 %v733
        %745 = vmatprep.subr.mxu0 0.0
        %746 = vmatpush1.msra.mxu0 %v732
        %747 = vmatprep.subr.mxu0 0.0
        %748 = vmatpush1.msra.mxu0 %v731
        %749 = vmatprep.subr.mxu0 0.0
        %750 = vmatpush1.msra.mxu0 %v730
        %751 = vmatprep.subr.mxu0 0.0
        %752 = vmatpush1.msra.mxu0 %v729
        %753 = vmatprep.subr.mxu0 0.0
        %754 = vmatpush1.msra.mxu0 %v728
        %755 = vmatprep.subr.mxu0 0.0
        %756 = vmatpush1.msra.mxu0 %v727
        %757 = vmatprep.subr.mxu0 0.0
        %758 = vmatpush1.msra.mxu0 %v726
        %759 = vmatprep.subr.mxu0 0.0
        %760 = vmatpush1.msra.mxu0 %v725
        %761 = vmatprep.subr.mxu0 0.0
        %762 = vmatpush1.msra.mxu0 %v724
        %763 = vmatprep.subr.mxu0 0.0
        %764 = vmatpush1.msra.mxu0 %v723
        %765 = vmatprep.subr.mxu0 0.0
        %766 = vmatpush1.msra.mxu0 %v722
        %767 = vmatprep.subr.mxu0 0.0
        %768 = vmatpush1.msra.mxu0 %v721
        %769 = vmatprep.subr.mxu0 0.0
        %770 = vmatpush2.msra.mxu0 0.0
        %771 = vmatprep.subr.mxu0 0.0
        %772 = vmatpush2.msra.mxu0 0.0
        %773 = vmatprep.subr.mxu0 0.0
        %774 = vmatpush2.msra.mxu0 0.0
        %775 = vmatprep.subr.mxu0 0.0
        %776 = vmatpush2.msra.mxu0 0.0
        %777 = vmatprep.subr.mxu0 0.0
        %778 = vmatpush2.msra.mxu0 0.0
        %779 = vmatprep.subr.mxu0 0.0
        %780 = vmatpush2.msra.mxu0 0.0
        %781 = vmatprep.subr.mxu0 0.0
        %782 = vmatpush2.msra.mxu0 0.0
        %783 = vmatprep.subr.mxu0 0.0
        %784 = vmatpush2.msra.mxu0 0.0
        %785 = vmatprep.subr.mxu0 0.0
        %786 = vmatpush2.msra.mxu0 0.0
        %787 = vmatprep.subr.mxu0 0.0
        %788 = vmatpush2.msra.mxu0 0.0
        %789 = vmatprep.subr.mxu0 0.0
        %790 = vmatpush2.msra.mxu0 0.0
        %791 = vmatprep.subr.mxu0 0.0
        %792 = vmatpush2.msra.mxu0 0.0
        %793 = vmatprep.subr.mxu0 0.0
        %794 = vmatpush2.msra.mxu0 0.0
        %795 = vmatprep.subr.mxu0 0.0
        %796 = vmatpush2.msra.mxu0 0.0
        %797 = vmatprep.subr.mxu0 0.0
        %798 = vmatpush2.msra.mxu0 0.0
        %799 = vmatprep.subr.mxu0 0.0
        %800 = vmatpush2.msra.mxu0 0.0
        %801 = vmatprep.mubr.f32.mxu0 0.0
        %802 = vmatmul.mubr.f32.gmra.mxu0 %v720
        %v803 = vpop.f32.mrf.mxu0
        %v804 = vadd.f32 0.0, %v803
        %v805 = vpop.f32.mrf.mxu0
        %806 = vdwg.mxu0
        %v807 = vld [vmem:[#allocation5] sm:$0xff]
        %v808 = vld [vmem:[#allocation5 + $0x8] sm:$0xff]
        %v809 = vld [vmem:[#allocation5 + $0x10] sm:$0xff]
        %v810 = vld [vmem:[#allocation5 + $0x18] sm:$0xff]
        %v811 = vld [vmem:[#allocation5 + $0x20] sm:$0xff]
        %v812 = vld [vmem:[#allocation5 + $0x28] sm:$0xff]
        %v813 = vld [vmem:[#allocation5 + $0x30] sm:$0xff]
        %v814 = vld [vmem:[#allocation5 + $0x38] sm:$0xff]
        %v815 = vld [vmem:[#allocation5 + $0x40] sm:$0xff]
        %v816 = vld [vmem:[#allocation5 + $0x48] sm:$0xff]
        %v817 = vld [vmem:[#allocation5 + $0x50] sm:$0xff]
        %v818 = vld [vmem:[#allocation5 + $0x58] sm:$0xff]
        %v819 = vld [vmem:[#allocation5 + $0x60] sm:$0xff]
        %v820 = vld [vmem:[#allocation5 + $0x68] sm:$0xff]
        %v821 = vld [vmem:[#allocation5 + $0x70] sm:$0xff]
        %v822 = vld [vmem:[#allocation5 + $0x78] sm:$0xff]
        %823 = vmatprep.subr.mxu0 0.0
        %824 = vmatpush1.msra.mxu0 %v822
        %825 = vmatprep.subr.mxu0 0.0
        %826 = vmatpush1.msra.mxu0 %v821
        %827 = vmatprep.subr.mxu0 0.0
        %828 = vmatpush1.msra.mxu0 %v820
        %829 = vmatprep.subr.mxu0 0.0
        %830 = vmatpush1.msra.mxu0 %v819
        %831 = vmatprep.subr.mxu0 0.0
        %832 = vmatpush1.msra.mxu0 %v818
        %833 = vmatprep.subr.mxu0 0.0
        %834 = vmatpush1.msra.mxu0 %v817
        %835 = vmatprep.subr.mxu0 0.0
        %836 = vmatpush1.msra.mxu0 %v816
        %837 = vmatprep.subr.mxu0 0.0
        %838 = vmatpush1.msra.mxu0 %v815
        %839 = vmatprep.subr.mxu0 0.0
        %840 = vmatpush1.msra.mxu0 %v814
        %841 = vmatprep.subr.mxu0 0.0
        %842 = vmatpush1.msra.mxu0 %v813
        %843 = vmatprep.subr.mxu0 0.0
        %844 = vmatpush1.msra.mxu0 %v812
        %845 = vmatprep.subr.mxu0 0.0
        %846 = vmatpush1.msra.mxu0 %v811
        %847 = vmatprep.subr.mxu0 0.0
        %848 = vmatpush1.msra.mxu0 %v810
        %849 = vmatprep.subr.mxu0 0.0
        %850 = vmatpush1.msra.mxu0 %v809
        %851 = vmatprep.subr.mxu0 0.0
        %852 = vmatpush1.msra.mxu0 %v808
        %853 = vmatprep.subr.mxu0 0.0
        %854 = vmatpush1.msra.mxu0 %v807
        %855 = vmatprep.subr.mxu0 0.0
        %856 = vmatpush2.msra.mxu0 0.0
        %857 = vmatprep.subr.mxu0 0.0
        %858 = vmatpush2.msra.mxu0 0.0
        %859 = vmatprep.subr.mxu0 0.0
        %860 = vmatpush2.msra.mxu0 0.0
        %861 = vmatprep.subr.mxu0 0.0
        %862 = vmatpush2.msra.mxu0 0.0
        %863 = vmatprep.subr.mxu0 0.0
        %864 = vmatpush2.msra.mxu0 0.0
        %865 = vmatprep.subr.mxu0 0.0
        %866 = vmatpush2.msra.mxu0 0.0
        %867 = vmatprep.subr.mxu0 0.0
        %868 = vmatpush2.msra.mxu0 0.0
        %869 = vmatprep.subr.mxu0 0.0
        %870 = vmatpush2.msra.mxu0 0.0
        %871 = vmatprep.subr.mxu0 0.0
        %872 = vmatpush2.msra.mxu0 0.0
        %873 = vmatprep.subr.mxu0 0.0
        %874 = vmatpush2.msra.mxu0 0.0
        %875 = vmatprep.subr.mxu0 0.0
        %876 = vmatpush2.msra.mxu0 0.0
        %877 = vmatprep.subr.mxu0 0.0
        %878 = vmatpush2.msra.mxu0 0.0
        %879 = vmatprep.subr.mxu0 0.0
        %880 = vmatpush2.msra.mxu0 0.0
        %881 = vmatprep.subr.mxu0 0.0
        %882 = vmatpush2.msra.mxu0 0.0
        %883 = vmatprep.subr.mxu0 0.0
        %884 = vmatpush2.msra.mxu0 0.0
        %885 = vmatprep.subr.mxu0 0.0
        %886 = vmatpush2.msra.mxu0 0.0
        %887 = vmatprep.mubr.f32.mxu0 0.0
        %888 = vmatmul.mubr.f32.gmra.mxu0 %v711
        %v889 = vpop.f32.mrf.mxu0
        %v890 = vadd.f32 %v804, %v889
        %v891 = vpop.f32.mrf.mxu0
        %892 = vdwg.mxu0
        %v893 = vld [vmem:[%s4] sm:$0x1]
        %v895 = vlaneseq
        %v896 = vshrl.u32 %v895, 7
        %v897 = vsub.s32 0, %v896
        %v898 = vrot.slane %v893, %v897
        %v900 = vadd.f32 %v890, %v898
        %v901 = vmax.f32 %v900, 0.0
        %v902 = vld [vmem:[#allocation7] sm:$0xff]
        %v903 = vld [vmem:[#allocation7 + $0x8] sm:$0xff]
        %v904 = vld [vmem:[#allocation7 + $0x10] sm:$0xff]
        %v905 = vld [vmem:[#allocation7 + $0x18] sm:$0xff]
        %v906 = vld [vmem:[#allocation7 + $0x20] sm:$0xff]
        %v907 = vld [vmem:[#allocation7 + $0x28] sm:$0xff]
        %v908 = vld [vmem:[#allocation7 + $0x30] sm:$0xff]
        %v909 = vld [vmem:[#allocation7 + $0x38] sm:$0xff]
        %v910 = vld [vmem:[#allocation7 + $0x40] sm:$0xff]
        %v911 = vld [vmem:[#allocation7 + $0x48] sm:$0xff]
        %v912 = vld [vmem:[#allocation7 + $0x50] sm:$0xff]
        %v913 = vld [vmem:[#allocation7 + $0x58] sm:$0xff]
        %v914 = vld [vmem:[#allocation7 + $0x60] sm:$0xff]
        %v915 = vld [vmem:[#allocation7 + $0x68] sm:$0xff]
        %v916 = vld [vmem:[#allocation7 + $0x70] sm:$0xff]
        %v917 = vld [vmem:[#allocation7 + $0x78] sm:$0xff]
        %v918 = vld [vmem:[%s6] sm:$0x1]
        %v920 = vlaneseq
        %v921 = vshrl.u32 %v920, 7
        %v922 = vsub.s32 0, %v921
        %v923 = vrot.slane %v918, %v922
        %925 = vmatprep.subr.mxu0 0.0
        %926 = vmatpush1.msra.mxu0 %v917
        %927 = vmatprep.subr.mxu0 0.0
        %928 = vmatpush1.msra.mxu0 %v916
        %929 = vmatprep.subr.mxu0 0.0
        %930 = vmatpush1.msra.mxu0 %v915
        %931 = vmatprep.subr.mxu0 0.0
        %932 = vmatpush1.msra.mxu0 %v914
        %933 = vmatprep.subr.mxu0 0.0
        %934 = vmatpush1.msra.mxu0 %v913
        %935 = vmatprep.subr.mxu0 0.0
        %936 = vmatpush1.msra.mxu0 %v912
        %937 = vmatprep.subr.mxu0 0.0
        %938 = vmatpush1.msra.mxu0 %v911
        %939 = vmatprep.subr.mxu0 0.0
        %940 = vmatpush1.msra.mxu0 %v910
        %941 = vmatprep.subr.mxu0 0.0
        %942 = vmatpush1.msra.mxu0 %v909
        %943 = vmatprep.subr.mxu0 0.0
        %944 = vmatpush1.msra.mxu0 %v908
        %945 = vmatprep.subr.mxu0 0.0
        %946 = vmatpush1.msra.mxu0 %v907
        %947 = vmatprep.subr.mxu0 0.0
        %948 = vmatpush1.msra.mxu0 %v906
        %949 = vmatprep.subr.mxu0 0.0
        %950 = vmatpush1.msra.mxu0 %v905
        %951 = vmatprep.subr.mxu0 0.0
        %952 = vmatpush1.msra.mxu0 %v904
        %953 = vmatprep.subr.mxu0 0.0
        %954 = vmatpush1.msra.mxu0 %v903
        %955 = vmatprep.subr.mxu0 0.0
        %956 = vmatpush1.msra.mxu0 %v902
        %957 = vmatprep.subr.mxu0 0.0
        %958 = vmatpush2.msra.mxu0 0.0
        %959 = vmatprep.subr.mxu0 0.0
        %960 = vmatpush2.msra.mxu0 0.0
        %961 = vmatprep.subr.mxu0 0.0
        %962 = vmatpush2.msra.mxu0 0.0
        %963 = vmatprep.subr.mxu0 0.0
        %964 = vmatpush2.msra.mxu0 0.0
        %965 = vmatprep.subr.mxu0 0.0
        %966 = vmatpush2.msra.mxu0 0.0
        %967 = vmatprep.subr.mxu0 0.0
        %968 = vmatpush2.msra.mxu0 0.0
        %969 = vmatprep.subr.mxu0 0.0
        %970 = vmatpush2.msra.mxu0 0.0
        %971 = vmatprep.subr.mxu0 0.0
        %972 = vmatpush2.msra.mxu0 0.0
        %973 = vmatprep.subr.mxu0 0.0
        %974 = vmatpush2.msra.mxu0 0.0
        %975 = vmatprep.subr.mxu0 0.0
        %976 = vmatpush2.msra.mxu0 0.0
        %977 = vmatprep.subr.mxu0 0.0
        %978 = vmatpush2.msra.mxu0 0.0
        %979 = vmatprep.subr.mxu0 0.0
        %980 = vmatpush2.msra.mxu0 0.0
        %981 = vmatprep.subr.mxu0 0.0
        %982 = vmatpush2.msra.mxu0 0.0
        %983 = vmatprep.subr.mxu0 0.0
        %984 = vmatpush2.msra.mxu0 0.0
        %985 = vmatprep.subr.mxu0 0.0
        %986 = vmatpush2.msra.mxu0 0.0
        %987 = vmatprep.subr.mxu0 0.0
        %988 = vmatpush2.msra.mxu0 0.0
        %989 = vmatprep.mubr.f32.mxu0 0.0
        %990 = vmatmul.mubr.f32.gmra.mxu0 %v901
        %v991 = vpop.f32.mrf.mxu0
        %v992 = vadd.f32 %v923, %v991
        %v993 = vpop.f32.mrf.mxu0
        %994 = vdwg.mxu0
        %v995 = vmax.f32 %v992, 0.0
        %v996 = vld [vmem:[#allocation8] sm:$0xff]
        %v997 = vld [vmem:[#allocation8 + $0x8] sm:$0xff]
        %v998 = vld [vmem:[#allocation8 + $0x10] sm:$0xff]
        %v999 = vld [vmem:[#allocation8 + $0x18] sm:$0xff]
        %v1000 = vld [vmem:[#allocation8 + $0x20] sm:$0xff]
        %v1001 = vld [vmem:[#allocation8 + $0x28] sm:$0xff]
        %v1002 = vld [vmem:[#allocation8 + $0x30] sm:$0xff]
        %v1003 = vld [vmem:[#allocation8 + $0x38] sm:$0xff]
        %v1004 = vld [vmem:[#allocation8 + $0x40] sm:$0xff]
        %v1005 = vld [vmem:[#allocation8 + $0x48] sm:$0xff]
        %v1006 = vld [vmem:[#allocation8 + $0x50] sm:$0xff]
        %v1007 = vld [vmem:[#allocation8 + $0x58] sm:$0xff]
        %v1008 = vld [vmem:[#allocation8 + $0x60] sm:$0xff]
        %v1009 = vld [vmem:[#allocation8 + $0x68] sm:$0xff]
        %v1010 = vld [vmem:[#allocation8 + $0x70] sm:$0xff]
        %v1011 = vld [vmem:[#allocation8 + $0x78] sm:$0xff]
        %v1012 = vld [vmem:[#allocation8 + $0x80] sm:$0xff]
        %v1013 = vld [vmem:[#allocation8 + $0x88] sm:$0xff]
        %v1014 = vld [vmem:[#allocation8 + $0x90] sm:$0xff]
        %v1015 = vld [vmem:[#allocation8 + $0x98] sm:$0xff]
        %v1016 = vld [vmem:[#allocation8 + $0xa0] sm:$0xff]
        %v1017 = vld [vmem:[#allocation8 + $0xa8] sm:$0xff]
        %v1018 = vld [vmem:[#allocation8 + $0xb0] sm:$0xff]
        %v1019 = vld [vmem:[#allocation8 + $0xb8] sm:$0xff]
        %v1020 = vld [vmem:[#allocation8 + $0xc0] sm:$0xff]
        %v1021 = vld [vmem:[#allocation8 + $0xc8] sm:$0xff]
        %v1022 = vld [vmem:[#allocation8 + $0xd0] sm:$0xff]
        %v1023 = vld [vmem:[#allocation8 + $0xd8] sm:$0xff]
        %v1024 = vld [vmem:[#allocation8 + $0xe0] sm:$0xff]
        %v1025 = vld [vmem:[#allocation8 + $0xe8] sm:$0xff]
        %v1026 = vld [vmem:[#allocation8 + $0xf0] sm:$0xff]
        %v1027 = vld [vmem:[#allocation8 + $0xf8] sm:$0xff]
        %v1028 = vld [vmem:[%s8] sm:$0x3]
        %v1030 = vlaneseq
        %v1031 = vshrl.u32 %v1030, 7
        %v1032 = vsub.s32 0, %v1031
        %v1033 = vrot.slane %v1028, %v1032
        %v1034 = vlaneseq
        %v1035 = vshrl.u32 %v1034, 7
        %v1036 = vsub.s32 1, %v1035
        %v1037 = vrot.slane %v1028, %v1036
        %1040 = vmatprep.subr.mxu0 %v1027
        %1041 = vmatpush1.msra.mxu0 %v1026
        %1042 = vmatprep.subr.mxu0 %v1025
        %1043 = vmatpush1.msra.mxu0 %v1024
        %1044 = vmatprep.subr.mxu0 %v1023
        %1045 = vmatpush1.msra.mxu0 %v1022
        %1046 = vmatprep.subr.mxu0 %v1021
        %1047 = vmatpush1.msra.mxu0 %v1020
        %1048 = vmatprep.subr.mxu0 %v1019
        %1049 = vmatpush1.msra.mxu0 %v1018
        %1050 = vmatprep.subr.mxu0 %v1017
        %1051 = vmatpush1.msra.mxu0 %v1016
        %1052 = vmatprep.subr.mxu0 %v1015
        %1053 = vmatpush1.msra.mxu0 %v1014
        %1054 = vmatprep.subr.mxu0 %v1013
        %1055 = vmatpush1.msra.mxu0 %v1012
        %1056 = vmatprep.subr.mxu0 %v1011
        %1057 = vmatpush1.msra.mxu0 %v1010
        %1058 = vmatprep.subr.mxu0 %v1009
        %1059 = vmatpush1.msra.mxu0 %v1008
        %1060 = vmatprep.subr.mxu0 %v1007
        %1061 = vmatpush1.msra.mxu0 %v1006
        %1062 = vmatprep.subr.mxu0 %v1005
        %1063 = vmatpush1.msra.mxu0 %v1004
        %1064 = vmatprep.subr.mxu0 %v1003
        %1065 = vmatpush1.msra.mxu0 %v1002
        %1066 = vmatprep.subr.mxu0 %v1001
        %1067 = vmatpush1.msra.mxu0 %v1000
        %1068 = vmatprep.subr.mxu0 %v999
        %1069 = vmatpush1.msra.mxu0 %v998
        %1070 = vmatprep.subr.mxu0 %v997
        %1071 = vmatpush1.msra.mxu0 %v996
        %1072 = vmatprep.subr.mxu0 0.0
        %1073 = vmatpush2.msra.mxu0 0.0
        %1074 = vmatprep.subr.mxu0 0.0
        %1075 = vmatpush2.msra.mxu0 0.0
        %1076 = vmatprep.subr.mxu0 0.0
        %1077 = vmatpush2.msra.mxu0 0.0
        %1078 = vmatprep.subr.mxu0 0.0
        %1079 = vmatpush2.msra.mxu0 0.0
        %1080 = vmatprep.subr.mxu0 0.0
        %1081 = vmatpush2.msra.mxu0 0.0
        %1082 = vmatprep.subr.mxu0 0.0
        %1083 = vmatpush2.msra.mxu0 0.0
        %1084 = vmatprep.subr.mxu0 0.0
        %1085 = vmatpush2.msra.mxu0 0.0
        %1086 = vmatprep.subr.mxu0 0.0
        %1087 = vmatpush2.msra.mxu0 0.0
        %1088 = vmatprep.subr.mxu0 0.0
        %1089 = vmatpush2.msra.mxu0 0.0
        %1090 = vmatprep.subr.mxu0 0.0
        %1091 = vmatpush2.msra.mxu0 0.0
        %1092 = vmatprep.subr.mxu0 0.0
        %1093 = vmatpush2.msra.mxu0 0.0
        %1094 = vmatprep.subr.mxu0 0.0
        %1095 = vmatpush2.msra.mxu0 0.0
        %1096 = vmatprep.subr.mxu0 0.0
        %1097 = vmatpush2.msra.mxu0 0.0
        %1098 = vmatprep.subr.mxu0 0.0
        %1099 = vmatpush2.msra.mxu0 0.0
        %1100 = vmatprep.subr.mxu0 0.0
        %1101 = vmatpush2.msra.mxu0 0.0
        %1102 = vmatprep.subr.mxu0 0.0
        %1103 = vmatpush2.msra.mxu0 0.0
        %1104 = vmatprep.mubr.f32.mxu0 0.0
        %1105 = vmatmul.mubr.f32.gmra.mxu0 %v995
        %v1106 = vpop.f32.mrf.mxu0
        %v1107 = vadd.f32 %v1033, %v1106
        %v1108 = vpop.f32.mrf.mxu0
        %v1109 = vadd.f32 %v1037, %v1108
        %1110 = vdwg.mxu0
        %v1111 = vmul.f32 %v1109, 0.5
        %v1112 = vmul.f32 %v1111, 1.442695
        %v1113 = vpow.pop %v1112
        %v1114 = vld [vmem:[%s611] sm:$0xff]
        %v1115 = vmul.f32 %v1114, %v1113
        %v1116 = vadd.f32 %v1107, %v1115
        %v1117 = vld [vmem:[#allocation14 + $0x8] sm:$0xff]
        %v1118 = vld [vmem:[#allocation14 + $0x18] sm:$0xff]
        %v1119 = vld [vmem:[#allocation14 + $0x28] sm:$0xff]
        %v1120 = vld [vmem:[#allocation14 + $0x38] sm:$0xff]
        %v1121 = vld [vmem:[#allocation14 + $0x48] sm:$0xff]
        %v1122 = vld [vmem:[#allocation14 + $0x58] sm:$0xff]
        %v1123 = vld [vmem:[#allocation14 + $0x68] sm:$0xff]
        %v1124 = vld [vmem:[#allocation14 + $0x78] sm:$0xff]
        %v1125 = vld [vmem:[#allocation14 + $0x88] sm:$0xff]
        %v1126 = vld [vmem:[#allocation14 + $0x98] sm:$0xff]
        %v1127 = vld [vmem:[#allocation14 + $0xa8] sm:$0xff]
        %v1128 = vld [vmem:[#allocation14 + $0xb8] sm:$0xff]
        %v1129 = vld [vmem:[#allocation14 + $0xc8] sm:$0xff]
        %v1130 = vld [vmem:[#allocation14 + $0xd8] sm:$0xff]
        %v1131 = vld [vmem:[#allocation14 + $0xe8] sm:$0xff]
        %v1132 = vld [vmem:[#allocation14 + $0xf8] sm:$0xff]
        %1133 = vmatprep.subr.mxu0 0.0
        %1134 = vmatpush1.msra.mxu0 %v1132
        %1135 = vmatprep.subr.mxu0 0.0
        %1136 = vmatpush1.msra.mxu0 %v1131
        %1137 = vmatprep.subr.mxu0 0.0
        %1138 = vmatpush1.msra.mxu0 %v1130
        %1139 = vmatprep.subr.mxu0 0.0
        %1140 = vmatpush1.msra.mxu0 %v1129
        %1141 = vmatprep.subr.mxu0 0.0
        %1142 = vmatpush1.msra.mxu0 %v1128
        %1143 = vmatprep.subr.mxu0 0.0
        %1144 = vmatpush1.msra.mxu0 %v1127
        %1145 = vmatprep.subr.mxu0 0.0
        %1146 = vmatpush1.msra.mxu0 %v1126
        %1147 = vmatprep.subr.mxu0 0.0
        %1148 = vmatpush1.msra.mxu0 %v1125
        %1149 = vmatprep.subr.mxu0 0.0
        %1150 = vmatpush1.msra.mxu0 %v1124
        %1151 = vmatprep.subr.mxu0 0.0
        %1152 = vmatpush1.msra.mxu0 %v1123
        %1153 = vmatprep.subr.mxu0 0.0
        %1154 = vmatpush1.msra.mxu0 %v1122
        %1155 = vmatprep.subr.mxu0 0.0
        %1156 = vmatpush1.msra.mxu0 %v1121
        %1157 = vmatprep.subr.mxu0 0.0
        %1158 = vmatpush1.msra.mxu0 %v1120
        %1159 = vmatprep.subr.mxu0 0.0
        %1160 = vmatpush1.msra.mxu0 %v1119
        %1161 = vmatprep.subr.mxu0 0.0
        %1162 = vmatpush1.msra.mxu0 %v1118
        %1163 = vmatprep.subr.mxu0 0.0
        %1164 = vmatpush1.msra.mxu0 %v1117
        %1165 = vmatprep.subr.mxu0 0.0
        %1166 = vmatpush2.msra.mxu0 0.0
        %1167 = vmatprep.subr.mxu0 0.0
        %1168 = vmatpush2.msra.mxu0 0.0
        %1169 = vmatprep.subr.mxu0 0.0
        %1170 = vmatpush2.msra.mxu0 0.0
        %1171 = vmatprep.subr.mxu0 0.0
        %1172 = vmatpush2.msra.mxu0 0.0
        %1173 = vmatprep.subr.mxu0 0.0
        %1174 = vmatpush2.msra.mxu0 0.0
        %1175 = vmatprep.subr.mxu0 0.0
        %1176 = vmatpush2.msra.mxu0 0.0
        %1177 = vmatprep.subr.mxu0 0.0
        %1178 = vmatpush2.msra.mxu0 0.0
        %1179 = vmatprep.subr.mxu0 0.0
        %1180 = vmatpush2.msra.mxu0 0.0
        %1181 = vmatprep.subr.mxu0 0.0
        %1182 = vmatpush2.msra.mxu0 0.0
        %1183 = vmatprep.subr.mxu0 0.0
        %1184 = vmatpush2.msra.mxu0 0.0
        %1185 = vmatprep.subr.mxu0 0.0
        %1186 = vmatpush2.msra.mxu0 0.0
        %1187 = vmatprep.subr.mxu0 0.0
        %1188 = vmatpush2.msra.mxu0 0.0
        %1189 = vmatprep.subr.mxu0 0.0
        %1190 = vmatpush2.msra.mxu0 0.0
        %1191 = vmatprep.subr.mxu0 0.0
        %1192 = vmatpush2.msra.mxu0 0.0
        %1193 = vmatprep.subr.mxu0 0.0
        %1194 = vmatpush2.msra.mxu0 0.0
        %1195 = vmatprep.subr.mxu0 0.0
        %1196 = vmatpush2.msra.mxu0 0.0
        %1197 = vmatprep.mubr.f32.mxu0 0.0
        %1198 = vmatmul.mubr.f32.gmra.mxu0 %v720
        %v1199 = vpop.f32.mrf.mxu0
        %v1200 = vadd.f32 0.0, %v1199
        %v1201 = vpop.f32.mrf.mxu0
        %1202 = vdwg.mxu0
        %v1203 = vld [vmem:[#allocation10] sm:$0xff]
        %v1204 = vld [vmem:[#allocation10 + $0x8] sm:$0xff]
        %v1205 = vld [vmem:[#allocation10 + $0x10] sm:$0xff]
        %v1206 = vld [vmem:[#allocation10 + $0x18] sm:$0xff]
        %v1207 = vld [vmem:[#allocation10 + $0x20] sm:$0xff]
        %v1208 = vld [vmem:[#allocation10 + $0x28] sm:$0xff]
        %v1209 = vld [vmem:[#allocation10 + $0x30] sm:$0xff]
        %v1210 = vld [vmem:[#allocation10 + $0x38] sm:$0xff]
        %v1211 = vld [vmem:[#allocation10 + $0x40] sm:$0xff]
        %v1212 = vld [vmem:[#allocation10 + $0x48] sm:$0xff]
        %v1213 = vld [vmem:[#allocation10 + $0x50] sm:$0xff]
        %v1214 = vld [vmem:[#allocation10 + $0x58] sm:$0xff]
        %v1215 = vld [vmem:[#allocation10 + $0x60] sm:$0xff]
        %v1216 = vld [vmem:[#allocation10 + $0x68] sm:$0xff]
        %v1217 = vld [vmem:[#allocation10 + $0x70] sm:$0xff]
        %v1218 = vld [vmem:[#allocation10 + $0x78] sm:$0xff]
        %1219 = vmatprep.subr.mxu0 0.0
        %1220 = vmatpush1.msra.mxu0 %v1218
        %1221 = vmatprep.subr.mxu0 0.0
        %1222 = vmatpush1.msra.mxu0 %v1217
        %1223 = vmatprep.subr.mxu0 0.0
        %1224 = vmatpush1.msra.mxu0 %v1216
        %1225 = vmatprep.subr.mxu0 0.0
        %1226 = vmatpush1.msra.mxu0 %v1215
        %1227 = vmatprep.subr.mxu0 0.0
        %1228 = vmatpush1.msra.mxu0 %v1214
        %1229 = vmatprep.subr.mxu0 0.0
        %1230 = vmatpush1.msra.mxu0 %v1213
        %1231 = vmatprep.subr.mxu0 0.0
        %1232 = vmatpush1.msra.mxu0 %v1212
        %1233 = vmatprep.subr.mxu0 0.0
        %1234 = vmatpush1.msra.mxu0 %v1211
        %1235 = vmatprep.subr.mxu0 0.0
        %1236 = vmatpush1.msra.mxu0 %v1210
        %1237 = vmatprep.subr.mxu0 0.0
        %1238 = vmatpush1.msra.mxu0 %v1209
        %1239 = vmatprep.subr.mxu0 0.0
        %1240 = vmatpush1.msra.mxu0 %v1208
        %1241 = vmatprep.subr.mxu0 0.0
        %1242 = vmatpush1.msra.mxu0 %v1207
        %1243 = vmatprep.subr.mxu0 0.0
        %1244 = vmatpush1.msra.mxu0 %v1206
        %1245 = vmatprep.subr.mxu0 0.0
        %1246 = vmatpush1.msra.mxu0 %v1205
        %1247 = vmatprep.subr.mxu0 0.0
        %1248 = vmatpush1.msra.mxu0 %v1204
        %1249 = vmatprep.subr.mxu0 0.0
        %1250 = vmatpush1.msra.mxu0 %v1203
        %1251 = vmatprep.subr.mxu0 0.0
        %1252 = vmatpush2.msra.mxu0 0.0
        %1253 = vmatprep.subr.mxu0 0.0
        %1254 = vmatpush2.msra.mxu0 0.0
        %1255 = vmatprep.subr.mxu0 0.0
        %1256 = vmatpush2.msra.mxu0 0.0
        %1257 = vmatprep.subr.mxu0 0.0
        %1258 = vmatpush2.msra.mxu0 0.0
        %1259 = vmatprep.subr.mxu0 0.0
        %1260 = vmatpush2.msra.mxu0 0.0
        %1261 = vmatprep.subr.mxu0 0.0
        %1262 = vmatpush2.msra.mxu0 0.0
        %1263 = vmatprep.subr.mxu0 0.0
        %1264 = vmatpush2.msra.mxu0 0.0
        %1265 = vmatprep.subr.mxu0 0.0
        %1266 = vmatpush2.msra.mxu0 0.0
        %1267 = vmatprep.subr.mxu0 0.0
        %1268 = vmatpush2.msra.mxu0 0.0
        %1269 = vmatprep.subr.mxu0 0.0
        %1270 = vmatpush2.msra.mxu0 0.0
        %1271 = vmatprep.subr.mxu0 0.0
        %1272 = vmatpush2.msra.mxu0 0.0
        %1273 = vmatprep.subr.mxu0 0.0
        %1274 = vmatpush2.msra.mxu0 0.0
        %1275 = vmatprep.subr.mxu0 0.0
        %1276 = vmatpush2.msra.mxu0 0.0
        %1277 = vmatprep.subr.mxu0 0.0
        %1278 = vmatpush2.msra.mxu0 0.0
        %1279 = vmatprep.subr.mxu0 0.0
        %1280 = vmatpush2.msra.mxu0 0.0
        %1281 = vmatprep.subr.mxu0 0.0
        %1282 = vmatpush2.msra.mxu0 0.0
        %1283 = vmatprep.mubr.f32.mxu0 0.0
        %1284 = vmatmul.mubr.f32.gmra.mxu0 %v1116
        %v1285 = vpop.f32.mrf.mxu0
        %v1286 = vadd.f32 %v1200, %v1285
        %v1287 = vpop.f32.mrf.mxu0
        %1288 = vdwg.mxu0
        %v1289 = vld [vmem:[%s10] sm:$0x1]
        %v1291 = vlaneseq
        %v1292 = vshrl.u32 %v1291, 7
        %v1293 = vsub.s32 0, %v1292
        %v1294 = vrot.slane %v1289, %v1293
        %v1296 = vadd.f32 %v1286, %v1294
        %v1297 = vmax.f32 %v1296, 0.0
        %v1298 = vld [vmem:[#allocation11] sm:$0xff]
        %v1299 = vld [vmem:[#allocation11 + $0x8] sm:$0xff]
        %v1300 = vld [vmem:[#allocation11 + $0x10] sm:$0xff]
        %v1301 = vld [vmem:[#allocation11 + $0x18] sm:$0xff]
        %v1302 = vld [vmem:[#allocation11 + $0x20] sm:$0xff]
        %v1303 = vld [vmem:[#allocation11 + $0x28] sm:$0xff]
        %v1304 = vld [vmem:[#allocation11 + $0x30] sm:$0xff]
        %v1305 = vld [vmem:[#allocation11 + $0x38] sm:$0xff]
        %v1306 = vld [vmem:[#allocation11 + $0x40] sm:$0xff]
        %v1307 = vld [vmem:[#allocation11 + $0x48] sm:$0xff]
        %v1308 = vld [vmem:[#allocation11 + $0x50] sm:$0xff]
        %v1309 = vld [vmem:[#allocation11 + $0x58] sm:$0xff]
        %v1310 = vld [vmem:[#allocation11 + $0x60] sm:$0xff]
        %v1311 = vld [vmem:[#allocation11 + $0x68] sm:$0xff]
        %v1312 = vld [vmem:[#allocation11 + $0x70] sm:$0xff]
        %v1313 = vld [vmem:[#allocation11 + $0x78] sm:$0xff]
        %v1314 = vld [vmem:[%s12] sm:$0x1]
        %v1316 = vlaneseq
        %v1317 = vshrl.u32 %v1316, 7
        %v1318 = vsub.s32 0, %v1317
        %v1319 = vrot.slane %v1314, %v1318
        %1321 = vmatprep.subr.mxu0 0.0
        %1322 = vmatpush1.msra.mxu0 %v1313
        %1323 = vmatprep.subr.mxu0 0.0
        %1324 = vmatpush1.msra.mxu0 %v1312
        %1325 = vmatprep.subr.mxu0 0.0
        %1326 = vmatpush1.msra.mxu0 %v1311
        %1327 = vmatprep.subr.mxu0 0.0
        %1328 = vmatpush1.msra.mxu0 %v1310
        %1329 = vmatprep.subr.mxu0 0.0
        %1330 = vmatpush1.msra.mxu0 %v1309
        %1331 = vmatprep.subr.mxu0 0.0
        %1332 = vmatpush1.msra.mxu0 %v1308
        %1333 = vmatprep.subr.mxu0 0.0
        %1334 = vmatpush1.msra.mxu0 %v1307
        %1335 = vmatprep.subr.mxu0 0.0
        %1336 = vmatpush1.msra.mxu0 %v1306
        %1337 = vmatprep.subr.mxu0 0.0
        %1338 = vmatpush1.msra.mxu0 %v1305
        %1339 = vmatprep.subr.mxu0 0.0
        %1340 = vmatpush1.msra.mxu0 %v1304
        %1341 = vmatprep.subr.mxu0 0.0
        %1342 = vmatpush1.msra.mxu0 %v1303
        %1343 = vmatprep.subr.mxu0 0.0
        %1344 = vmatpush1.msra.mxu0 %v1302
        %1345 = vmatprep.subr.mxu0 0.0
        %1346 = vmatpush1.msra.mxu0 %v1301
        %1347 = vmatprep.subr.mxu0 0.0
        %1348 = vmatpush1.msra.mxu0 %v1300
        %1349 = vmatprep.subr.mxu0 0.0
        %1350 = vmatpush1.msra.mxu0 %v1299
        %1351 = vmatprep.subr.mxu0 0.0
        %1352 = vmatpush1.msra.mxu0 %v1298
        %1353 = vmatprep.subr.mxu0 0.0
        %1354 = vmatpush2.msra.mxu0 0.0
        %1355 = vmatprep.subr.mxu0 0.0
        %1356 = vmatpush2.msra.mxu0 0.0
        %1357 = vmatprep.subr.mxu0 0.0
        %1358 = vmatpush2.msra.mxu0 0.0
        %1359 = vmatprep.subr.mxu0 0.0
        %1360 = vmatpush2.msra.mxu0 0.0
        %1361 = vmatprep.subr.mxu0 0.0
        %1362 = vmatpush2.msra.mxu0 0.0
        %1363 = vmatprep.subr.mxu0 0.0
        %1364 = vmatpush2.msra.mxu0 0.0
        %1365 = vmatprep.subr.mxu0 0.0
        %1366 = vmatpush2.msra.mxu0 0.0
        %1367 = vmatprep.subr.mxu0 0.0
        %1368 = vmatpush2.msra.mxu0 0.0
        %1369 = vmatprep.subr.mxu0 0.0
        %1370 = vmatpush2.msra.mxu0 0.0
        %1371 = vmatprep.subr.mxu0 0.0
        %1372 = vmatpush2.msra.mxu0 0.0
        %1373 = vmatprep.subr.mxu0 0.0
        %1374 = vmatpush2.msra.mxu0 0.0
        %1375 = vmatprep.subr.mxu0 0.0
        %1376 = vmatpush2.msra.mxu0 0.0
        %1377 = vmatprep.subr.mxu0 0.0
        %1378 = vmatpush2.msra.mxu0 0.0
        %1379 = vmatprep.subr.mxu0 0.0
        %1380 = vmatpush2.msra.mxu0 0.0
        %1381 = vmatprep.subr.mxu0 0.0
        %1382 = vmatpush2.msra.mxu0 0.0
        %1383 = vmatprep.subr.mxu0 0.0
        %1384 = vmatpush2.msra.mxu0 0.0
        %1385 = vmatprep.mubr.f32.mxu0 0.0
        %1386 = vmatmul.mubr.f32.gmra.mxu0 %v1297
        %v1387 = vpop.f32.mrf.mxu0
        %v1388 = vadd.f32 %v1319, %v1387
        %v1389 = vpop.f32.mrf.mxu0
        %1390 = vdwg.mxu0
        %v1391 = vmax.f32 %v1388, 0.0
        %v1392 = vld [vmem:[#allocation13] sm:$0xff]
        %v1393 = vld [vmem:[#allocation13 + $0x8] sm:$0xff]
        %v1394 = vld [vmem:[#allocation13 + $0x10] sm:$0xff]
        %v1395 = vld [vmem:[#allocation13 + $0x18] sm:$0xff]
        %v1396 = vld [vmem:[#allocation13 + $0x20] sm:$0xff]
        %v1397 = vld [vmem:[#allocation13 + $0x28] sm:$0xff]
        %v1398 = vld [vmem:[#allocation13 + $0x30] sm:$0xff]
        %v1399 = vld [vmem:[#allocation13 + $0x38] sm:$0xff]
        %v1400 = vld [vmem:[#allocation13 + $0x40] sm:$0xff]
        %v1401 = vld [vmem:[#allocation13 + $0x48] sm:$0xff]
        %v1402 = vld [vmem:[#allocation13 + $0x50] sm:$0xff]
        %v1403 = vld [vmem:[#allocation13 + $0x58] sm:$0xff]
        %v1404 = vld [vmem:[#allocation13 + $0x60] sm:$0xff]
        %v1405 = vld [vmem:[#allocation13 + $0x68] sm:$0xff]
        %v1406 = vld [vmem:[#allocation13 + $0x70] sm:$0xff]
        %v1407 = vld [vmem:[#allocation13 + $0x78] sm:$0xff]
        %v1408 = vld [vmem:[%s14] sm:$0x1]
        %v1410 = vlaneseq
        %v1411 = vshrl.u32 %v1410, 7
        %v1412 = vsub.s32 0, %v1411
        %v1413 = vrot.slane %v1408, %v1412
        %1415 = vmatprep.subr.mxu0 0.0
        %1416 = vmatpush1.msra.mxu0 %v1407
        %1417 = vmatprep.subr.mxu0 0.0
        %1418 = vmatpush1.msra.mxu0 %v1406
        %1419 = vmatprep.subr.mxu0 0.0
        %1420 = vmatpush1.msra.mxu0 %v1405
        %1421 = vmatprep.subr.mxu0 0.0
        %1422 = vmatpush1.msra.mxu0 %v1404
        %1423 = vmatprep.subr.mxu0 0.0
        %1424 = vmatpush1.msra.mxu0 %v1403
        %1425 = vmatprep.subr.mxu0 0.0
        %1426 = vmatpush1.msra.mxu0 %v1402
        %1427 = vmatprep.subr.mxu0 0.0
        %1428 = vmatpush1.msra.mxu0 %v1401
        %1429 = vmatprep.subr.mxu0 0.0
        %1430 = vmatpush1.msra.mxu0 %v1400
        %1431 = vmatprep.subr.mxu0 0.0
        %1432 = vmatpush1.msra.mxu0 %v1399
        %1433 = vmatprep.subr.mxu0 0.0
        %1434 = vmatpush1.msra.mxu0 %v1398
        %1435 = vmatprep.subr.mxu0 0.0
        %1436 = vmatpush1.msra.mxu0 %v1397
        %1437 = vmatprep.subr.mxu0 0.0
        %1438 = vmatpush1.msra.mxu0 %v1396
        %1439 = vmatprep.subr.mxu0 0.0
        %1440 = vmatpush1.msra.mxu0 %v1395
        %1441 = vmatprep.subr.mxu0 0.0
        %1442 = vmatpush1.msra.mxu0 %v1394
        %1443 = vmatprep.subr.mxu0 0.0
        %1444 = vmatpush1.msra.mxu0 %v1393
        %1445 = vmatprep.subr.mxu0 0.0
        %1446 = vmatpush1.msra.mxu0 %v1392
        %1447 = vmatprep.subr.mxu0 0.0
        %1448 = vmatpush2.msra.mxu0 0.0
        %1449 = vmatprep.subr.mxu0 0.0
        %1450 = vmatpush2.msra.mxu0 0.0
        %1451 = vmatprep.subr.mxu0 0.0
        %1452 = vmatpush2.msra.mxu0 0.0
        %1453 = vmatprep.subr.mxu0 0.0
        %1454 = vmatpush2.msra.mxu0 0.0
        %1455 = vmatprep.subr.mxu0 0.0
        %1456 = vmatpush2.msra.mxu0 0.0
        %1457 = vmatprep.subr.mxu0 0.0
        %1458 = vmatpush2.msra.mxu0 0.0
        %1459 = vmatprep.subr.mxu0 0.0
        %1460 = vmatpush2.msra.mxu0 0.0
        %1461 = vmatprep.subr.mxu0 0.0
        %1462 = vmatpush2.msra.mxu0 0.0
        %1463 = vmatprep.subr.mxu0 0.0
        %1464 = vmatpush2.msra.mxu0 0.0
        %1465 = vmatprep.subr.mxu0 0.0
        %1466 = vmatpush2.msra.mxu0 0.0
        %1467 = vmatprep.subr.mxu0 0.0
        %1468 = vmatpush2.msra.mxu0 0.0
        %1469 = vmatprep.subr.mxu0 0.0
        %1470 = vmatpush2.msra.mxu0 0.0
        %1471 = vmatprep.subr.mxu0 0.0
        %1472 = vmatpush2.msra.mxu0 0.0
        %1473 = vmatprep.subr.mxu0 0.0
        %1474 = vmatpush2.msra.mxu0 0.0
        %1475 = vmatprep.subr.mxu0 0.0
        %1476 = vmatpush2.msra.mxu0 0.0
        %1477 = vmatprep.subr.mxu0 0.0
        %1478 = vmatpush2.msra.mxu0 0.0
        %1479 = vmatprep.mubr.f32.mxu0 0.0
        %1480 = vmatmul.mubr.f32.gmra.mxu0 %v1391
        %v1481 = vpop.f32.mrf.mxu0
        %v1482 = vadd.f32 %v1413, %v1481
        %v1483 = vpop.f32.mrf.mxu0
        %1484 = vdwg.mxu0
        %v1485 = vmax.f32 %v1482, -30.0
        %v1486 = vmin.f32 %v1485, 30.0
        %v1487 = vsub.f32 0.0, %v1486
        %v1488 = vmul.f32 %v1487, 1.442695
        %v1489 = vpow.pop %v1488
        %v1490 = vadd.f32 %v1489, 1.0
        %v1491 = vrcp.pop %v1490
        %1492 = vst [vmem:[%s695] sm:$0xff] %v1491
        %1493 = vst [vmem:[%s702] sm:$0xff] %v1107
        %1494 = vst [vmem:[%s702 + $0x8] sm:$0xff] %v1109
        %s1495 = sand.u32 %s401, 1
        %s1496 = scalar_lea.sflag [#allocation4], %s1495
        %s1497 = sand.u32 %s401, 1
        %s1498 = smul.addr %s1497, 8
        %s1499 = scalar_lea.vmem [#allocation16], %s1498
        %s1500 = sand.u32 %s427, 1
        %s1501 = scalar_lea.sflag [#allocation18], %s1500
        %s1502 = sand.u32 %s427, 1
        %s1503 = smul.addr %s1502, 16
        %s1504 = scalar_lea.vmem [#allocation17], %s1503
        // Predicated region
        $region117: #{tpu_custom_call.1} parent=83 // pred_check
          %p1505 = pneg %p411
        $region118: #{tpu_custom_call.1} parent=83 // pred_check_branch
          %1507 = sbr.rel (%p1505) target = $region120
        $region119: #{tpu_custom_call.1} parent=83 // pred_region
          %s1509 = ssub.s32 128, 128
          %1510 = vsyncadd %s1496, %s1509
          %s1511 = smul.addr %s42, 128
          %s1512 = scalar_lea.hbm %s16, %s1511
          %s1514 = sshll.u32 %s1499, 4
          %s1515 = int_to_ptr.vmem [resolvable:$true] %s1514
          %1517 = dma.vmem_to_hbm [thread:$0]  %s1515, 128, %s1512, %s1496
        $region120: #{tpu_custom_call.1} parent=83 // pred_fallthru
          _
        // Predicated region
        $region121: #{tpu_custom_call.1} parent=83 // pred_check
          %p1518 = pneg %p437
        $region122: #{tpu_custom_call.1} parent=83 // pred_check_branch
          %1520 = sbr.rel (%p1518) target = $region124
        $region123: #{tpu_custom_call.1} parent=83 // pred_region
          %s1522 = ssub.s32 256, 256
          %1523 = vsyncadd %s1501, %s1522
          %s1524 = smul.addr %s42, 2
          %s1525 = smul.addr %s1524, 128
          %s1526 = scalar_lea.hbm %s17, %s1525
          %s1528 = sshll.u32 %s1504, 4
          %s1529 = int_to_ptr.vmem [resolvable:$true] %s1528
          %1531 = dma.vmem_to_hbm [thread:$0]  %s1529, 256, %s1526, %s1501
        $region124: #{tpu_custom_call.1} parent=83 // pred_fallthru
          _
      $region84: #{tpu_custom_call.1} parent=5 // pred_fallthru
        _
      %p1532 = scmp.le.s32.totalorder 2, %s37
      // Predicated region
      $region125: #{tpu_custom_call.1} parent=5 // pred_check
        %p1533 = pneg %p1532
      $region126: #{tpu_custom_call.1} parent=5 // pred_check_branch
        %1535 = sbr.rel (%p1533) target = $region128
      $region127: #{tpu_custom_call.1} parent=5 // pred_region
        %s1536 = ssub.s32 %s37, 2
        // Predicated region
        $region129: #{tpu_custom_call.1} parent=127 // pred_check
          %p1537 = pneg %p417
        $region130: #{tpu_custom_call.1} parent=127 // pred_check_branch
          %1539 = sbr.rel (%p1537) target = $region132
        $region131: #{tpu_custom_call.1} parent=127 // pred_region
          %s1540 = sand.u32 %s402, 1
          %s1541 = scalar_lea.sflag [#allocation4], %s1540
          %s1542 = sand.u32 %s402, 1
          %s1543 = smul.addr %s1542, 8
          %s1544 = scalar_lea.vmem [#allocation16], %s1543
          %1545 = dma.done %s1541, 128
        $region132: #{tpu_custom_call.1} parent=127 // pred_fallthru
          _
        // Predicated region
        $region133: #{tpu_custom_call.1} parent=127 // pred_check
          %p1546 = pneg %p443
        $region134: #{tpu_custom_call.1} parent=127 // pred_check_branch
          %1548 = sbr.rel (%p1546) target = $region136
        $region135: #{tpu_custom_call.1} parent=127 // pred_region
          %s1549 = sand.u32 %s428, 1
          %s1550 = scalar_lea.sflag [#allocation18], %s1549
          %s1551 = sand.u32 %s428, 1
          %s1552 = smul.addr %s1551, 16
          %s1553 = scalar_lea.vmem [#allocation17], %s1552
          %1554 = dma.done %s1550, 256
        $region136: #{tpu_custom_call.1} parent=127 // pred_fallthru
          _
      $region128: #{tpu_custom_call.1} parent=5 // pred_fallthru
        _
    $region6: #{tpu_custom_call.1} parent=1 // loop_footer
      %s41 = sadd.s32 1, %s37
    $region7: #{tpu_custom_call.1} parent=1 // loop_footer_branch
      %36 = sbr.rel target = $region3
    $region8: #{tpu_custom_call.1} parent=1 // loop_exit
      _
    %1555 = vsyncpa [#allocation3], 1
    %s1556 = scalar_lea.sflag [#allocation3], 1
    %1557 = vsyncpa %s1556, 1
    %1558 = vsyncpa [#allocation6], 1
    %1559 = vsyncpa [#allocation9], 1
    %1560 = vsyncpa [#allocation12], 1
    %1561 = vsyncpa [#allocation15], 1
    %1562 = vsyncpa [#allocation4], 1
    %s1563 = scalar_lea.sflag [#allocation4], 1
    %1564 = vsyncpa %s1563, 1
    %1565 = vsyncpa [#allocation18], 1
    %s1566 = scalar_lea.sflag [#allocation18], 1
    %1567 = vsyncpa %s1566, 1

// kernel: tpu_custom_call.1
$region0: #{tpu_custom_call.1}
  #allocation0 [shape = 'u32[]', space=smem, size = 0x4, offset = 0x4, fixed_abs, tag = 'smem constant byte address 0x4 - core index']
  #allocation1 [shape = 'u32[144,128]{1,0:T(1,128)}', space=vmem, size = 0x12000, scoped, tag = 'internal scratch']
  %s0 = inlined_call_operand.vmem [shape: f32[16,128], index: 0, kind: input, shape index: {}]
  %s1 = inlined_call_operand.vmem [shape: s32[16,1], index: 1, kind: input, shape index: {}]
  %s2 = inlined_call_operand.hbm [shape: f32[16,128], index: 2, kind: input, shape index: {}]
  %s3 = inlined_call_operand.hbm [shape: f32[128,128], index: 3, kind: input, shape index: {}]
  %s4 = inlined_call_operand.vmem [shape: f32[1,128], index: 4, kind: input, shape index: {}]
  %s5 = inlined_call_operand.hbm [shape: f32[128,128], index: 5, kind: input, shape index: {}]
  %s6 = inlined_call_operand.vmem [shape: f32[1,128], index: 6, kind: input, shape index: {}]
  %s7 = inlined_call_operand.hbm [shape: f32[128,256], index: 7, kind: input, shape index: {}]
  %s8 = inlined_call_operand.vmem [shape: f32[1,256], index: 8, kind: input, shape index: {}]
  %s9 = inlined_call_operand.hbm [shape: f32[128,128], index: 9, kind: input, shape index: {}]
  %s10 = inlined_call_operand.vmem [shape: f32[1,128], index: 10, kind: input, shape index: {}]
  %s11 = inlined_call_operand.hbm [shape: f32[128,128], index: 11, kind: input, shape index: {}]
  %s12 = inlined_call_operand.vmem [shape: f32[1,128], index: 12, kind: input, shape index: {}]
  %s13 = inlined_call_operand.hbm [shape: f32[128,128], index: 13, kind: input, shape index: {}]
  %s14 = inlined_call_operand.vmem [shape: f32[1,128], index: 14, kind: input, shape index: {}]
  %s15 = inlined_call_operand.hbm [shape: f32[128,256], index: 15, kind: input, shape index: {}]
  %s16 = inlined_call_operand.hbm [shape: f32[16,128], index: 16, kind: output, shape index: {0}]
  %s17 = inlined_call_operand.hbm [shape: f32[16,256], index: 17, kind: output, shape index: {1}]
  %18 = xla_tuple %s16, %s17
  %s19 = sld [smem:[#allocation0]]
  $region137: #{tpu_custom_call.1} parent=0
    _
  %s21 = ssub.s32 1, %s19
  %s22 = scalar_select 0, %s21, %s19
  $region1: #{tpu_custom_call.1} parent=0
    #allocation2 [shape = 'u8[8192]{0}', space=vmem, size = 0x2000, scoped, tag = 'input window, operand 2']
    #allocation3 [shape = 's32[2]{0}', space=sflag, size = 0x8, scoped, tag = 'scoped memory for tpu_custom_call.1']
    #allocation4 [shape = 's32[2]{0}', space=sflag, size = 0x8, scoped, tag = 'scoped memory for tpu_custom_call.1']
    #allocation5 [shape = 'u8[65536]{0}', space=vmem, size = 0x10000, scoped, tag = 'input window, operand 3, single buffered']
    #allocation6 [shape = 's32[1]{0}', space=sflag, size = 0x4, scoped, tag = 'scoped memory for tpu_custom_call.1']
    #allocation7 [shape = 'u8[65536]{0}', space=vmem, size = 0x10000, scoped, tag = 'input window, operand 5, single buffered']
    #allocation8 [shape = 'u8[131072]{0}', space=vmem, size = 0x20000, scoped, tag = 'input window, operand 7, single buffered']
    #allocation9 [shape = 's32[1]{0}', space=sflag, size = 0x4, scoped, tag = 'scoped memory for tpu_custom_call.1']
    #allocation10 [shape = 'u8[65536]{0}', space=vmem, size = 0x10000, scoped, tag = 'input window, operand 9, single buffered']
    #allocation11 [shape = 'u8[65536]{0}', space=vmem, size = 0x10000, scoped, tag = 'input window, operand 11, single buffered']
    #allocation12 [shape = 's32[1]{0}', space=sflag, size = 0x4, scoped, tag = 'scoped memory for tpu_custom_call.1']
    #allocation13 [shape = 'u8[65536]{0}', space=vmem, size = 0x10000, scoped, tag = 'input window, operand 13, single buffered']
    #allocation14 [shape = 'u8[131072]{0}', space=vmem, size = 0x20000, scoped, tag = 'input window, operand 15, single buffered']
    #allocation15 [shape = 's32[1]{0}', space=sflag, size = 0x4, scoped, tag = 'scoped memory for tpu_custom_call.1']
    #allocation16 [shape = 'u8[8192]{0}', space=vmem, size = 0x2000, scoped, tag = 'output window, operand 0']
    #allocation17 [shape = 'u8[16384]{0}', space=vmem, size = 0x4000, scoped, tag = 'output window, operand 1']
    #allocation18 [shape = 's32[2]{0}', space=sflag, size = 0x8, scoped, tag = 'scoped memory for tpu_custom_call.1']
    %23 = vsyncpa [#allocation3], 0
    %s24 = scalar_lea.sflag [#allocation3], 1
    %25 = vsyncpa %s24, 0
    %26 = vsyncpa [#allocation6], 0
    %27 = vsyncpa [#allocation9], 0
    %28 = vsyncpa [#allocation12], 0
    %29 = vsyncpa [#allocation15], 0
    %30 = vsyncpa [#allocation4], 0
    %s31 = scalar_lea.sflag [#allocation4], 1
    %32 = vsyncpa %s31, 0
    %33 = vsyncpa [#allocation18], 0
    %s34 = scalar_lea.sflag [#allocation18], 1
    %35 = vsyncpa %s34, 0
    loop: start=0, step=1, limit=4
    $region2: #{tpu_custom_call.1} parent=1 // loop_pre_header
      _
    $region3: #{tpu_custom_call.1} parent=1 // loop_header
      %s37 = sphi 0, %s41
      %p38 = scmp.ge.s32.totalorder %s37, 4
      %s47 = sphi 0, %s49
      %s50 = sphi 0, %s47
      %s51 = sphi 0, %s50
      %s67 = sphi 0, %s51
      %s73 = sphi 0, %s75
      %s76 = sphi 0, %s73
      %s77 = sphi 0, %s76
      %s93 = sphi 0, %s77
      %s99 = sphi 0, %s101
      %s102 = sphi 0, %s99
      %s103 = sphi 0, %s102
      %s119 = sphi 0, %s103
      %s123 = sphi 0, %s123
      %s125 = sphi 0, %s123
      %s126 = sphi 0, %s125
      %s140 = sphi 0, %s126
      %s144 = sphi 0, %s144
      %s146 = sphi 0, %s144
      %s147 = sphi 0, %s146
      %s161 = sphi 0, %s147
      %s165 = sphi 0, %s165
      %s167 = sphi 0, %s165
      %s168 = sphi 0, %s167
      %s182 = sphi 0, %s168
      %s186 = sphi 0, %s186
      %s188 = sphi 0, %s186
      %s189 = sphi 0, %s188
      %s203 = sphi 0, %s189
      %s207 = sphi 0, %s207
      %s209 = sphi 0, %s207
      %s210 = sphi 0, %s209
      %s224 = sphi 0, %s210
      %s228 = sphi 0, %s228
      %s230 = sphi 0, %s228
      %s231 = sphi 0, %s230
      %s245 = sphi 0, %s231
      %s249 = sphi 0, %s249
      %s251 = sphi 0, %s249
      %s252 = sphi 0, %s251
      %s266 = sphi 0, %s252
      %s270 = sphi 0, %s270
      %s272 = sphi 0, %s270
      %s273 = sphi 0, %s272
      %s287 = sphi 0, %s273
      %s291 = sphi 0, %s291
      %s293 = sphi 0, %s291
      %s294 = sphi 0, %s293
      %s308 = sphi 0, %s294
      %s312 = sphi 0, %s312
      %s314 = sphi 0, %s312
      %s315 = sphi 0, %s314
      %s329 = sphi 0, %s315
      %s333 = sphi 0, %s333
      %s335 = sphi 0, %s333
      %s336 = sphi 0, %s335
      %s350 = sphi 0, %s336
      %s354 = sphi 0, %s354
      %s356 = sphi 0, %s354
      %s357 = sphi 0, %s356
      %s371 = sphi 0, %s357
      %s375 = sphi 0, %s375
      %s377 = sphi 0, %s375
      %s378 = sphi 0, %s377
      %s392 = sphi 0, %s378
      %s398 = sphi 0, %s400
      %s401 = sphi 0, %s398
      %s402 = sphi 0, %s401
      %s418 = sphi 0, %s402
      %s424 = sphi 0, %s426
      %s427 = sphi 0, %s424
      %s428 = sphi 0, %s427
      %s444 = sphi 0, %s428
    $region4: #{tpu_custom_call.1} parent=1 // loop_header_branch
      %40 = sbr.rel (%p38) target = $region8
    $region5: #{tpu_custom_call.1} parent=1 // loop_body
      %s42 = ssub.s32 %s37, 1
      %s43 = ssub.s32 %s37, 2
      %s44 = sadd.s32 %s37, 1
      %s45 = ssub.s32 %s37, %s44
      %p46 = scmp.eq.s32.totalorder %s45, 0
      %s48 = sadd.s32 %s47, 1
      %s49 = scalar_select %p46, %s47, %s48
      %p52 = pneg %p46
      %p53 = scmp.eq.s32.totalorder %s37, 1
      %p54 = por %p52, %p53
      %p55 = scmp.ne.s32.totalorder %s47, %s50
      %p56 = scmp.eq.s32.totalorder %s37, 0
      %p57 = por %p55, %p56
      %p58 = scmp.ne.s32.totalorder %s47, %s50
      %p59 = scmp.eq.s32.totalorder %s42, 1
      %p60 = por %p58, %p59
      %p61 = scmp.ne.s32.totalorder %s50, %s51
      %p62 = scmp.eq.s32.totalorder %s42, 0
      %p63 = por %p61, %p62
      %p64 = scmp.ne.s32.totalorder %s50, %s51
      %p65 = scmp.eq.s32.totalorder %s43, 1
      %p66 = por %p64, %p65
      %p68 = scmp.ne.s32.totalorder %s51, %s67
      %p69 = scmp.eq.s32.totalorder %s43, 0
      %p70 = por %p68, %p69
      %s71 = ssub.s32 %s37, %s44
      %p72 = scmp.eq.s32.totalorder %s71, 0
      %s74 = sadd.s32 %s73, 1
      %s75 = scalar_select %p72, %s73, %s74
      %p78 = pneg %p72
      %p79 = scmp.eq.s32.totalorder %s37, 1
      %p80 = por %p78, %p79
      %p81 = scmp.ne.s32.totalorder %s73, %s76
      %p82 = scmp.eq.s32.totalorder %s37, 0
      %p83 = por %p81, %p82
      %p84 = scmp.ne.s32.totalorder %s73, %s76
      %p85 = scmp.eq.s32.totalorder %s42, 1
      %p86 = por %p84, %p85
      %p87 = scmp.ne.s32.totalorder %s76, %s77
      %p88 = scmp.eq.s32.totalorder %s42, 0
      %p89 = por %p87, %p88
      %p90 = scmp.ne.s32.totalorder %s76, %s77
      %p91 = scmp.eq.s32.totalorder %s43, 1
      %p92 = por %p90, %p91
      %p94 = scmp.ne.s32.totalorder %s77, %s93
      %p95 = scmp.eq.s32.totalorder %s43, 0
      %p96 = por %p94, %p95
      %s97 = ssub.s32 %s37, %s44
      %p98 = scmp.eq.s32.totalorder %s97, 0
      %s100 = sadd.s32 %s99, 1
      %s101 = scalar_select %p98, %s99, %s100
      %p104 = pneg %p98
      %p105 = scmp.eq.s32.totalorder %s37, 1
      %p106 = por %p104, %p105
      %p107 = scmp.ne.s32.totalorder %s99, %s102
      %p108 = scmp.eq.s32.totalorder %s37, 0
      %p109 = por %p107, %p108
      %p110 = scmp.ne.s32.totalorder %s99, %s102
      %p111 = scmp.eq.s32.totalorder %s42, 1
      %p112 = por %p110, %p111
      %p113 = scmp.ne.s32.totalorder %s102, %s103
      %p114 = scmp.eq.s32.totalorder %s42, 0
      %p115 = por %p113, %p114
      %p116 = scmp.ne.s32.totalorder %s102, %s103
      %p117 = scmp.eq.s32.totalorder %s43, 1
      %p118 = por %p116, %p117
      %p120 = scmp.ne.s32.totalorder %s103, %s119
      %p121 = scmp.eq.s32.totalorder %s43, 0
      %p122 = por %p120, %p121
      %s124 = sadd.s32 %s123, 1
      %p127 = scmp.eq.s32.totalorder %s37, 1
      %p128 = scmp.ne.s32.totalorder %s123, %s125
      %p129 = scmp.eq.s32.totalorder %s37, 0
      %p130 = por %p128, %p129
      %p131 = scmp.ne.s32.totalorder %s123, %s125
      %p132 = scmp.eq.s32.totalorder %s42, 1
      %p133 = por %p131, %p132
      %p134 = scmp.ne.s32.totalorder %s125, %s126
      %p135 = scmp.eq.s32.totalorder %s42, 0
      %p136 = por %p134, %p135
      %p137 = scmp.ne.s32.totalorder %s125, %s126
      %p138 = scmp.eq.s32.totalorder %s43, 1
      %p139 = por %p137, %p138
      %p141 = scmp.ne.s32.totalorder %s126, %s140
      %p142 = scmp.eq.s32.totalorder %s43, 0
      %p143 = por %p141, %p142
      %s145 = sadd.s32 %s144, 1
      %p148 = scmp.eq.s32.totalorder %s37, 1
      %p149 = scmp.ne.s32.totalorder %s144, %s146
      %p150 = scmp.eq.s32.totalorder %s37, 0
      %p151 = por %p149, %p150
      %p152 = scmp.ne.s32.totalorder %s144, %s146
      %p153 = scmp.eq.s32.totalorder %s42, 1
      %p154 = por %p152, %p153
      %p155 = scmp.ne.s32.totalorder %s146, %s147
      %p156 = scmp.eq.s32.totalorder %s42, 0
      %p157 = por %p155, %p156
      %p158 = scmp.ne.s32.totalorder %s146, %s147
      %p159 = scmp.eq.s32.totalorder %s43, 1
      %p160 = por %p158, %p159
      %p162 = scmp.ne.s32.totalorder %s147, %s161
      %p163 = scmp.eq.s32.totalorder %s43, 0
      %p164 = por %p162, %p163
      %s166 = sadd.s32 %s165, 1
      %p169 = scmp.eq.s32.totalorder %s37, 1
      %p170 = scmp.ne.s32.totalorder %s165, %s167
      %p171 = scmp.eq.s32.totalorder %s37, 0
      %p172 = por %p170, %p171
      %p173 = scmp.ne.s32.totalorder %s165, %s167
      %p174 = scmp.eq.s32.totalorder %s42, 1
      %p175 = por %p173, %p174
      %p176 = scmp.ne.s32.totalorder %s167, %s168
      %p177 = scmp.eq.s32.totalorder %s42, 0
      %p178 = por %p176, %p177
      %p179 = scmp.ne.s32.totalorder %s167, %s168
      %p180 = scmp.eq.s32.totalorder %s43, 1
      %p181 = por %p179, %p180
      %p183 = scmp.ne.s32.totalorder %s168, %s182
      %p184 = scmp.eq.s32.totalorder %s43, 0
      %p185 = por %p183, %p184
      %s187 = sadd.s32 %s186, 1
      %p190 = scmp.eq.s32.totalorder %s37, 1
      %p191 = scmp.ne.s32.totalorder %s186, %s188
      %p192 = scmp.eq.s32.totalorder %s37, 0
      %p193 = por %p191, %p192
      %p194 = scmp.ne.s32.totalorder %s186, %s188
      %p195 = scmp.eq.s32.totalorder %s42, 1
      %p196 = por %p194, %p195
      %p197 = scmp.ne.s32.totalorder %s188, %s189
      %p198 = scmp.eq.s32.totalorder %s42, 0
      %p199 = por %p197, %p198
      %p200 = scmp.ne.s32.totalorder %s188, %s189
      %p201 = scmp.eq.s32.totalorder %s43, 1
      %p202 = por %p200, %p201
      %p204 = scmp.ne.s32.totalorder %s189, %s203
      %p205 = scmp.eq.s32.totalorder %s43, 0
      %p206 = por %p204, %p205
      %s208 = sadd.s32 %s207, 1
      %p211 = scmp.eq.s32.totalorder %s37, 1
      %p212 = scmp.ne.s32.totalorder %s207, %s209
      %p213 = scmp.eq.s32.totalorder %s37, 0
      %p214 = por %p212, %p213
      %p215 = scmp.ne.s32.totalorder %s207, %s209
      %p216 = scmp.eq.s32.totalorder %s42, 1
      %p217 = por %p215, %p216
      %p218 = scmp.ne.s32.totalorder %s209, %s210
      %p219 = scmp.eq.s32.totalorder %s42, 0
      %p220 = por %p218, %p219
      %p221 = scmp.ne.s32.totalorder %s209, %s210
      %p222 = scmp.eq.s32.totalorder %s43, 1
      %p223 = por %p221, %p222
      %p225 = scmp.ne.s32.totalorder %s210, %s224
      %p226 = scmp.eq.s32.totalorder %s43, 0
      %p227 = por %p225, %p226
      %s229 = sadd.s32 %s228, 1
      %p232 = scmp.eq.s32.totalorder %s37, 1
      %p233 = scmp.ne.s32.totalorder %s228, %s230
      %p234 = scmp.eq.s32.totalorder %s37, 0
      %p235 = por %p233, %p234
      %p236 = scmp.ne.s32.totalorder %s228, %s230
      %p237 = scmp.eq.s32.totalorder %s42, 1
      %p238 = por %p236, %p237
      %p239 = scmp.ne.s32.totalorder %s230, %s231
      %p240 = scmp.eq.s32.totalorder %s42, 0
      %p241 = por %p239, %p240
      %p242 = scmp.ne.s32.totalorder %s230, %s231
      %p243 = scmp.eq.s32.totalorder %s43, 1
      %p244 = por %p242, %p243
      %p246 = scmp.ne.s32.totalorder %s231, %s245
      %p247 = scmp.eq.s32.totalorder %s43, 0
      %p248 = por %p246, %p247
      %s250 = sadd.s32 %s249, 1
      %p253 = scmp.eq.s32.totalorder %s37, 1
      %p254 = scmp.ne.s32.totalorder %s249, %s251
      %p255 = scmp.eq.s32.totalorder %s37, 0
      %p256 = por %p254, %p255
      %p257 = scmp.ne.s32.totalorder %s249, %s251
      %p258 = scmp.eq.s32.totalorder %s42, 1
      %p259 = por %p257, %p258
      %p260 = scmp.ne.s32.totalorder %s251, %s252
      %p261 = scmp.eq.s32.totalorder %s42, 0
      %p262 = por %p260, %p261
      %p263 = scmp.ne.s32.totalorder %s251, %s252
      %p264 = scmp.eq.s32.totalorder %s43, 1
      %p265 = por %p263, %p264
      %p267 = scmp.ne.s32.totalorder %s252, %s266
      %p268 = scmp.eq.s32.totalorder %s43, 0
      %p269 = por %p267, %p268
      %s271 = sadd.s32 %s270, 1
      %p274 = scmp.eq.s32.totalorder %s37, 1
      %p275 = scmp.ne.s32.totalorder %s270, %s272
      %p276 = scmp.eq.s32.totalorder %s37, 0
      %p277 = por %p275, %p276
      %p278 = scmp.ne.s32.totalorder %s270, %s272
      %p279 = scmp.eq.s32.totalorder %s42, 1
      %p280 = por %p278, %p279
      %p281 = scmp.ne.s32.totalorder %s272, %s273
      %p282 = scmp.eq.s32.totalorder %s42, 0
      %p283 = por %p281, %p282
      %p284 = scmp.ne.s32.totalorder %s272, %s273
      %p285 = scmp.eq.s32.totalorder %s43, 1
      %p286 = por %p284, %p285
      %p288 = scmp.ne.s32.totalorder %s273, %s287
      %p289 = scmp.eq.s32.totalorder %s43, 0
      %p290 = por %p288, %p289
      %s292 = sadd.s32 %s291, 1
      %p295 = scmp.eq.s32.totalorder %s37, 1
      %p296 = scmp.ne.s32.totalorder %s291, %s293
      %p297 = scmp.eq.s32.totalorder %s37, 0
      %p298 = por %p296, %p297
      %p299 = scmp.ne.s32.totalorder %s291, %s293
      %p300 = scmp.eq.s32.totalorder %s42, 1
      %p301 = por %p299, %p300
      %p302 = scmp.ne.s32.totalorder %s293, %s294
      %p303 = scmp.eq.s32.totalorder %s42, 0
      %p304 = por %p302, %p303
      %p305 = scmp.ne.s32.totalorder %s293, %s294
      %p306 = scmp.eq.s32.totalorder %s43, 1
      %p307 = por %p305, %p306
      %p309 = scmp.ne.s32.totalorder %s294, %s308
      %p310 = scmp.eq.s32.totalorder %s43, 0
      %p311 = por %p309, %p310
      %s313 = sadd.s32 %s312, 1
      %p316 = scmp.eq.s32.totalorder %s37, 1
      %p317 = scmp.ne.s32.totalorder %s312, %s314
      %p318 = scmp.eq.s32.totalorder %s37, 0
      %p319 = por %p317, %p318
      %p320 = scmp.ne.s32.totalorder %s312, %s314
      %p321 = scmp.eq.s32.totalorder %s42, 1
      %p322 = por %p320, %p321
      %p323 = scmp.ne.s32.totalorder %s314, %s315
      %p324 = scmp.eq.s32.totalorder %s42, 0
      %p325 = por %p323, %p324
      %p326 = scmp.ne.s32.totalorder %s314, %s315
      %p327 = scmp.eq.s32.totalorder %s43, 1
      %p328 = por %p326, %p327
      %p330 = scmp.ne.s32.totalorder %s315, %s329
      %p331 = scmp.eq.s32.totalorder %s43, 0
      %p332 = por %p330, %p331
      %s334 = sadd.s32 %s333, 1
      %p337 = scmp.eq.s32.totalorder %s37, 1
      %p338 = scmp.ne.s32.totalorder %s333, %s335
      %p339 = scmp.eq.s32.totalorder %s37, 0
      %p340 = por %p338, %p339
      %p341 = scmp.ne.s32.totalorder %s333, %s335
      %p342 = scmp.eq.s32.totalorder %s42, 1
      %p343 = por %p341, %p342
      %p344 = scmp.ne.s32.totalorder %s335, %s336
      %p345 = scmp.eq.s32.totalorder %s42, 0
      %p346 = por %p344, %p345
      %p347 = scmp.ne.s32.totalorder %s335, %s336
      %p348 = scmp.eq.s32.totalorder %s43, 1
      %p349 = por %p347, %p348
      %p351 = scmp.ne.s32.totalorder %s336, %s350
      %p352 = scmp.eq.s32.totalorder %s43, 0
      %p353 = por %p351, %p352
      %s355 = sadd.s32 %s354, 1
      %p358 = scmp.eq.s32.totalorder %s37, 1
      %p359 = scmp.ne.s32.totalorder %s354, %s356
      %p360 = scmp.eq.s32.totalorder %s37, 0
      %p361 = por %p359, %p360
      %p362 = scmp.ne.s32.totalorder %s354, %s356
      %p363 = scmp.eq.s32.totalorder %s42, 1
      %p364 = por %p362, %p363
      %p365 = scmp.ne.s32.totalorder %s356, %s357
      %p366 = scmp.eq.s32.totalorder %s42, 0
      %p367 = por %p365, %p366
      %p368 = scmp.ne.s32.totalorder %s356, %s357
      %p369 = scmp.eq.s32.totalorder %s43, 1
      %p370 = por %p368, %p369
      %p372 = scmp.ne.s32.totalorder %s357, %s371
      %p373 = scmp.eq.s32.totalorder %s43, 0
      %p374 = por %p372, %p373
      %s376 = sadd.s32 %s375, 1
      %p379 = scmp.eq.s32.totalorder %s37, 1
      %p380 = scmp.ne.s32.totalorder %s375, %s377
      %p381 = scmp.eq.s32.totalorder %s37, 0
      %p382 = por %p380, %p381
      %p383 = scmp.ne.s32.totalorder %s375, %s377
      %p384 = scmp.eq.s32.totalorder %s42, 1
      %p385 = por %p383, %p384
      %p386 = scmp.ne.s32.totalorder %s377, %s378
      %p387 = scmp.eq.s32.totalorder %s42, 0
      %p388 = por %p386, %p387
      %p389 = scmp.ne.s32.totalorder %s377, %s378
      %p390 = scmp.eq.s32.totalorder %s43, 1
      %p391 = por %p389, %p390
      %p393 = scmp.ne.s32.totalorder %s378, %s392
      %p394 = scmp.eq.s32.totalorder %s43, 0
      %p395 = por %p393, %p394
      %s396 = ssub.s32 %s37, %s44
      %p397 = scmp.eq.s32.totalorder %s396, 0
      %s399 = sadd.s32 %s398, 1
      %s400 = scalar_select %p397, %s398, %s399
      %p403 = pneg %p397
      %p404 = scmp.eq.s32.totalorder %s37, 1
      %p405 = por %p403, %p404
      %p406 = scmp.ne.s32.totalorder %s398, %s401
      %p407 = scmp.eq.s32.totalorder %s37, 0
      %p408 = por %p406, %p407
      %p409 = scmp.ne.s32.totalorder %s398, %s401
      %p410 = scmp.eq.s32.totalorder %s42, 1
      %p411 = por %p409, %p410
      %p412 = scmp.ne.s32.totalorder %s401, %s402
      %p413 = scmp.eq.s32.totalorder %s42, 0
      %p414 = por %p412, %p413
      %p415 = scmp.ne.s32.totalorder %s401, %s402
      %p416 = scmp.eq.s32.totalorder %s43, 1
      %p417 = por %p415, %p416
      %p419 = scmp.ne.s32.totalorder %s402, %s418
      %p420 = scmp.eq.s32.totalorder %s43, 0
      %p421 = por %p419, %p420
      %s422 = ssub.s32 %s37, %s44
      %p423 = scmp.eq.s32.totalorder %s422, 0
      %s425 = sadd.s32 %s424, 1
      %s426 = scalar_select %p423, %s424, %s425
      %p429 = pneg %p423
      %p430 = scmp.eq.s32.totalorder %s37, 1
      %p431 = por %p429, %p430
      %p432 = scmp.ne.s32.totalorder %s424, %s427
      %p433 = scmp.eq.s32.totalorder %s37, 0
      %p434 = por %p432, %p433
      %p435 = scmp.ne.s32.totalorder %s424, %s427
      %p436 = scmp.eq.s32.totalorder %s42, 1
      %p437 = por %p435, %p436
      %p438 = scmp.ne.s32.totalorder %s427, %s428
      %p439 = scmp.eq.s32.totalorder %s42, 0
      %p440 = por %p438, %p439
      %p441 = scmp.ne.s32.totalorder %s427, %s428
      %p442 = scmp.eq.s32.totalorder %s43, 1
      %p443 = por %p441, %p442
      %p445 = scmp.ne.s32.totalorder %s428, %s444
      %p446 = scmp.eq.s32.totalorder %s43, 0
      %p447 = por %p445, %p446
      %p448 = scmp.le.s32.totalorder 1, %s37
      %p449 = scmp.lt.s32.totalorder %s37, 3
      %p450 = pnand %p448, %p449
      %p451 = pneg %p450
      // Predicated region
      $region9: #{tpu_custom_call.1} parent=5 // pred_check
        _
      $region10: #{tpu_custom_call.1} parent=5 // pred_check_branch
        %453 = sbr.rel (%p450) target = $region12
      $region11: #{tpu_custom_call.1} parent=5 // pred_region
        %s454 = ssub.s32 %s37, 1
        // Predicated region
        $region13: #{tpu_custom_call.1} parent=11 // pred_check
          %p455 = pneg %p136
        $region14: #{tpu_custom_call.1} parent=11 // pred_check_branch
          %457 = sbr.rel (%p455) target = $region16
        $region15: #{tpu_custom_call.1} parent=11 // pred_region
          %s459 = ssub.s32 2048, 2048
          %460 = vsyncadd [#allocation6], %s459
          %s461 = sshll.u32 [#allocation5], 4
          %s462 = int_to_ptr.vmem [resolvable:$true] %s461
          %467 = dma.hbm_to_vmem [thread:$0]  %s3, 2048, %s462, [#allocation6], 128, 128, 8
        $region16: #{tpu_custom_call.1} parent=11 // pred_fallthru
          _
        // Predicated region
        $region17: #{tpu_custom_call.1} parent=11 // pred_check
          %p468 = pneg %p157
        $region18: #{tpu_custom_call.1} parent=11 // pred_check_branch
          %470 = sbr.rel (%p468) target = $region20
        $region19: #{tpu_custom_call.1} parent=11 // pred_region
          _
        $region20: #{tpu_custom_call.1} parent=11 // pred_fallthru
          _
        // Predicated region
        $region21: #{tpu_custom_call.1} parent=11 // pred_check
          %p471 = pneg %p178
        $region22: #{tpu_custom_call.1} parent=11 // pred_check_branch
          %473 = sbr.rel (%p471) target = $region24
        $region23: #{tpu_custom_call.1} parent=11 // pred_region
          %s475 = ssub.s32 2048, 2048
          %476 = vsyncadd [#allocation6], %s475
          %s477 = sshll.u32 [#allocation7], 4
          %s478 = int_to_ptr.vmem [resolvable:$true] %s477
          %483 = dma.hbm_to_vmem [thread:$0]  %s5, 2048, %s478, [#allocation6], 128, 128, 8
        $region24: #{tpu_custom_call.1} parent=11 // pred_fallthru
          _
        // Predicated region
        $region25: #{tpu_custom_call.1} parent=11 // pred_check
          %p484 = pneg %p199
        $region26: #{tpu_custom_call.1} parent=11 // pred_check_branch
          %486 = sbr.rel (%p484) target = $region28
        $region27: #{tpu_custom_call.1} parent=11 // pred_region
          _
        $region28: #{tpu_custom_call.1} parent=11 // pred_fallthru
          _
        // Predicated region
        $region29: #{tpu_custom_call.1} parent=11 // pred_check
          %p487 = pneg %p220
        $region30: #{tpu_custom_call.1} parent=11 // pred_check_branch
          %489 = sbr.rel (%p487) target = $region32
        $region31: #{tpu_custom_call.1} parent=11 // pred_region
          %s491 = ssub.s32 4096, 4096
          %492 = vsyncadd [#allocation9], %s491
          %s493 = sshll.u32 [#allocation8], 4
          %s494 = int_to_ptr.vmem [resolvable:$true] %s493
          %499 = dma.hbm_to_vmem [thread:$0]  %s7, 4096, %s494, [#allocation9], 256, 256, 16
        $region32: #{tpu_custom_call.1} parent=11 // pred_fallthru
          _
        // Predicated region
        $region33: #{tpu_custom_call.1} parent=11 // pred_check
          %p500 = pneg %p241
        $region34: #{tpu_custom_call.1} parent=11 // pred_check_branch
          %502 = sbr.rel (%p500) target = $region36
        $region35: #{tpu_custom_call.1} parent=11 // pred_region
          _
        $region36: #{tpu_custom_call.1} parent=11 // pred_fallthru
          _
        // Predicated region
        $region37: #{tpu_custom_call.1} parent=11 // pred_check
          %p503 = pneg %p262
        $region38: #{tpu_custom_call.1} parent=11 // pred_check_branch
          %505 = sbr.rel (%p503) target = $region40
        $region39: #{tpu_custom_call.1} parent=11 // pred_region
          %s507 = ssub.s32 2048, 2048
          %508 = vsyncadd [#allocation9], %s507
          %s509 = sshll.u32 [#allocation10], 4
          %s510 = int_to_ptr.vmem [resolvable:$true] %s509
          %515 = dma.hbm_to_vmem [thread:$0]  %s9, 2048, %s510, [#allocation9], 128, 128, 8
        $region40: #{tpu_custom_call.1} parent=11 // pred_fallthru
          _
        // Predicated region
        $region41: #{tpu_custom_call.1} parent=11 // pred_check
          %p516 = pneg %p283
        $region42: #{tpu_custom_call.1} parent=11 // pred_check_branch
          %518 = sbr.rel (%p516) target = $region44
        $region43: #{tpu_custom_call.1} parent=11 // pred_region
          _
        $region44: #{tpu_custom_call.1} parent=11 // pred_fallthru
          _
        // Predicated region
        $region45: #{tpu_custom_call.1} parent=11 // pred_check
          %p519 = pneg %p304
        $region46: #{tpu_custom_call.1} parent=11 // pred_check_branch
          %521 = sbr.rel (%p519) target = $region48
        $region47: #{tpu_custom_call.1} parent=11 // pred_region
          %s523 = ssub.s32 2048, 2048
          %524 = vsyncadd [#allocation12], %s523
          %s525 = sshll.u32 [#allocation11], 4
          %s526 = int_to_ptr.vmem [resolvable:$true] %s525
          %531 = dma.hbm_to_vmem [thread:$0]  %s11, 2048, %s526, [#allocation12], 128, 128, 8
        $region48: #{tpu_custom_call.1} parent=11 // pred_fallthru
          _
        // Predicated region
        $region49: #{tpu_custom_call.1} parent=11 // pred_check
          %p532 = pneg %p325
        $region50: #{tpu_custom_call.1} parent=11 // pred_check_branch
          %534 = sbr.rel (%p532) target = $region52
        $region51: #{tpu_custom_call.1} parent=11 // pred_region
          _
        $region52: #{tpu_custom_call.1} parent=11 // pred_fallthru
          _
        // Predicated region
        $region53: #{tpu_custom_call.1} parent=11 // pred_check
          %p535 = pneg %p346
        $region54: #{tpu_custom_call.1} parent=11 // pred_check_branch
          %537 = sbr.rel (%p535) target = $region56
        $region55: #{tpu_custom_call.1} parent=11 // pred_region
          %s539 = ssub.s32 2048, 2048
          %540 = vsyncadd [#allocation12], %s539
          %s541 = sshll.u32 [#allocation13], 4
          %s542 = int_to_ptr.vmem [resolvable:$true] %s541
          %547 = dma.hbm_to_vmem [thread:$0]  %s13, 2048, %s542, [#allocation12], 128, 128, 8
        $region56: #{tpu_custom_call.1} parent=11 // pred_fallthru
          _
        // Predicated region
        $region57: #{tpu_custom_call.1} parent=11 // pred_check
          %p548 = pneg %p367
        $region58: #{tpu_custom_call.1} parent=11 // pred_check_branch
          %550 = sbr.rel (%p548) target = $region60
        $region59: #{tpu_custom_call.1} parent=11 // pred_region
          _
        $region60: #{tpu_custom_call.1} parent=11 // pred_fallthru
          _
        // Predicated region
        $region61: #{tpu_custom_call.1} parent=11 // pred_check
          %p551 = pneg %p388
        $region62: #{tpu_custom_call.1} parent=11 // pred_check_branch
          %553 = sbr.rel (%p551) target = $region64
        $region63: #{tpu_custom_call.1} parent=11 // pred_region
          %s555 = ssub.s32 4096, 4096
          %556 = vsyncadd [#allocation15], %s555
          %s557 = sshll.u32 [#allocation14], 4
          %s558 = int_to_ptr.vmem [resolvable:$true] %s557
          %563 = dma.hbm_to_vmem [thread:$0]  %s15, 4096, %s558, [#allocation15], 256, 256, 16
        $region64: #{tpu_custom_call.1} parent=11 // pred_fallthru
          _
      $region12: #{tpu_custom_call.1} parent=5 // pred_fallthru
        _
      %p564 = scmp.lt.s32.totalorder %s37, 2
      // Predicated region
      $region65: #{tpu_custom_call.1} parent=5 // pred_check
        %p565 = pneg %p564
      $region66: #{tpu_custom_call.1} parent=5 // pred_check_branch
        %567 = sbr.rel (%p565) target = $region68
      $region67: #{tpu_custom_call.1} parent=5 // pred_region
        // Predicated region
        $region69: #{tpu_custom_call.1} parent=67 // pred_check
          %p568 = pneg %p57
        $region70: #{tpu_custom_call.1} parent=67 // pred_check_branch
          %570 = sbr.rel (%p568) target = $region72
        $region71: #{tpu_custom_call.1} parent=67 // pred_region
          %p571 = scmp.lt.s32.totalorder %s37, 1
          %s572 = scalar_select %p571, %s37, 1
          %s573 = smul.addr %s572, 8
          %s574 = scalar_lea.vmem %s0, %s573
        $region72: #{tpu_custom_call.1} parent=67 // pred_fallthru
          _
        // Predicated region
        $region73: #{tpu_custom_call.1} parent=67 // pred_check
          %p575 = pneg %p83
        $region74: #{tpu_custom_call.1} parent=67 // pred_check_branch
          %577 = sbr.rel (%p575) target = $region76
        $region75: #{tpu_custom_call.1} parent=67 // pred_region
          %p578 = scmp.lt.s32.totalorder %s37, 1
          %s579 = scalar_select %p578, %s37, 1
          %s580 = smul.addr %s579, 8
          %s581 = scalar_lea.vmem %s1, %s580
        $region76: #{tpu_custom_call.1} parent=67 // pred_fallthru
          _
        // Predicated region
        $region77: #{tpu_custom_call.1} parent=67 // pred_check
          %p582 = pneg %p109
        $region78: #{tpu_custom_call.1} parent=67 // pred_check_branch
          %584 = sbr.rel (%p582) target = $region80
        $region79: #{tpu_custom_call.1} parent=67 // pred_region
          %s585 = sand.u32 %s99, 1
          %s586 = scalar_lea.sflag [#allocation3], %s585
          %s587 = sand.u32 %s99, 1
          %s588 = smul.addr %s587, 8
          %s589 = scalar_lea.vmem [#allocation2], %s588
          %s591 = ssub.s32 128, 128
          %592 = vsyncadd %s586, %s591
          %s593 = smul.addr %s37, 128
          %s594 = scalar_lea.hbm %s2, %s593
          %s596 = sshll.u32 %s589, 4
          %s597 = int_to_ptr.vmem [resolvable:$true] %s596
          %599 = dma.hbm_to_vmem [thread:$0]  %s594, 128, %s597, %s586
        $region80: #{tpu_custom_call.1} parent=67 // pred_fallthru
          _
      $region68: #{tpu_custom_call.1} parent=5 // pred_fallthru
        _
      %p600 = scmp.le.s32.totalorder 1, %s37
      %p601 = scmp.lt.s32.totalorder %s37, 3
      %p602 = pnand %p600, %p601
      %p603 = pneg %p602
      // Predicated region
      $region81: #{tpu_custom_call.1} parent=5 // pred_check
        _
      $region82: #{tpu_custom_call.1} parent=5 // pred_check_branch
        %605 = sbr.rel (%p602) target = $region84
      $region83: #{tpu_custom_call.1} parent=5 // pred_region
        %s606 = ssub.s32 %s37, 1
        %s607 = sand.u32 %s102, 1
        %s608 = scalar_lea.sflag [#allocation3], %s607
        %s609 = sand.u32 %s102, 1
        %s610 = smul.addr %s609, 8
        %s611 = scalar_lea.vmem [#allocation2], %s610
        // Predicated region
        $region85: #{tpu_custom_call.1} parent=83 // pred_check
          %p612 = pneg %p115
        $region86: #{tpu_custom_call.1} parent=83 // pred_check_branch
          %614 = sbr.rel (%p612) target = $region88
        $region87: #{tpu_custom_call.1} parent=83 // pred_region
          %615 = dma.done %s608, 128
        $region88: #{tpu_custom_call.1} parent=83 // pred_fallthru
          _
        // Predicated region
        $region89: #{tpu_custom_call.1} parent=83 // pred_check
          %p616 = pneg %p136
        $region90: #{tpu_custom_call.1} parent=83 // pred_check_branch
          %618 = sbr.rel (%p616) target = $region92
        $region91: #{tpu_custom_call.1} parent=83 // pred_region
          %619 = dma.done [#allocation6], 2048
        $region92: #{tpu_custom_call.1} parent=83 // pred_fallthru
          _
        // Predicated region
        $region93: #{tpu_custom_call.1} parent=83 // pred_check
          %p620 = pneg %p178
        $region94: #{tpu_custom_call.1} parent=83 // pred_check_branch
          %622 = sbr.rel (%p620) target = $region96
        $region95: #{tpu_custom_call.1} parent=83 // pred_region
          %623 = dma.done [#allocation6], 2048
        $region96: #{tpu_custom_call.1} parent=83 // pred_fallthru
          _
        // Predicated region
        $region97: #{tpu_custom_call.1} parent=83 // pred_check
          %p624 = pneg %p220
        $region98: #{tpu_custom_call.1} parent=83 // pred_check_branch
          %626 = sbr.rel (%p624) target = $region100
        $region99: #{tpu_custom_call.1} parent=83 // pred_region
          %627 = dma.done [#allocation9], 4096
        $region100: #{tpu_custom_call.1} parent=83 // pred_fallthru
          _
        // Predicated region
        $region101: #{tpu_custom_call.1} parent=83 // pred_check
          %p628 = pneg %p262
        $region102: #{tpu_custom_call.1} parent=83 // pred_check_branch
          %630 = sbr.rel (%p628) target = $region104
        $region103: #{tpu_custom_call.1} parent=83 // pred_region
          %631 = dma.done [#allocation9], 2048
        $region104: #{tpu_custom_call.1} parent=83 // pred_fallthru
          _
        // Predicated region
        $region105: #{tpu_custom_call.1} parent=83 // pred_check
          %p632 = pneg %p304
        $region106: #{tpu_custom_call.1} parent=83 // pred_check_branch
          %634 = sbr.rel (%p632) target = $region108
        $region107: #{tpu_custom_call.1} parent=83 // pred_region
          %635 = dma.done [#allocation12], 2048
        $region108: #{tpu_custom_call.1} parent=83 // pred_fallthru
          _
        // Predicated region
        $region109: #{tpu_custom_call.1} parent=83 // pred_check
          %p636 = pneg %p346
        $region110: #{tpu_custom_call.1} parent=83 // pred_check_branch
          %638 = sbr.rel (%p636) target = $region112
        $region111: #{tpu_custom_call.1} parent=83 // pred_region
          %639 = dma.done [#allocation12], 2048
        $region112: #{tpu_custom_call.1} parent=83 // pred_fallthru
          _
        // Predicated region
        $region113: #{tpu_custom_call.1} parent=83 // pred_check
          %p640 = pneg %p388
        $region114: #{tpu_custom_call.1} parent=83 // pred_check_branch
          %642 = sbr.rel (%p640) target = $region116
        $region115: #{tpu_custom_call.1} parent=83 // pred_region
          %643 = dma.done [#allocation15], 4096
        $region116: #{tpu_custom_call.1} parent=83 // pred_fallthru
          _
        %p644 = scmp.lt.s32.totalorder %s42, 1
        %s645 = scalar_select %p644, %s42, 1
        %s646 = smul.addr %s645, 8
        %s647 = scalar_lea.vmem %s0, %s646
        %p648 = pneg %p63
        %p649 = pneg %p60
        %p650 = scmp.lt.s32.totalorder %s42, 1
        %s651 = scalar_select %p650, %s42, 1
        %s652 = smul.addr %s651, 8
        %s653 = scalar_lea.vmem %s1, %s652
        %p654 = pneg %p89
        %p655 = pneg %p86
        %s656 = sand.u32 %s102, 1
        %s657 = scalar_lea.sflag [#allocation3], %s656
        %s658 = sand.u32 %s102, 1
        %s659 = smul.addr %s658, 8
        %s660 = scalar_lea.vmem [#allocation2], %s659
        %p661 = pneg %p115
        %p662 = pneg %p112
        %p663 = pneg %p136
        %p664 = pneg %p133
        %p665 = pneg %p157
        %p666 = pneg %p154
        %p667 = pneg %p178
        %p668 = pneg %p175
        %p669 = pneg %p199
        %p670 = pneg %p196
        %p671 = pneg %p220
        %p672 = pneg %p217
        %p673 = pneg %p241
        %p674 = pneg %p238
        %p675 = pneg %p262
        %p676 = pneg %p259
        %p677 = pneg %p283
        %p678 = pneg %p280
        %p679 = pneg %p304
        %p680 = pneg %p301
        %p681 = pneg %p325
        %p682 = pneg %p322
        %p683 = pneg %p346
        %p684 = pneg %p343
        %p685 = pneg %p367
        %p686 = pneg %p364
        %p687 = pneg %p388
        %p688 = pneg %p385
        %p689 = pneg %p414
        %p690 = pneg %p411
        %s691 = sand.u32 %s401, 1
        %s692 = scalar_lea.sflag [#allocation4], %s691
        %s693 = sand.u32 %s401, 1
        %s694 = smul.addr %s693, 8
        %s695 = scalar_lea.vmem [#allocation16], %s694
        %p696 = pneg %p440
        %p697 = pneg %p437
        %s698 = sand.u32 %s427, 1
        %s699 = scalar_lea.sflag [#allocation18], %s698
        %s700 = sand.u32 %s427, 1
        %s701 = smul.addr %s700, 16
        %s702 = scalar_lea.vmem [#allocation17], %s701
        %p703 = scmp.lt.s32.totalorder %s42, 1
        %s704 = scalar_select %p703, %s42, 1
        %s705 = smul.addr %s704, 8
        %s706 = scalar_lea.vmem %s0, %s705
        %p707 = scmp.lt.s32.totalorder %s42, 1
        %s708 = scalar_select %p707, %s42, 1
        %s709 = smul.addr %s708, 8
        %s710 = scalar_lea.vmem %s1, %s709
        %v711 = vld [vmem:[%s706] sm:$0xff]
        %v712 = vld [vmem:[%s710] sm:$0xff]
        %v713 = vlaneseq
        %v714 = vand.u32 %v713, 127
        %715 = vset.pattern.permute.xlu0 0
        %716 = vperm.xlu0 %715, %v712
        %v717 = vpop.permute.xlu0 %716
        %vm718 = vcmp.eq.s32.totalorder %v717, %v714
        %v719 = vsel %vm718, 1, 0
        %v720 = vcvt.s32.f32 %v719
        %v721 = vld [vmem:[#allocation14] sm:$0xff]
        %v722 = vld [vmem:[#allocation14 + $0x10] sm:$0xff]
        %v723 = vld [vmem:[#allocation14 + $0x20] sm:$0xff]
        %v724 = vld [vmem:[#allocation14 + $0x30] sm:$0xff]
        %v725 = vld [vmem:[#allocation14 + $0x40] sm:$0xff]
        %v726 = vld [vmem:[#allocation14 + $0x50] sm:$0xff]
        %v727 = vld [vmem:[#allocation14 + $0x60] sm:$0xff]
        %v728 = vld [vmem:[#allocation14 + $0x70] sm:$0xff]
        %v729 = vld [vmem:[#allocation14 + $0x80] sm:$0xff]
        %v730 = vld [vmem:[#allocation14 + $0x90] sm:$0xff]
        %v731 = vld [vmem:[#allocation14 + $0xa0] sm:$0xff]
        %v732 = vld [vmem:[#allocation14 + $0xb0] sm:$0xff]
        %v733 = vld [vmem:[#allocation14 + $0xc0] sm:$0xff]
        %v734 = vld [vmem:[#allocation14 + $0xd0] sm:$0xff]
        %v735 = vld [vmem:[#allocation14 + $0xe0] sm:$0xff]
        %v736 = vld [vmem:[#allocation14 + $0xf0] sm:$0xff]
        %737 = vmatprep.subr.mxu0 0.0
        %738 = vmatpush1.msra.mxu0 %v736
        %739 = vmatprep.subr.mxu0 0.0
        %740 = vmatpush1.msra.mxu0 %v735
        %741 = vmatprep.subr.mxu0 0.0
        %742 = vmatpush1.msra.mxu0 %v734
        %743 = vmatprep.subr.mxu0 0.0
        %744 = vmatpush1.msra.mxu0 %v733
        %745 = vmatprep.subr.mxu0 0.0
        %746 = vmatpush1.msra.mxu0 %v732
        %747 = vmatprep.subr.mxu0 0.0
        %748 = vmatpush1.msra.mxu0 %v731
        %749 = vmatprep.subr.mxu0 0.0
        %750 = vmatpush1.msra.mxu0 %v730
        %751 = vmatprep.subr.mxu0 0.0
        %752 = vmatpush1.msra.mxu0 %v729
        %753 = vmatprep.subr.mxu0 0.0
        %754 = vmatpush1.msra.mxu0 %v728
        %755 = vmatprep.subr.mxu0 0.0
        %756 = vmatpush1.msra.mxu0 %v727
        %757 = vmatprep.subr.mxu0 0.0
        %758 = vmatpush1.msra.mxu0 %v726
        %759 = vmatprep.subr.mxu0 0.0
        %760 = vmatpush1.msra.mxu0 %v725
        %761 = vmatprep.subr.mxu0 0.0
        %762 = vmatpush1.msra.mxu0 %v724
        %763 = vmatprep.subr.mxu0 0.0
        %764 = vmatpush1.msra.mxu0 %v723
        %765 = vmatprep.subr.mxu0 0.0
        %766 = vmatpush1.msra.mxu0 %v722
        %767 = vmatprep.subr.mxu0 0.0
        %768 = vmatpush1.msra.mxu0 %v721
        %769 = vmatprep.subr.mxu0 0.0
        %770 = vmatpush2.msra.mxu0 0.0
        %771 = vmatprep.subr.mxu0 0.0
        %772 = vmatpush2.msra.mxu0 0.0
        %773 = vmatprep.subr.mxu0 0.0
        %774 = vmatpush2.msra.mxu0 0.0
        %775 = vmatprep.subr.mxu0 0.0
        %776 = vmatpush2.msra.mxu0 0.0
        %777 = vmatprep.subr.mxu0 0.0
        %778 = vmatpush2.msra.mxu0 0.0
        %779 = vmatprep.subr.mxu0 0.0
        %780 = vmatpush2.msra.mxu0 0.0
        %781 = vmatprep.subr.mxu0 0.0
        %782 = vmatpush2.msra.mxu0 0.0
        %783 = vmatprep.subr.mxu0 0.0
        %784 = vmatpush2.msra.mxu0 0.0
        %785 = vmatprep.subr.mxu0 0.0
        %786 = vmatpush2.msra.mxu0 0.0
        %787 = vmatprep.subr.mxu0 0.0
        %788 = vmatpush2.msra.mxu0 0.0
        %789 = vmatprep.subr.mxu0 0.0
        %790 = vmatpush2.msra.mxu0 0.0
        %791 = vmatprep.subr.mxu0 0.0
        %792 = vmatpush2.msra.mxu0 0.0
        %793 = vmatprep.subr.mxu0 0.0
        %794 = vmatpush2.msra.mxu0 0.0
        %795 = vmatprep.subr.mxu0 0.0
        %796 = vmatpush2.msra.mxu0 0.0
        %797 = vmatprep.subr.mxu0 0.0
        %798 = vmatpush2.msra.mxu0 0.0
        %799 = vmatprep.subr.mxu0 0.0
        %800 = vmatpush2.msra.mxu0 0.0
        %801 = vmatprep.mubr.f32.mxu0 0.0
        %802 = vmatmul.mubr.f32.gmra.mxu0 %v720
        %v803 = vpop.f32.mrf.mxu0
        %v804 = vadd.f32 0.0, %v803
        %v805 = vpop.f32.mrf.mxu0
        %806 = vdwg.mxu0
        %v807 = vld [vmem:[#allocation5] sm:$0xff]
        %v808 = vld [vmem:[#allocation5 + $0x8] sm:$0xff]
        %v809 = vld [vmem:[#allocation5 + $0x10] sm:$0xff]
        %v810 = vld [vmem:[#allocation5 + $0x18] sm:$0xff]
        %v811 = vld [vmem:[#allocation5 + $0x20] sm:$0xff]
        %v812 = vld [vmem:[#allocation5 + $0x28] sm:$0xff]
        %v813 = vld [vmem:[#allocation5 + $0x30] sm:$0xff]
        %v814 = vld [vmem:[#allocation5 + $0x38] sm:$0xff]
        %v815 = vld [vmem:[#allocation5 + $0x40] sm:$0xff]
        %v816 = vld [vmem:[#allocation5 + $0x48] sm:$0xff]
        %v817 = vld [vmem:[#allocation5 + $0x50] sm:$0xff]
        %v818 = vld [vmem:[#allocation5 + $0x58] sm:$0xff]
        %v819 = vld [vmem:[#allocation5 + $0x60] sm:$0xff]
        %v820 = vld [vmem:[#allocation5 + $0x68] sm:$0xff]
        %v821 = vld [vmem:[#allocation5 + $0x70] sm:$0xff]
        %v822 = vld [vmem:[#allocation5 + $0x78] sm:$0xff]
        %823 = vmatprep.subr.mxu0 0.0
        %824 = vmatpush1.msra.mxu0 %v822
        %825 = vmatprep.subr.mxu0 0.0
        %826 = vmatpush1.msra.mxu0 %v821
        %827 = vmatprep.subr.mxu0 0.0
        %828 = vmatpush1.msra.mxu0 %v820
        %829 = vmatprep.subr.mxu0 0.0
        %830 = vmatpush1.msra.mxu0 %v819
        %831 = vmatprep.subr.mxu0 0.0
        %832 = vmatpush1.msra.mxu0 %v818
        %833 = vmatprep.subr.mxu0 0.0
        %834 = vmatpush1.msra.mxu0 %v817
        %835 = vmatprep.subr.mxu0 0.0
        %836 = vmatpush1.msra.mxu0 %v816
        %837 = vmatprep.subr.mxu0 0.0
        %838 = vmatpush1.msra.mxu0 %v815
        %839 = vmatprep.subr.mxu0 0.0
        %840 = vmatpush1.msra.mxu0 %v814
        %841 = vmatprep.subr.mxu0 0.0
        %842 = vmatpush1.msra.mxu0 %v813
        %843 = vmatprep.subr.mxu0 0.0
        %844 = vmatpush1.msra.mxu0 %v812
        %845 = vmatprep.subr.mxu0 0.0
        %846 = vmatpush1.msra.mxu0 %v811
        %847 = vmatprep.subr.mxu0 0.0
        %848 = vmatpush1.msra.mxu0 %v810
        %849 = vmatprep.subr.mxu0 0.0
        %850 = vmatpush1.msra.mxu0 %v809
        %851 = vmatprep.subr.mxu0 0.0
        %852 = vmatpush1.msra.mxu0 %v808
        %853 = vmatprep.subr.mxu0 0.0
        %854 = vmatpush1.msra.mxu0 %v807
        %855 = vmatprep.subr.mxu0 0.0
        %856 = vmatpush2.msra.mxu0 0.0
        %857 = vmatprep.subr.mxu0 0.0
        %858 = vmatpush2.msra.mxu0 0.0
        %859 = vmatprep.subr.mxu0 0.0
        %860 = vmatpush2.msra.mxu0 0.0
        %861 = vmatprep.subr.mxu0 0.0
        %862 = vmatpush2.msra.mxu0 0.0
        %863 = vmatprep.subr.mxu0 0.0
        %864 = vmatpush2.msra.mxu0 0.0
        %865 = vmatprep.subr.mxu0 0.0
        %866 = vmatpush2.msra.mxu0 0.0
        %867 = vmatprep.subr.mxu0 0.0
        %868 = vmatpush2.msra.mxu0 0.0
        %869 = vmatprep.subr.mxu0 0.0
        %870 = vmatpush2.msra.mxu0 0.0
        %871 = vmatprep.subr.mxu0 0.0
        %872 = vmatpush2.msra.mxu0 0.0
        %873 = vmatprep.subr.mxu0 0.0
        %874 = vmatpush2.msra.mxu0 0.0
        %875 = vmatprep.subr.mxu0 0.0
        %876 = vmatpush2.msra.mxu0 0.0
        %877 = vmatprep.subr.mxu0 0.0
        %878 = vmatpush2.msra.mxu0 0.0
        %879 = vmatprep.subr.mxu0 0.0
        %880 = vmatpush2.msra.mxu0 0.0
        %881 = vmatprep.subr.mxu0 0.0
        %882 = vmatpush2.msra.mxu0 0.0
        %883 = vmatprep.subr.mxu0 0.0
        %884 = vmatpush2.msra.mxu0 0.0
        %885 = vmatprep.subr.mxu0 0.0
        %886 = vmatpush2.msra.mxu0 0.0
        %887 = vmatprep.mubr.f32.mxu0 0.0
        %888 = vmatmul.mubr.f32.gmra.mxu0 %v711
        %v889 = vpop.f32.mrf.mxu0
        %v890 = vadd.f32 %v804, %v889
        %v891 = vpop.f32.mrf.mxu0
        %892 = vdwg.mxu0
        %v893 = vld [vmem:[%s4] sm:$0x1]
        %v895 = vlaneseq
        %v896 = vshrl.u32 %v895, 7
        %v897 = vsub.s32 0, %v896
        %v898 = vrot.slane %v893, %v897
        %v900 = vadd.f32 %v890, %v898
        %v901 = vmax.f32 %v900, 0.0
        %v902 = vld [vmem:[#allocation7] sm:$0xff]
        %v903 = vld [vmem:[#allocation7 + $0x8] sm:$0xff]
        %v904 = vld [vmem:[#allocation7 + $0x10] sm:$0xff]
        %v905 = vld [vmem:[#allocation7 + $0x18] sm:$0xff]
        %v906 = vld [vmem:[#allocation7 + $0x20] sm:$0xff]
        %v907 = vld [vmem:[#allocation7 + $0x28] sm:$0xff]
        %v908 = vld [vmem:[#allocation7 + $0x30] sm:$0xff]
        %v909 = vld [vmem:[#allocation7 + $0x38] sm:$0xff]
        %v910 = vld [vmem:[#allocation7 + $0x40] sm:$0xff]
        %v911 = vld [vmem:[#allocation7 + $0x48] sm:$0xff]
        %v912 = vld [vmem:[#allocation7 + $0x50] sm:$0xff]
        %v913 = vld [vmem:[#allocation7 + $0x58] sm:$0xff]
        %v914 = vld [vmem:[#allocation7 + $0x60] sm:$0xff]
        %v915 = vld [vmem:[#allocation7 + $0x68] sm:$0xff]
        %v916 = vld [vmem:[#allocation7 + $0x70] sm:$0xff]
        %v917 = vld [vmem:[#allocation7 + $0x78] sm:$0xff]
        %v918 = vld [vmem:[%s6] sm:$0x1]
        %v920 = vlaneseq
        %v921 = vshrl.u32 %v920, 7
        %v922 = vsub.s32 0, %v921
        %v923 = vrot.slane %v918, %v922
        %925 = vmatprep.subr.mxu0 0.0
        %926 = vmatpush1.msra.mxu0 %v917
        %927 = vmatprep.subr.mxu0 0.0
        %928 = vmatpush1.msra.mxu0 %v916
        %929 = vmatprep.subr.mxu0 0.0
        %930 = vmatpush1.msra.mxu0 %v915
        %931 = vmatprep.subr.mxu0 0.0
        %932 = vmatpush1.msra.mxu0 %v914
        %933 = vmatprep.subr.mxu0 0.0
        %934 = vmatpush1.msra.mxu0 %v913
        %935 = vmatprep.subr.mxu0 0.0
        %936 = vmatpush1.msra.mxu0 %v912
        %937 = vmatprep.subr.mxu0 0.0
        %938 = vmatpush1.msra.mxu0 %v911
        %939 = vmatprep.subr.mxu0 0.0
        %940 = vmatpush1.msra.mxu0 %v910
        %941 = vmatprep.subr.mxu0 0.0
        %942 = vmatpush1.msra.mxu0 %v909
        %943 = vmatprep.subr.mxu0 0.0
        %944 = vmatpush1.msra.mxu0 %v908
        %945 = vmatprep.subr.mxu0 0.0
        %946 = vmatpush1.msra.mxu0 %v907
        %947 = vmatprep.subr.mxu0 0.0
        %948 = vmatpush1.msra.mxu0 %v906
        %949 = vmatprep.subr.mxu0 0.0
        %950 = vmatpush1.msra.mxu0 %v905
        %951 = vmatprep.subr.mxu0 0.0
        %952 = vmatpush1.msra.mxu0 %v904
        %953 = vmatprep.subr.mxu0 0.0
        %954 = vmatpush1.msra.mxu0 %v903
        %955 = vmatprep.subr.mxu0 0.0
        %956 = vmatpush1.msra.mxu0 %v902
        %957 = vmatprep.subr.mxu0 0.0
        %958 = vmatpush2.msra.mxu0 0.0
        %959 = vmatprep.subr.mxu0 0.0
        %960 = vmatpush2.msra.mxu0 0.0
        %961 = vmatprep.subr.mxu0 0.0
        %962 = vmatpush2.msra.mxu0 0.0
        %963 = vmatprep.subr.mxu0 0.0
        %964 = vmatpush2.msra.mxu0 0.0
        %965 = vmatprep.subr.mxu0 0.0
        %966 = vmatpush2.msra.mxu0 0.0
        %967 = vmatprep.subr.mxu0 0.0
        %968 = vmatpush2.msra.mxu0 0.0
        %969 = vmatprep.subr.mxu0 0.0
        %970 = vmatpush2.msra.mxu0 0.0
        %971 = vmatprep.subr.mxu0 0.0
        %972 = vmatpush2.msra.mxu0 0.0
        %973 = vmatprep.subr.mxu0 0.0
        %974 = vmatpush2.msra.mxu0 0.0
        %975 = vmatprep.subr.mxu0 0.0
        %976 = vmatpush2.msra.mxu0 0.0
        %977 = vmatprep.subr.mxu0 0.0
        %978 = vmatpush2.msra.mxu0 0.0
        %979 = vmatprep.subr.mxu0 0.0
        %980 = vmatpush2.msra.mxu0 0.0
        %981 = vmatprep.subr.mxu0 0.0
        %982 = vmatpush2.msra.mxu0 0.0
        %983 = vmatprep.subr.mxu0 0.0
        %984 = vmatpush2.msra.mxu0 0.0
        %985 = vmatprep.subr.mxu0 0.0
        %986 = vmatpush2.msra.mxu0 0.0
        %987 = vmatprep.subr.mxu0 0.0
        %988 = vmatpush2.msra.mxu0 0.0
        %989 = vmatprep.mubr.f32.mxu0 0.0
        %990 = vmatmul.mubr.f32.gmra.mxu0 %v901
        %v991 = vpop.f32.mrf.mxu0
        %v992 = vadd.f32 %v923, %v991
        %v993 = vpop.f32.mrf.mxu0
        %994 = vdwg.mxu0
        %v995 = vmax.f32 %v992, 0.0
        %v996 = vld [vmem:[#allocation8] sm:$0xff]
        %v997 = vld [vmem:[#allocation8 + $0x8] sm:$0xff]
        %v998 = vld [vmem:[#allocation8 + $0x10] sm:$0xff]
        %v999 = vld [vmem:[#allocation8 + $0x18] sm:$0xff]
        %v1000 = vld [vmem:[#allocation8 + $0x20] sm:$0xff]
        %v1001 = vld [vmem:[#allocation8 + $0x28] sm:$0xff]
        %v1002 = vld [vmem:[#allocation8 + $0x30] sm:$0xff]
        %v1003 = vld [vmem:[#allocation8 + $0x38] sm:$0xff]
        %v1004 = vld [vmem:[#allocation8 + $0x40] sm:$0xff]
        %v1005 = vld [vmem:[#allocation8 + $0x48] sm:$0xff]
        %v1006 = vld [vmem:[#allocation8 + $0x50] sm:$0xff]
        %v1007 = vld [vmem:[#allocation8 + $0x58] sm:$0xff]
        %v1008 = vld [vmem:[#allocation8 + $0x60] sm:$0xff]
        %v1009 = vld [vmem:[#allocation8 + $0x68] sm:$0xff]
        %v1010 = vld [vmem:[#allocation8 + $0x70] sm:$0xff]
        %v1011 = vld [vmem:[#allocation8 + $0x78] sm:$0xff]
        %v1012 = vld [vmem:[#allocation8 + $0x80] sm:$0xff]
        %v1013 = vld [vmem:[#allocation8 + $0x88] sm:$0xff]
        %v1014 = vld [vmem:[#allocation8 + $0x90] sm:$0xff]
        %v1015 = vld [vmem:[#allocation8 + $0x98] sm:$0xff]
        %v1016 = vld [vmem:[#allocation8 + $0xa0] sm:$0xff]
        %v1017 = vld [vmem:[#allocation8 + $0xa8] sm:$0xff]
        %v1018 = vld [vmem:[#allocation8 + $0xb0] sm:$0xff]
        %v1019 = vld [vmem:[#allocation8 + $0xb8] sm:$0xff]
        %v1020 = vld [vmem:[#allocation8 + $0xc0] sm:$0xff]
        %v1021 = vld [vmem:[#allocation8 + $0xc8] sm:$0xff]
        %v1022 = vld [vmem:[#allocation8 + $0xd0] sm:$0xff]
        %v1023 = vld [vmem:[#allocation8 + $0xd8] sm:$0xff]
        %v1024 = vld [vmem:[#allocation8 + $0xe0] sm:$0xff]
        %v1025 = vld [vmem:[#allocation8 + $0xe8] sm:$0xff]
        %v1026 = vld [vmem:[#allocation8 + $0xf0] sm:$0xff]
        %v1027 = vld [vmem:[#allocation8 + $0xf8] sm:$0xff]
        %v1028 = vld [vmem:[%s8] sm:$0x3]
        %v1030 = vlaneseq
        %v1031 = vshrl.u32 %v1030, 7
        %v1032 = vsub.s32 0, %v1031
        %v1033 = vrot.slane %v1028, %v1032
        %v1034 = vlaneseq
        %v1035 = vshrl.u32 %v1034, 7
        %v1036 = vsub.s32 1, %v1035
        %v1037 = vrot.slane %v1028, %v1036
        %1040 = vmatprep.subr.mxu0 %v1027
        %1041 = vmatpush1.msra.mxu0 %v1026
        %1042 = vmatprep.subr.mxu0 %v1025
        %1043 = vmatpush1.msra.mxu0 %v1024
        %1044 = vmatprep.subr.mxu0 %v1023
        %1045 = vmatpush1.msra.mxu0 %v1022
        %1046 = vmatprep.subr.mxu0 %v1021
        %1047 = vmatpush1.msra.mxu0 %v1020
        %1048 = vmatprep.subr.mxu0 %v1019
        %1049 = vmatpush1.msra.mxu0 %v1018
        %1050 = vmatprep.subr.mxu0 %v1017
        %1051 = vmatpush1.msra.mxu0 %v1016
        %1052 = vmatprep.subr.mxu0 %v1015
        %1053 = vmatpush1.msra.mxu0 %v1014
        %1054 = vmatprep.subr.mxu0 %v1013
        %1055 = vmatpush1.msra.mxu0 %v1012
        %1056 = vmatprep.subr.mxu0 %v1011
        %1057 = vmatpush1.msra.mxu0 %v1010
        %1058 = vmatprep.subr.mxu0 %v1009
        %1059 = vmatpush1.msra.mxu0 %v1008
        %1060 = vmatprep.subr.mxu0 %v1007
        %1061 = vmatpush1.msra.mxu0 %v1006
        %1062 = vmatprep.subr.mxu0 %v1005
        %1063 = vmatpush1.msra.mxu0 %v1004
        %1064 = vmatprep.subr.mxu0 %v1003
        %1065 = vmatpush1.msra.mxu0 %v1002
        %1066 = vmatprep.subr.mxu0 %v1001
        %1067 = vmatpush1.msra.mxu0 %v1000
        %1068 = vmatprep.subr.mxu0 %v999
        %1069 = vmatpush1.msra.mxu0 %v998
        %1070 = vmatprep.subr.mxu0 %v997
        %1071 = vmatpush1.msra.mxu0 %v996
        %1072 = vmatprep.subr.mxu0 0.0
        %1073 = vmatpush2.msra.mxu0 0.0
        %1074 = vmatprep.subr.mxu0 0.0
        %1075 = vmatpush2.msra.mxu0 0.0
        %1076 = vmatprep.subr.mxu0 0.0
        %1077 = vmatpush2.msra.mxu0 0.0
        %1078 = vmatprep.subr.mxu0 0.0
        %1079 = vmatpush2.msra.mxu0 0.0
        %1080 = vmatprep.subr.mxu0 0.0
        %1081 = vmatpush2.msra.mxu0 0.0
        %1082 = vmatprep.subr.mxu0 0.0
        %1083 = vmatpush2.msra.mxu0 0.0
        %1084 = vmatprep.subr.mxu0 0.0
        %1085 = vmatpush2.msra.mxu0 0.0
        %1086 = vmatprep.subr.mxu0 0.0
        %1087 = vmatpush2.msra.mxu0 0.0
        %1088 = vmatprep.subr.mxu0 0.0
        %1089 = vmatpush2.msra.mxu0 0.0
        %1090 = vmatprep.subr.mxu0 0.0
        %1091 = vmatpush2.msra.mxu0 0.0
        %1092 = vmatprep.subr.mxu0 0.0
        %1093 = vmatpush2.msra.mxu0 0.0
        %1094 = vmatprep.subr.mxu0 0.0
        %1095 = vmatpush2.msra.mxu0 0.0
        %1096 = vmatprep.subr.mxu0 0.0
        %1097 = vmatpush2.msra.mxu0 0.0
        %1098 = vmatprep.subr.mxu0 0.0
        %1099 = vmatpush2.msra.mxu0 0.0
        %1100 = vmatprep.subr.mxu0 0.0
        %1101 = vmatpush2.msra.mxu0 0.0
        %1102 = vmatprep.subr.mxu0 0.0
        %1103 = vmatpush2.msra.mxu0 0.0
        %1104 = vmatprep.mubr.f32.mxu0 0.0
        %1105 = vmatmul.mubr.f32.gmra.mxu0 %v995
        %v1106 = vpop.f32.mrf.mxu0
        %v1107 = vadd.f32 %v1033, %v1106
        %v1108 = vpop.f32.mrf.mxu0
        %v1109 = vadd.f32 %v1037, %v1108
        %1110 = vdwg.mxu0
        %v1111 = vmul.f32 %v1109, 0.5
        %v1112 = vmul.f32 %v1111, 1.442695
        %v1113 = vpow.pop %v1112
        %v1114 = vld [vmem:[%s611] sm:$0xff]
        %v1115 = vmul.f32 %v1114, %v1113
        %v1116 = vadd.f32 %v1107, %v1115
        %v1117 = vld [vmem:[#allocation14 + $0x8] sm:$0xff]
        %v1118 = vld [vmem:[#allocation14 + $0x18] sm:$0xff]
        %v1119 = vld [vmem:[#allocation14 + $0x28] sm:$0xff]
        %v1120 = vld [vmem:[#allocation14 + $0x38] sm:$0xff]
        %v1121 = vld [vmem:[#allocation14 + $0x48] sm:$0xff]
        %v1122 = vld [vmem:[#allocation14 + $0x58] sm:$0xff]
        %v1123 = vld [vmem:[#allocation14 + $0x68] sm:$0xff]
        %v1124 = vld [vmem:[#allocation14 + $0x78] sm:$0xff]
        %v1125 = vld [vmem:[#allocation14 + $0x88] sm:$0xff]
        %v1126 = vld [vmem:[#allocation14 + $0x98] sm:$0xff]
        %v1127 = vld [vmem:[#allocation14 + $0xa8] sm:$0xff]
        %v1128 = vld [vmem:[#allocation14 + $0xb8] sm:$0xff]
        %v1129 = vld [vmem:[#allocation14 + $0xc8] sm:$0xff]
        %v1130 = vld [vmem:[#allocation14 + $0xd8] sm:$0xff]
        %v1131 = vld [vmem:[#allocation14 + $0xe8] sm:$0xff]
        %v1132 = vld [vmem:[#allocation14 + $0xf8] sm:$0xff]
        %1133 = vmatprep.subr.mxu0 0.0
        %1134 = vmatpush1.msra.mxu0 %v1132
        %1135 = vmatprep.subr.mxu0 0.0
        %1136 = vmatpush1.msra.mxu0 %v1131
        %1137 = vmatprep.subr.mxu0 0.0
        %1138 = vmatpush1.msra.mxu0 %v1130
        %1139 = vmatprep.subr.mxu0 0.0
        %1140 = vmatpush1.msra.mxu0 %v1129
        %1141 = vmatprep.subr.mxu0 0.0
        %1142 = vmatpush1.msra.mxu0 %v1128
        %1143 = vmatprep.subr.mxu0 0.0
        %1144 = vmatpush1.msra.mxu0 %v1127
        %1145 = vmatprep.subr.mxu0 0.0
        %1146 = vmatpush1.msra.mxu0 %v1126
        %1147 = vmatprep.subr.mxu0 0.0
        %1148 = vmatpush1.msra.mxu0 %v1125
        %1149 = vmatprep.subr.mxu0 0.0
        %1150 = vmatpush1.msra.mxu0 %v1124
        %1151 = vmatprep.subr.mxu0 0.0
        %1152 = vmatpush1.msra.mxu0 %v1123
        %1153 = vmatprep.subr.mxu0 0.0
        %1154 = vmatpush1.msra.mxu0 %v1122
        %1155 = vmatprep.subr.mxu0 0.0
        %1156 = vmatpush1.msra.mxu0 %v1121
        %1157 = vmatprep.subr.mxu0 0.0
        %1158 = vmatpush1.msra.mxu0 %v1120
        %1159 = vmatprep.subr.mxu0 0.0
        %1160 = vmatpush1.msra.mxu0 %v1119
        %1161 = vmatprep.subr.mxu0 0.0
        %1162 = vmatpush1.msra.mxu0 %v1118
        %1163 = vmatprep.subr.mxu0 0.0
        %1164 = vmatpush1.msra.mxu0 %v1117
        %1165 = vmatprep.subr.mxu0 0.0
        %1166 = vmatpush2.msra.mxu0 0.0
        %1167 = vmatprep.subr.mxu0 0.0
        %1168 = vmatpush2.msra.mxu0 0.0
        %1169 = vmatprep.subr.mxu0 0.0
        %1170 = vmatpush2.msra.mxu0 0.0
        %1171 = vmatprep.subr.mxu0 0.0
        %1172 = vmatpush2.msra.mxu0 0.0
        %1173 = vmatprep.subr.mxu0 0.0
        %1174 = vmatpush2.msra.mxu0 0.0
        %1175 = vmatprep.subr.mxu0 0.0
        %1176 = vmatpush2.msra.mxu0 0.0
        %1177 = vmatprep.subr.mxu0 0.0
        %1178 = vmatpush2.msra.mxu0 0.0
        %1179 = vmatprep.subr.mxu0 0.0
        %1180 = vmatpush2.msra.mxu0 0.0
        %1181 = vmatprep.subr.mxu0 0.0
        %1182 = vmatpush2.msra.mxu0 0.0
        %1183 = vmatprep.subr.mxu0 0.0
        %1184 = vmatpush2.msra.mxu0 0.0
        %1185 = vmatprep.subr.mxu0 0.0
        %1186 = vmatpush2.msra.mxu0 0.0
        %1187 = vmatprep.subr.mxu0 0.0
        %1188 = vmatpush2.msra.mxu0 0.0
        %1189 = vmatprep.subr.mxu0 0.0
        %1190 = vmatpush2.msra.mxu0 0.0
        %1191 = vmatprep.subr.mxu0 0.0
        %1192 = vmatpush2.msra.mxu0 0.0
        %1193 = vmatprep.subr.mxu0 0.0
        %1194 = vmatpush2.msra.mxu0 0.0
        %1195 = vmatprep.subr.mxu0 0.0
        %1196 = vmatpush2.msra.mxu0 0.0
        %1197 = vmatprep.mubr.f32.mxu0 0.0
        %1198 = vmatmul.mubr.f32.gmra.mxu0 %v720
        %v1199 = vpop.f32.mrf.mxu0
        %v1200 = vadd.f32 0.0, %v1199
        %v1201 = vpop.f32.mrf.mxu0
        %1202 = vdwg.mxu0
        %v1203 = vld [vmem:[#allocation10] sm:$0xff]
        %v1204 = vld [vmem:[#allocation10 + $0x8] sm:$0xff]
        %v1205 = vld [vmem:[#allocation10 + $0x10] sm:$0xff]
        %v1206 = vld [vmem:[#allocation10 + $0x18] sm:$0xff]
        %v1207 = vld [vmem:[#allocation10 + $0x20] sm:$0xff]
        %v1208 = vld [vmem:[#allocation10 + $0x28] sm:$0xff]
        %v1209 = vld [vmem:[#allocation10 + $0x30] sm:$0xff]
        %v1210 = vld [vmem:[#allocation10 + $0x38] sm:$0xff]
        %v1211 = vld [vmem:[#allocation10 + $0x40] sm:$0xff]
        %v1212 = vld [vmem:[#allocation10 + $0x48] sm:$0xff]
        %v1213 = vld [vmem:[#allocation10 + $0x50] sm:$0xff]
        %v1214 = vld [vmem:[#allocation10 + $0x58] sm:$0xff]
        %v1215 = vld [vmem:[#allocation10 + $0x60] sm:$0xff]
        %v1216 = vld [vmem:[#allocation10 + $0x68] sm:$0xff]
        %v1217 = vld [vmem:[#allocation10 + $0x70] sm:$0xff]
        %v1218 = vld [vmem:[#allocation10 + $0x78] sm:$0xff]
        %1219 = vmatprep.subr.mxu0 0.0
        %1220 = vmatpush1.msra.mxu0 %v1218
        %1221 = vmatprep.subr.mxu0 0.0
        %1222 = vmatpush1.msra.mxu0 %v1217
        %1223 = vmatprep.subr.mxu0 0.0
        %1224 = vmatpush1.msra.mxu0 %v1216
        %1225 = vmatprep.subr.mxu0 0.0
        %1226 = vmatpush1.msra.mxu0 %v1215
        %1227 = vmatprep.subr.mxu0 0.0
        %1228 = vmatpush1.msra.mxu0 %v1214
        %1229 = vmatprep.subr.mxu0 0.0
        %1230 = vmatpush1.msra.mxu0 %v1213
        %1231 = vmatprep.subr.mxu0 0.0
        %1232 = vmatpush1.msra.mxu0 %v1212
        %1233 = vmatprep.subr.mxu0 0.0
        %1234 = vmatpush1.msra.mxu0 %v1211
        %1235 = vmatprep.subr.mxu0 0.0
        %1236 = vmatpush1.msra.mxu0 %v1210
        %1237 = vmatprep.subr.mxu0 0.0
        %1238 = vmatpush1.msra.mxu0 %v1209
        %1239 = vmatprep.subr.mxu0 0.0
        %1240 = vmatpush1.msra.mxu0 %v1208
        %1241 = vmatprep.subr.mxu0 0.0
        %1242 = vmatpush1.msra.mxu0 %v1207
        %1243 = vmatprep.subr.mxu0 0.0
        %1244 = vmatpush1.msra.mxu0 %v1206
        %1245 = vmatprep.subr.mxu0 0.0
        %1246 = vmatpush1.msra.mxu0 %v1205
        %1247 = vmatprep.subr.mxu0 0.0
        %1248 = vmatpush1.msra.mxu0 %v1204
        %1249 = vmatprep.subr.mxu0 0.0
        %1250 = vmatpush1.msra.mxu0 %v1203
        %1251 = vmatprep.subr.mxu0 0.0
        %1252 = vmatpush2.msra.mxu0 0.0
        %1253 = vmatprep.subr.mxu0 0.0
        %1254 = vmatpush2.msra.mxu0 0.0
        %1255 = vmatprep.subr.mxu0 0.0
        %1256 = vmatpush2.msra.mxu0 0.0
        %1257 = vmatprep.subr.mxu0 0.0
        %1258 = vmatpush2.msra.mxu0 0.0
        %1259 = vmatprep.subr.mxu0 0.0
        %1260 = vmatpush2.msra.mxu0 0.0
        %1261 = vmatprep.subr.mxu0 0.0
        %1262 = vmatpush2.msra.mxu0 0.0
        %1263 = vmatprep.subr.mxu0 0.0
        %1264 = vmatpush2.msra.mxu0 0.0
        %1265 = vmatprep.subr.mxu0 0.0
        %1266 = vmatpush2.msra.mxu0 0.0
        %1267 = vmatprep.subr.mxu0 0.0
        %1268 = vmatpush2.msra.mxu0 0.0
        %1269 = vmatprep.subr.mxu0 0.0
        %1270 = vmatpush2.msra.mxu0 0.0
        %1271 = vmatprep.subr.mxu0 0.0
        %1272 = vmatpush2.msra.mxu0 0.0
        %1273 = vmatprep.subr.mxu0 0.0
        %1274 = vmatpush2.msra.mxu0 0.0
        %1275 = vmatprep.subr.mxu0 0.0
        %1276 = vmatpush2.msra.mxu0 0.0
        %1277 = vmatprep.subr.mxu0 0.0
        %1278 = vmatpush2.msra.mxu0 0.0
        %1279 = vmatprep.subr.mxu0 0.0
        %1280 = vmatpush2.msra.mxu0 0.0
        %1281 = vmatprep.subr.mxu0 0.0
        %1282 = vmatpush2.msra.mxu0 0.0
        %1283 = vmatprep.mubr.f32.mxu0 0.0
        %1284 = vmatmul.mubr.f32.gmra.mxu0 %v1116
        %v1285 = vpop.f32.mrf.mxu0
        %v1286 = vadd.f32 %v1200, %v1285
        %v1287 = vpop.f32.mrf.mxu0
        %1288 = vdwg.mxu0
        %v1289 = vld [vmem:[%s10] sm:$0x1]
        %v1291 = vlaneseq
        %v1292 = vshrl.u32 %v1291, 7
        %v1293 = vsub.s32 0, %v1292
        %v1294 = vrot.slane %v1289, %v1293
        %v1296 = vadd.f32 %v1286, %v1294
        %v1297 = vmax.f32 %v1296, 0.0
        %v1298 = vld [vmem:[#allocation11] sm:$0xff]
        %v1299 = vld [vmem:[#allocation11 + $0x8] sm:$0xff]
        %v1300 = vld [vmem:[#allocation11 + $0x10] sm:$0xff]
        %v1301 = vld [vmem:[#allocation11 + $0x18] sm:$0xff]
        %v1302 = vld [vmem:[#allocation11 + $0x20] sm:$0xff]
        %v1303 = vld [vmem:[#allocation11 + $0x28] sm:$0xff]
        %v1304 = vld [vmem:[#allocation11 + $0x30] sm:$0xff]
        %v1305 = vld [vmem:[#allocation11 + $0x38] sm:$0xff]
        %v1306 = vld [vmem:[#allocation11 + $0x40] sm:$0xff]
        %v1307 = vld [vmem:[#allocation11 + $0x48] sm:$0xff]
        %v1308 = vld [vmem:[#allocation11 + $0x50] sm:$0xff]
        %v1309 = vld [vmem:[#allocation11 + $0x58] sm:$0xff]
        %v1310 = vld [vmem:[#allocation11 + $0x60] sm:$0xff]
        %v1311 = vld [vmem:[#allocation11 + $0x68] sm:$0xff]
        %v1312 = vld [vmem:[#allocation11 + $0x70] sm:$0xff]
        %v1313 = vld [vmem:[#allocation11 + $0x78] sm:$0xff]
        %v1314 = vld [vmem:[%s12] sm:$0x1]
        %v1316 = vlaneseq
        %v1317 = vshrl.u32 %v1316, 7
        %v1318 = vsub.s32 0, %v1317
        %v1319 = vrot.slane %v1314, %v1318
        %1321 = vmatprep.subr.mxu0 0.0
        %1322 = vmatpush1.msra.mxu0 %v1313
        %1323 = vmatprep.subr.mxu0 0.0
        %1324 = vmatpush1.msra.mxu0 %v1312
        %1325 = vmatprep.subr.mxu0 0.0
        %1326 = vmatpush1.msra.mxu0 %v1311
        %1327 = vmatprep.subr.mxu0 0.0
        %1328 = vmatpush1.msra.mxu0 %v1310
        %1329 = vmatprep.subr.mxu0 0.0
        %1330 = vmatpush1.msra.mxu0 %v1309
        %1331 = vmatprep.subr.mxu0 0.0
        %1332 = vmatpush1.msra.mxu0 %v1308
        %1333 = vmatprep.subr.mxu0 0.0
        %1334 = vmatpush1.msra.mxu0 %v1307
        %1335 = vmatprep.subr.mxu0 0.0
        %1336 = vmatpush1.msra.mxu0 %v1306
        %1337 = vmatprep.subr.mxu0 0.0
        %1338 = vmatpush1.msra.mxu0 %v1305
        %1339 = vmatprep.subr.mxu0 0.0
        %1340 = vmatpush1.msra.mxu0 %v1304
        %1341 = vmatprep.subr.mxu0 0.0
        %1342 = vmatpush1.msra.mxu0 %v1303
        %1343 = vmatprep.subr.mxu0 0.0
        %1344 = vmatpush1.msra.mxu0 %v1302
        %1345 = vmatprep.subr.mxu0 0.0
        %1346 = vmatpush1.msra.mxu0 %v1301
        %1347 = vmatprep.subr.mxu0 0.0
        %1348 = vmatpush1.msra.mxu0 %v1300
        %1349 = vmatprep.subr.mxu0 0.0
        %1350 = vmatpush1.msra.mxu0 %v1299
        %1351 = vmatprep.subr.mxu0 0.0
        %1352 = vmatpush1.msra.mxu0 %v1298
        %1353 = vmatprep.subr.mxu0 0.0
        %1354 = vmatpush2.msra.mxu0 0.0
        %1355 = vmatprep.subr.mxu0 0.0
        %1356 = vmatpush2.msra.mxu0 0.0
        %1357 = vmatprep.subr.mxu0 0.0
        %1358 = vmatpush2.msra.mxu0 0.0
        %1359 = vmatprep.subr.mxu0 0.0
        %1360 = vmatpush2.msra.mxu0 0.0
        %1361 = vmatprep.subr.mxu0 0.0
        %1362 = vmatpush2.msra.mxu0 0.0
        %1363 = vmatprep.subr.mxu0 0.0
        %1364 = vmatpush2.msra.mxu0 0.0
        %1365 = vmatprep.subr.mxu0 0.0
        %1366 = vmatpush2.msra.mxu0 0.0
        %1367 = vmatprep.subr.mxu0 0.0
        %1368 = vmatpush2.msra.mxu0 0.0
        %1369 = vmatprep.subr.mxu0 0.0
        %1370 = vmatpush2.msra.mxu0 0.0
        %1371 = vmatprep.subr.mxu0 0.0
        %1372 = vmatpush2.msra.mxu0 0.0
        %1373 = vmatprep.subr.mxu0 0.0
        %1374 = vmatpush2.msra.mxu0 0.0
        %1375 = vmatprep.subr.mxu0 0.0
        %1376 = vmatpush2.msra.mxu0 0.0
        %1377 = vmatprep.subr.mxu0 0.0
        %1378 = vmatpush2.msra.mxu0 0.0
        %1379 = vmatprep.subr.mxu0 0.0
        %1380 = vmatpush2.msra.mxu0 0.0
        %1381 = vmatprep.subr.mxu0 0.0
        %1382 = vmatpush2.msra.mxu0 0.0
        %1383 = vmatprep.subr.mxu0 0.0
        %1384 = vmatpush2.msra.mxu0 0.0
        %1385 = vmatprep.mubr.f32.mxu0 0.0
        %1386 = vmatmul.mubr.f32.gmra.mxu0 %v1297
        %v1387 = vpop.f32.mrf.mxu0
        %v1388 = vadd.f32 %v1319, %v1387
        %v1389 = vpop.f32.mrf.mxu0
        %1390 = vdwg.mxu0
        %v1391 = vmax.f32 %v1388, 0.0
        %v1392 = vld [vmem:[#allocation13] sm:$0xff]
        %v1393 = vld [vmem:[#allocation13 + $0x8] sm:$0xff]
        %v1394 = vld [vmem:[#allocation13 + $0x10] sm:$0xff]
        %v1395 = vld [vmem:[#allocation13 + $0x18] sm:$0xff]
        %v1396 = vld [vmem:[#allocation13 + $0x20] sm:$0xff]
        %v1397 = vld [vmem:[#allocation13 + $0x28] sm:$0xff]
        %v1398 = vld [vmem:[#allocation13 + $0x30] sm:$0xff]
        %v1399 = vld [vmem:[#allocation13 + $0x38] sm:$0xff]
        %v1400 = vld [vmem:[#allocation13 + $0x40] sm:$0xff]
        %v1401 = vld [vmem:[#allocation13 + $0x48] sm:$0xff]
        %v1402 = vld [vmem:[#allocation13 + $0x50] sm:$0xff]
        %v1403 = vld [vmem:[#allocation13 + $0x58] sm:$0xff]
        %v1404 = vld [vmem:[#allocation13 + $0x60] sm:$0xff]
        %v1405 = vld [vmem:[#allocation13 + $0x68] sm:$0xff]
        %v1406 = vld [vmem:[#allocation13 + $0x70] sm:$0xff]
        %v1407 = vld [vmem:[#allocation13 + $0x78] sm:$0xff]
        %v1408 = vld [vmem:[%s14] sm:$0x1]
        %v1410 = vlaneseq
        %v1411 = vshrl.u32 %v1410, 7
        %v1412 = vsub.s32 0, %v1411
        %v1413 = vrot.slane %v1408, %v1412
        %1415 = vmatprep.subr.mxu0 0.0
        %1416 = vmatpush1.msra.mxu0 %v1407
        %1417 = vmatprep.subr.mxu0 0.0
        %1418 = vmatpush1.msra.mxu0 %v1406
        %1419 = vmatprep.subr.mxu0 0.0
        %1420 = vmatpush1.msra.mxu0 %v1405
        %1421 = vmatprep.subr.mxu0 0.0
        %1422 = vmatpush1.msra.mxu0 %v1404
        %1423 = vmatprep.subr.mxu0 0.0
        %1424 = vmatpush1.msra.mxu0 %v1403
        %1425 = vmatprep.subr.mxu0 0.0
        %1426 = vmatpush1.msra.mxu0 %v1402
        %1427 = vmatprep.subr.mxu0 0.0
        %1428 = vmatpush1.msra.mxu0 %v1401
        %1429 = vmatprep.subr.mxu0 0.0
        %1430 = vmatpush1.msra.mxu0 %v1400
        %1431 = vmatprep.subr.mxu0 0.0
        %1432 = vmatpush1.msra.mxu0 %v1399
        %1433 = vmatprep.subr.mxu0 0.0
        %1434 = vmatpush1.msra.mxu0 %v1398
        %1435 = vmatprep.subr.mxu0 0.0
        %1436 = vmatpush1.msra.mxu0 %v1397
        %1437 = vmatprep.subr.mxu0 0.0
        %1438 = vmatpush1.msra.mxu0 %v1396
        %1439 = vmatprep.subr.mxu0 0.0
        %1440 = vmatpush1.msra.mxu0 %v1395
        %1441 = vmatprep.subr.mxu0 0.0
        %1442 = vmatpush1.msra.mxu0 %v1394
        %1443 = vmatprep.subr.mxu0 0.0
        %1444 = vmatpush1.msra.mxu0 %v1393
        %1445 = vmatprep.subr.mxu0 0.0
        %1446 = vmatpush1.msra.mxu0 %v1392
        %1447 = vmatprep.subr.mxu0 0.0
        %1448 = vmatpush2.msra.mxu0 0.0
        %1449 = vmatprep.subr.mxu0 0.0
        %1450 = vmatpush2.msra.mxu0 0.0
        %1451 = vmatprep.subr.mxu0 0.0
        %1452 = vmatpush2.msra.mxu0 0.0
        %1453 = vmatprep.subr.mxu0 0.0
        %1454 = vmatpush2.msra.mxu0 0.0
        %1455 = vmatprep.subr.mxu0 0.0
        %1456 = vmatpush2.msra.mxu0 0.0
        %1457 = vmatprep.subr.mxu0 0.0
        %1458 = vmatpush2.msra.mxu0 0.0
        %1459 = vmatprep.subr.mxu0 0.0
        %1460 = vmatpush2.msra.mxu0 0.0
        %1461 = vmatprep.subr.mxu0 0.0
        %1462 = vmatpush2.msra.mxu0 0.0
        %1463 = vmatprep.subr.mxu0 0.0
        %1464 = vmatpush2.msra.mxu0 0.0
        %1465 = vmatprep.subr.mxu0 0.0
        %1466 = vmatpush2.msra.mxu0 0.0
        %1467 = vmatprep.subr.mxu0 0.0
        %1468 = vmatpush2.msra.mxu0 0.0
        %1469 = vmatprep.subr.mxu0 0.0
        %1470 = vmatpush2.msra.mxu0 0.0
        %1471 = vmatprep.subr.mxu0 0.0
        %1472 = vmatpush2.msra.mxu0 0.0
        %1473 = vmatprep.subr.mxu0 0.0
        %1474 = vmatpush2.msra.mxu0 0.0
        %1475 = vmatprep.subr.mxu0 0.0
        %1476 = vmatpush2.msra.mxu0 0.0
        %1477 = vmatprep.subr.mxu0 0.0
        %1478 = vmatpush2.msra.mxu0 0.0
        %1479 = vmatprep.mubr.f32.mxu0 0.0
        %1480 = vmatmul.mubr.f32.gmra.mxu0 %v1391
        %v1481 = vpop.f32.mrf.mxu0
        %v1482 = vadd.f32 %v1413, %v1481
        %v1483 = vpop.f32.mrf.mxu0
        %1484 = vdwg.mxu0
        %v1485 = vmax.f32 %v1482, -30.0
        %v1486 = vmin.f32 %v1485, 30.0
        %v1487 = vsub.f32 0.0, %v1486
        %v1488 = vmul.f32 %v1487, 1.442695
        %v1489 = vpow.pop %v1488
        %v1490 = vadd.f32 %v1489, 1.0
        %v1491 = vrcp.pop %v1490
        %1492 = vst [vmem:[%s695] sm:$0xff] %v1491
        %1493 = vst [vmem:[%s702] sm:$0xff] %v1107
        %1494 = vst [vmem:[%s702 + $0x8] sm:$0xff] %v1109
        %s1495 = sand.u32 %s401, 1
        %s1496 = scalar_lea.sflag [#allocation4], %s1495
        %s1497 = sand.u32 %s401, 1
        %s1498 = smul.addr %s1497, 8
        %s1499 = scalar_lea.vmem [#allocation16], %s1498
        %s1500 = sand.u32 %s427, 1
        %s1501 = scalar_lea.sflag [#allocation18], %s1500
        %s1502 = sand.u32 %s427, 1
        %s1503 = smul.addr %s1502, 16
        %s1504 = scalar_lea.vmem [#allocation17], %s1503
        // Predicated region
        $region117: #{tpu_custom_call.1} parent=83 // pred_check
          %p1505 = pneg %p411
        $region118: #{tpu_custom_call.1} parent=83 // pred_check_branch
          %1507 = sbr.rel (%p1505) target = $region120
        $region119: #{tpu_custom_call.1} parent=83 // pred_region
          %s1509 = ssub.s32 128, 128
          %1510 = vsyncadd %s1496, %s1509
          %s1511 = smul.addr %s42, 128
          %s1512 = scalar_lea.hbm %s16, %s1511
          %s1514 = sshll.u32 %s1499, 4
          %s1515 = int_to_ptr.vmem [resolvable:$true] %s1514
          %1517 = dma.vmem_to_hbm [thread:$0]  %s1515, 128, %s1512, %s1496
        $region120: #{tpu_custom_call.1} parent=83 // pred_fallthru
          _
        // Predicated region
        $region121: #{tpu_custom_call.1} parent=83 // pred_check
          %p1518 = pneg %p437
        $region122: #{tpu_custom_call.1} parent=83 // pred_check_branch
          %1520 = sbr.rel (%p1518) target = $region124
        $region123: #{tpu_custom_call.1} parent=83 // pred_region
          %s1522 = ssub.s32 256, 256
          %1523 = vsyncadd %s1501, %s1522
          %s1524 = smul.addr %s42, 2
          %s1525 = smul.addr %s1524, 128
          %s1526 = scalar_lea.hbm %s17, %s1525
          %s1528 = sshll.u32 %s1504, 4
          %s1529 = int_to_ptr.vmem [resolvable:$true] %s1528
          %1531 = dma.vmem_to_hbm [thread:$0]  %s1529, 256, %s1526, %s1501
        $region124: #{tpu_custom_call.1} parent=83 // pred_fallthru
          _
      $region84: #{tpu_custom_call.1} parent=5 // pred_fallthru
        _
      %p1532 = scmp.le.s32.totalorder 2, %s37
      // Predicated region
      $region125: #{tpu_custom_call.1} parent=5 // pred_check
        %p1533 = pneg %p1532
      $region126: #{tpu_custom_call.1} parent=5 // pred_check_branch
        %1535 = sbr.rel (%p1533) target = $region128
      $region127: #{tpu_custom_call.1} parent=5 // pred_region
        %s1536 = ssub.s32 %s37, 2
        // Predicated region
        $region129: #{tpu_custom_call.1} parent=127 // pred_check
          %p1537 = pneg %p417
        $region130: #{tpu_custom_call.1} parent=127 // pred_check_branch
          %1539 = sbr.rel (%p1537) target = $region132
        $region131: #{tpu_custom_call.1} parent=127 // pred_region
          %s1540 = sand.u32 %s402, 1
          %s1541 = scalar_lea.sflag [#allocation4], %s1540
          %s1542 = sand.u32 %s402, 1
          %s1543 = smul.addr %s1542, 8
          %s1544 = scalar_lea.vmem [#allocation16], %s1543
          %1545 = dma.done %s1541, 128
        $region132: #{tpu_custom_call.1} parent=127 // pred_fallthru
          _
        // Predicated region
        $region133: #{tpu_custom_call.1} parent=127 // pred_check
          %p1546 = pneg %p443
        $region134: #{tpu_custom_call.1} parent=127 // pred_check_branch
          %1548 = sbr.rel (%p1546) target = $region136
        $region135: #{tpu_custom_call.1} parent=127 // pred_region
          %s1549 = sand.u32 %s428, 1
          %s1550 = scalar_lea.sflag [#allocation18], %s1549
          %s1551 = sand.u32 %s428, 1
          %s1552 = smul.addr %s1551, 16
          %s1553 = scalar_lea.vmem [#allocation17], %s1552
          %1554 = dma.done %s1550, 256
        $region136: #{tpu_custom_call.1} parent=127 // pred_fallthru
          _
      $region128: #{tpu_custom_call.1} parent=5 // pred_fallthru
        _
    $region6: #{tpu_custom_call.1} parent=1 // loop_footer
      %s41 = sadd.s32 1, %s37
    $region7: #{tpu_custom_call.1} parent=1 // loop_footer_branch
      %36 = sbr.rel target = $region3
    $region8: #{tpu_custom_call.1} parent=1 // loop_exit
      _
    %1555 = vsyncpa [#allocation3], 1
    %s1556 = scalar_lea.sflag [#allocation3], 1
    %1557 = vsyncpa %s1556, 1
    %1558 = vsyncpa [#allocation6], 1
    %1559 = vsyncpa [#allocation9], 1
    %1560 = vsyncpa [#allocation12], 1
    %1561 = vsyncpa [#allocation15], 1
    %1562 = vsyncpa [#allocation4], 1
    %s1563 = scalar_lea.sflag [#allocation4], 1
    %1564 = vsyncpa %s1563, 1
    %1565 = vsyncpa [#allocation18], 1
    %s1566 = scalar_lea.sflag [#allocation18], 1
    %1567 = vsyncpa %s1566, 1

</llo_original>
